<compile_context>
chip_gen: v7x
topology: tpu7x:2x2x1
jax: 0.10.0
libtpu: 0.0.40
codegen_flags: <defaults>
</compile_context>

<pallas_src>
import functools

import jax
import jax.numpy as jnp
from jax import lax
from jax.experimental import pallas as pl
from jax.experimental.pallas import tpu as pltpu


def _round_up(v, m):
    return (v + m - 1) // m * m


def _pick_row_tile(h, target=32):
    th = min(h, target)
    while h % th:
        th -= 1
    return th


def _vmem_budget_bytes(th, w, wp, c):
    f32, bf16 = 4, 2
    io = 2 * (th * w * c * f32)                 # x block, double-buffered
    io += 2 * (2 * w * c * f32)                 # halo rows
    io += 2 * (th * w * c * f32)                # out block
    io += 2 * (10 * c * c * bf16 + 2 * 8 * 128 * f32)   # w1 + w2 + biases
    scratch = (th + 2) * wp * c * bf16
    temps = 6 * th * w * c * f32                # h1 / acc / epilogue temps
    total = io + scratch + temps
    return int(min(64 * 2**20, max(2 * total, 32 * 2**20)))


# ----------------------------------------------------------------------------
# Fused kernel: one (batch, row-tile) block per grid step.
#   stage 1: 1x1 conv (BN1 scale pre-folded) + shift + ReLU  -> bf16 scratch
#   stage 2: 3x3 conv (BN2 scale pre-folded) as 9 accumulating K=C matmuls
#            + shift + residual + ReLU
# ----------------------------------------------------------------------------
def _up_block_kernel(x_ref, xh_ref, w1_ref, w2_ref, b1_ref, b2_ref,
                     o_ref, hp_ref):
    """
    x_ref  : (1, TH, W, C)  f32   input rows of this tile (also the residual)
    xh_ref : (1, 2, W, C)   f32   halo input rows (row above / row below tile)
    w1_ref : (C, C)         bf16  1x1 weight, BN1 scale folded, (cin, cout)
    w2_ref : (9*C, C)       bf16  3x3 weight, BN2 scale folded, row=(tap)*C+cin
    b1_ref : (1, C)         f32   folded BN1 shift
    b2_ref : (1, C)         f32   folded BN2 shift
    o_ref  : (1, TH, W, C)  f32   output rows of this tile
    hp_ref : (TH+2, Wp, C)  bf16  VMEM scratch: padded stage-1 rows (Wp>=W+2)
    """
    TH = x_ref.shape[1]
    W = x_ref.shape[2]
    C = x_ref.shape[3]

    i = pl.program_id(1)
    is_first = i == 0
    is_last = i == pl.num_programs(1) - 1

    x = x_ref[0]                                   # (TH, W, C) f32
    xm = x.reshape(TH * W, C)                      # residual, reused below
    xh = xh_ref[0]                                 # (2, W, C)  f32

    w1 = w1_ref[...]
    b1 = b1_ref[...]

    # ---- stage 1 (main rows): MXU 1x1 conv, shift, ReLU; cast to bf16 once.
    h1 = jnp.dot(xm.astype(jnp.bfloat16), w1, preferred_element_type=jnp.float32)
    h1 = jnp.maximum(h1 + b1, 0.0).astype(jnp.bfloat16)

    # ---- stage 1 recomputed on the 2 halo rows (rows of neighbouring tiles).
    hh = jnp.dot(xh.reshape(2 * W, C).astype(jnp.bfloat16), w1,
                 preferred_element_type=jnp.float32)
    hh = jnp.maximum(hh + b1, 0.0).reshape(2, W, C)
    # Outside-image halo must be the conv's zero padding (not relu(b1)).
    top_keep = jnp.where(is_first, 0.0, 1.0).astype(jnp.float32)
    bot_keep = jnp.where(is_last, 0.0, 1.0).astype(jnp.float32)
    h_top = (hh[0] * top_keep).astype(jnp.bfloat16)            # (W, C)
    h_bot = (hh[1] * bot_keep).astype(jnp.bfloat16)

    # ---- fill the padded bf16 scratch. Only the 1-px border is zeroed; every
    #      element the 3x3 taps read is (re)written each step, so no
    #      cross-step state and both grid axes stay "parallel".
    zc = jnp.zeros((TH + 2, 1, C), jnp.bfloat16)
    hp_ref[:, 0:1, :] = zc
    hp_ref[:, W + 1:W + 2, :] = zc
    hp_ref[0:1, 1:W + 1, :] = h_top.reshape(1, W, C)
    hp_ref[TH + 1:TH + 2, 1:W + 1, :] = h_bot.reshape(1, W, C)
    hp_ref[1:TH + 1, 1:W + 1, :] = h1.reshape(TH, W, C)

    # ---- stage 2: 3x3 conv as 9 accumulating K=C matmuls on ref slices
    #      (no (TH*W, 9C) im2col buffer is ever materialized).
    acc = jnp.zeros((TH * W, C), jnp.float32)
    for dy in range(3):
        for dx in range(3):
            t = dy * 3 + dx
            patch = hp_ref[dy:dy + TH, dx:dx + W, :].reshape(TH * W, C)
            acc = acc + jnp.dot(patch, w2_ref[t * C:(t + 1) * C, :],
                                preferred_element_type=jnp.float32)

    # ---- epilogue (VPU, f32): BN2 shift + residual + ReLU.
    out = jnp.maximum(acc + b2_ref[...] + xm, 0.0)
    o_ref[0] = out.reshape(TH, W, C).astype(o_ref.dtype)


# ----------------------------------------------------------------------------
# Wrapper
# ----------------------------------------------------------------------------
def up_basic_block_nhwc(x, params, row_tile=None):
    """x: (N, H, W, C) float32.  params: dict of matmul-form parameters."""
    N, H, W, Cin = x.shape
    w1 = params["w1"]                      # (Cin, Cout)
    w2 = params["w2"]                      # (9, Cout, Cout), tap = ky*3 + kx
    Cout = w1.shape[1]
    assert Cin == Cout, "residual add requires inplanes == planes"
    eps = 1e-5

    # Fold BN running stats (inference BN). Scales go INTO the weights (f32,
    # before the bf16 cast); only the shifts remain in the kernel epilogue.
    s1 = params["gamma1"] / jnp.sqrt(params["var1"] + eps)
    b1 = (params["beta1"] - params["mean1"] * s1).reshape(1, Cout)
    s2 = params["gamma2"] / jnp.sqrt(params["var2"] + eps)
    b2 = (params["beta2"] - params["mean2"] * s2).reshape(1, Cout)
    w1_bf = (w1 * s1[None, :]).astype(jnp.bfloat16)
    w2_bf = (w2 * s2[None, None, :]).reshape(9 * Cout, Cout).astype(jnp.bfloat16)

    TH = row_tile if row_tile is not None else _pick_row_tile(H)
    assert H % TH == 0  # TODO(synk): ragged last row-tile not handled.
    n_tiles = H // TH

    # Gather the 2 halo input rows per row-tile (stage-1 is recomputed on them
    # inside the kernel). Boundary rows are masked to zero in-kernel.
    tiles = jnp.arange(n_tiles)
    top_idx = jnp.maximum(tiles * TH - 1, 0)
    bot_idx = jnp.minimum(tiles * TH + TH, H - 1)
    x_halo = jnp.stack([x[:, top_idx], x[:, bot_idx]], axis=2)  # (N,T,2,W,C)
    x_halo = x_halo.reshape(N, 2 * n_tiles, W, Cin)

    Wp = _round_up(W + 2, 8)

    return pl.pallas_call(
        _up_block_kernel,
        out_shape=jax.ShapeDtypeStruct((N, H, W, Cout), jnp.float32),
        grid_spec=pltpu.PrefetchScalarGridSpec(
            num_scalar_prefetch=0,
            grid=(N, n_tiles),
            in_specs=[
                pl.BlockSpec((1, TH, W, Cin), lambda n, i: (n, i, 0, 0)),
                pl.BlockSpec((1, 2, W, Cin), lambda n, i: (n, i, 0, 0)),
                pl.BlockSpec((Cin, Cout), lambda n, i: (0, 0)),
                pl.BlockSpec((9 * Cout, Cout), lambda n, i: (0, 0)),
                pl.BlockSpec((1, Cout), lambda n, i: (0, 0)),
                pl.BlockSpec((1, Cout), lambda n, i: (0, 0)),
            ],
            out_specs=pl.BlockSpec((1, TH, W, Cout), lambda n, i: (n, i, 0, 0)),
            scratch_shapes=[pltpu.VMEM((TH + 2, Wp, Cout), jnp.bfloat16)],
        ),
        compiler_params=pltpu.CompilerParams(
            dimension_semantics=("parallel", "parallel"),
            vmem_limit_bytes=_vmem_budget_bytes(TH, W, Wp, Cout),
        ),
    )(x, x_halo, w1_bf, w2_bf, b1, b2)


# ----------------------------------------------------------------------------
# Pure-JAX reference (f32 math, correctness check)
# ----------------------------------------------------------------------------
def up_basic_block_ref(x, params):
    eps = 1e-5
    Cin, Cout = params["w1"].shape
    w1_hwio = params["w1"].reshape(1, 1, Cin, Cout)
    w2_hwio = params["w2"].reshape(3, 3, Cout, Cout)
    dn = ("NHWC", "HWIO", "NHWC")

    def bn(y, g, b, m, v):
        return (y - m) / jnp.sqrt(v + eps) * g + b

    h = lax.conv_general_dilated(x, w1_hwio, (1, 1), "VALID",
                                 dimension_numbers=dn)
    h = jnp.maximum(bn(h, params["gamma1"], params["beta1"],
                       params["mean1"], params["var1"]), 0.0)
    h = lax.conv_general_dilated(h, w2_hwio, (1, 1), "SAME",
                                 dimension_numbers=dn)
    h = bn(h, params["gamma2"], params["beta2"],
           params["mean2"], params["var2"])
    return jnp.maximum(h + x, 0.0)


# ----------------------------------------------------------------------------
# Deterministic parameter construction (shapes from the module's __init__)
# ----------------------------------------------------------------------------
def make_params(key, inplanes, planes):
    ks = jax.random.split(key, 8)
    # PyTorch conv1 weight (planes, inplanes, 1, 1) -> matmul form (in, out)
    w1_oihw = 0.1 * jax.random.normal(ks[0], (planes, inplanes, 1, 1), jnp.float32)
    w1 = jnp.transpose(w1_oihw[:, :, 0, 0], (1, 0))
    # PyTorch conv2 weight (planes, planes, 3, 3) -> (ky, kx, in, out) -> (9, in, out)
    w2_oihw = 0.1 * jax.random.normal(ks[1], (planes, planes, 3, 3), jnp.float32)
    w2 = jnp.transpose(w2_oihw, (2, 3, 1, 0)).reshape(9, planes, planes)
    return dict(
        w1=w1, w2=w2,
        gamma1=1.0 + 0.1 * jax.random.normal(ks[2], (planes,), jnp.float32),
        beta1=0.1 * jax.random.normal(ks[3], (planes,), jnp.float32),
        mean1=0.1 * jax.random.normal(ks[4], (planes,), jnp.float32),
        var1=jnp.abs(jax.random.normal(ks[5], (planes,), jnp.float32)) + 0.5,
        gamma2=1.0 + 0.1 * jax.random.normal(ks[6], (planes,), jnp.float32),
        beta2=0.1 * jax.random.normal(ks[7], (planes,), jnp.float32),
        mean2=0.05 * jnp.ones((planes,), jnp.float32),
        var2=0.8 * jnp.ones((planes,), jnp.float32),
    )


if __name__ == "__main__":
    N, C, H, W = 2, 32, 16, 16          # inplanes == planes (residual add)
    key = jax.random.PRNGKey(0)
    kx, kp = jax.random.split(key)

    x_nchw = jax.random.normal(kx, (N, C, H, W), jnp.float32)   # PyTorch layout
    x_nhwc = jnp.transpose(x_nchw, (0, 2, 3, 1))                # kernel layout
    params = make_params(kp, C, C)

    # row_tile=8 -> grid=(2, 2): exercises the halo logic (boundary + interior).
    fn = jax.jit(functools.partial(up_basic_block_nhwc, params=params, row_tile=8))
    out = fn(x_nhwc)
    jax.block_until_ready(out)

    ref = up_basic_block_ref(x_nhwc, params)
    assert out.shape == (N, H, W, C)
    # bf16 matmul operands with f32 accumulation -> loosened tolerance.
    max_err = float(jnp.max(jnp.abs(out - ref)))
    mean_err = float(jnp.mean(jnp.abs(out - ref)))
    assert max_err < 1e-1, f"max |err|={max_err} vs reference"
    assert mean_err < 1e-2, f"mean |err|={mean_err} vs reference"

    print("KERNEL_OK")
</pallas_src>

<mosaic_0001>
module attributes {stable_mosaic.version = 11 : i64} {
  func.func @_up_block_kernel(%arg0: i32, %arg1: i32, %arg2: memref<1x8x16x32xf32, #tpu.memory_space<vmem>>, %arg3: memref<1x2x16x32xf32, #tpu.memory_space<vmem>>, %arg4: memref<32x32xbf16, #tpu.memory_space<vmem>>, %arg5: memref<288x32xbf16, #tpu.memory_space<vmem>>, %arg6: memref<1x32xf32, #tpu.memory_space<vmem>>, %arg7: memref<1x32xf32, #tpu.memory_space<vmem>>, %arg8: memref<1x8x16x32xf32, #tpu.memory_space<vmem>>, %arg9: memref<10x24x32xbf16, #tpu.memory_space<vmem>>) attributes {dimension_semantics = [#tpu.dimension_semantics<parallel>, #tpu.dimension_semantics<parallel>], iteration_bounds = array<i64: 2, 2>, scalar_prefetch = 0 : i64, scratch_operands = 1 : i64, tpu.core_type = #tpu.core_type<tc>, window_params = [{transform_indices = @transform_0, window_bounds = array<i64: 1, 8, 16, 32>}, {transform_indices = @transform_1, window_bounds = array<i64: 1, 2, 16, 32>}, {pipeline_mode = #tpu.pipeline_mode<synchronous>, transform_indices = @transform_2, window_bounds = array<i64: 32, 32>}, {pipeline_mode = #tpu.pipeline_mode<synchronous>, transform_indices = @transform_3, window_bounds = array<i64: 288, 32>}, {pipeline_mode = #tpu.pipeline_mode<synchronous>, transform_indices = @transform_4, window_bounds = array<i64: 1, 32>}, {pipeline_mode = #tpu.pipeline_mode<synchronous>, transform_indices = @transform_5, window_bounds = array<i64: 1, 32>}, {transform_indices = @transform_6, window_bounds = array<i64: 1, 8, 16, 32>}]} {
    %c0_i32 = arith.constant 0 : i32
    %0 = arith.cmpi eq, %arg1, %c0_i32 : i32
    %c1_i32 = arith.constant 1 : i32
    %1 = arith.cmpi eq, %arg1, %c1_i32 : i32
    %c0 = arith.constant 0 : index
    %c0_0 = arith.constant 0 : index
    %c0_1 = arith.constant 0 : index
    %c0_2 = arith.constant 0 : index
    %2 = vector.load %arg2[%c0, %c0_0, %c0_1, %c0_2] : memref<1x8x16x32xf32, #tpu.memory_space<vmem>>, vector<1x8x16x32xf32>
    %3 = vector.shape_cast %2 : vector<1x8x16x32xf32> to vector<8x16x32xf32>
    %4 = vector.shape_cast %3 : vector<8x16x32xf32> to vector<128x32xf32>
    %c0_3 = arith.constant 0 : index
    %c0_4 = arith.constant 0 : index
    %c0_5 = arith.constant 0 : index
    %c0_6 = arith.constant 0 : index
    %5 = vector.load %arg3[%c0_3, %c0_4, %c0_5, %c0_6] : memref<1x2x16x32xf32, #tpu.memory_space<vmem>>, vector<1x2x16x32xf32>
    %6 = vector.shape_cast %5 : vector<1x2x16x32xf32> to vector<2x16x32xf32>
    %c0_7 = arith.constant 0 : index
    %c0_8 = arith.constant 0 : index
    %7 = vector.load %arg4[%c0_7, %c0_8] : memref<32x32xbf16, #tpu.memory_space<vmem>>, vector<32x32xbf16>
    %c0_9 = arith.constant 0 : index
    %c0_10 = arith.constant 0 : index
    %8 = vector.load %arg6[%c0_9, %c0_10] : memref<1x32xf32, #tpu.memory_space<vmem>>, vector<1x32xf32>
    %9 = arith.truncf %4 : vector<128x32xf32> to vector<128x32xbf16>
    %cst = arith.constant dense<0.000000e+00> : vector<128x32xf32>
    %10 = tpu.matmul %9, %7, %cst {dimension_numbers = #tpu.dot_dimension_numbers<[1], [0], [0], [1], [0, 0, 1, 1], [], []>} : vector<128x32xbf16>, vector<32x32xbf16>, vector<128x32xf32> -> vector<128x32xf32>
    %11 = vector.broadcast %8 : vector<1x32xf32> to vector<128x32xf32>
    %12 = arith.addf %10, %11 : vector<128x32xf32>
    %cst_11 = arith.constant 0.000000e+00 : f32
    %13 = vector.broadcast %cst_11 : f32 to vector<128x32xf32>
    %14 = arith.maximumf %12, %13 : vector<128x32xf32>
    %15 = arith.truncf %14 : vector<128x32xf32> to vector<128x32xbf16>
    %16 = vector.shape_cast %6 : vector<2x16x32xf32> to vector<32x32xf32>
    %17 = arith.truncf %16 : vector<32x32xf32> to vector<32x32xbf16>
    %cst_12 = arith.constant dense<0.000000e+00> : vector<32x32xf32>
    %18 = tpu.matmul %17, %7, %cst_12 {dimension_numbers = #tpu.dot_dimension_numbers<[1], [0], [0], [1], [0, 0, 1, 1], [], []>} : vector<32x32xbf16>, vector<32x32xbf16>, vector<32x32xf32> -> vector<32x32xf32>
    %19 = vector.broadcast %8 : vector<1x32xf32> to vector<32x32xf32>
    %20 = arith.addf %18, %19 : vector<32x32xf32>
    %cst_13 = arith.constant 0.000000e+00 : f32
    %21 = vector.broadcast %cst_13 : f32 to vector<32x32xf32>
    %22 = arith.maximumf %20, %21 : vector<32x32xf32>
    %23 = vector.shape_cast %22 : vector<32x32xf32> to vector<2x16x32xf32>
    %cst_14 = arith.constant 0.000000e+00 : f32
    %cst_15 = arith.constant 1.000000e+00 : f32
    %24 = arith.select %0, %cst_14, %cst_15 : f32
    %cst_16 = arith.constant 0.000000e+00 : f32
    %cst_17 = arith.constant 1.000000e+00 : f32
    %25 = arith.select %1, %cst_16, %cst_17 : f32
    %26 = vector.extract_strided_slice %23 {offsets = [0, 0, 0], sizes = [1, 16, 32], strides = [1, 1, 1]} : vector<2x16x32xf32> to vector<1x16x32xf32>
    %27 = vector.shape_cast %26 : vector<1x16x32xf32> to vector<16x32xf32>
    %28 = vector.broadcast %24 : f32 to vector<16x32xf32>
    %29 = arith.mulf %27, %28 : vector<16x32xf32>
    %30 = arith.truncf %29 : vector<16x32xf32> to vector<16x32xbf16>
    %31 = vector.extract_strided_slice %23 {offsets = [1, 0, 0], sizes = [1, 16, 32], strides = [1, 1, 1]} : vector<2x16x32xf32> to vector<1x16x32xf32>
    %32 = vector.shape_cast %31 : vector<1x16x32xf32> to vector<16x32xf32>
    %33 = vector.broadcast %25 : f32 to vector<16x32xf32>
    %34 = arith.mulf %32, %33 : vector<16x32xf32>
    %35 = arith.truncf %34 : vector<16x32xf32> to vector<16x32xbf16>
    %cst_18 = arith.constant 0.000000e+00 : bf16
    %36 = vector.broadcast %cst_18 : bf16 to vector<10x1x32xbf16>
    %c0_19 = arith.constant 0 : index
    %c0_20 = arith.constant 0 : index
    %c0_21 = arith.constant 0 : index
    %37 = vector.load %arg9[%c0_19, %c0_20, %c0_21] : memref<10x24x32xbf16, #tpu.memory_space<vmem>>, vector<10x1x32xbf16>
    tpu.vector_store %arg9[%c0_19, %c0_20, %c0_21], %36 {strides = array<i32>} : memref<10x24x32xbf16, #tpu.memory_space<vmem>>, vector<10x1x32xbf16>,
    %c0_22 = arith.constant 0 : index
    %c17 = arith.constant 17 : index
    %c0_23 = arith.constant 0 : index
    %38 = vector.load %arg9[%c0_22, %c17, %c0_23] : memref<10x24x32xbf16, #tpu.memory_space<vmem>>, vector<10x1x32xbf16>
    tpu.vector_store %arg9[%c0_22, %c17, %c0_23], %36 {strides = array<i32>} : memref<10x24x32xbf16, #tpu.memory_space<vmem>>, vector<10x1x32xbf16>,
    %39 = vector.shape_cast %30 : vector<16x32xbf16> to vector<1x16x32xbf16>
    %c0_24 = arith.constant 0 : index
    %c1 = arith.constant 1 : index
    %c0_25 = arith.constant 0 : index
    %40 = vector.load %arg9[%c0_24, %c1, %c0_25] : memref<10x24x32xbf16, #tpu.memory_space<vmem>>, vector<1x16x32xbf16>
    tpu.vector_store %arg9[%c0_24, %c1, %c0_25], %39 {strides = array<i32>} : memref<10x24x32xbf16, #tpu.memory_space<vmem>>, vector<1x16x32xbf16>,
    %41 = vector.shape_cast %35 : vector<16x32xbf16> to vector<1x16x32xbf16>
    %c9 = arith.constant 9 : index
    %c1_26 = arith.constant 1 : index
    %c0_27 = arith.constant 0 : index
    %42 = vector.load %arg9[%c9, %c1_26, %c0_27] : memref<10x24x32xbf16, #tpu.memory_space<vmem>>, vector<1x16x32xbf16>
    tpu.vector_store %arg9[%c9, %c1_26, %c0_27], %41 {strides = array<i32>} : memref<10x24x32xbf16, #tpu.memory_space<vmem>>, vector<1x16x32xbf16>,
    %43 = vector.shape_cast %15 : vector<128x32xbf16> to vector<8x16x32xbf16>
    %c1_28 = arith.constant 1 : index
    %c1_29 = arith.constant 1 : index
    %c0_30 = arith.constant 0 : index
    %44 = vector.load %arg9[%c1_28, %c1_29, %c0_30] : memref<10x24x32xbf16, #tpu.memory_space<vmem>>, vector<8x16x32xbf16>
    tpu.vector_store %arg9[%c1_28, %c1_29, %c0_30], %43 {strides = array<i32>} : memref<10x24x32xbf16, #tpu.memory_space<vmem>>, vector<8x16x32xbf16>,
    %cst_31 = arith.constant 0.000000e+00 : f32
    %45 = vector.broadcast %cst_31 : f32 to vector<128x32xf32>
    %c0_32 = arith.constant 0 : index
    %c0_33 = arith.constant 0 : index
    %c0_34 = arith.constant 0 : index
    %46 = vector.load %arg9[%c0_32, %c0_33, %c0_34] : memref<10x24x32xbf16, #tpu.memory_space<vmem>>, vector<8x16x32xbf16>
    %47 = vector.shape_cast %46 : vector<8x16x32xbf16> to vector<128x32xbf16>
    %c0_35 = arith.constant 0 : index
    %c0_36 = arith.constant 0 : index
    %48 = vector.load %arg5[%c0_35, %c0_36] : memref<288x32xbf16, #tpu.memory_space<vmem>>, vector<32x32xbf16>
    %cst_37 = arith.constant dense<0.000000e+00> : vector<128x32xf32>
    %49 = tpu.matmul %47, %48, %cst_37 {dimension_numbers = #tpu.dot_dimension_numbers<[1], [0], [0], [1], [0, 0, 1, 1], [], []>} : vector<128x32xbf16>, vector<32x32xbf16>, vector<128x32xf32> -> vector<128x32xf32>
    %50 = arith.addf %45, %49 : vector<128x32xf32>
    %c0_38 = arith.constant 0 : index
    %c1_39 = arith.constant 1 : index
    %c0_40 = arith.constant 0 : index
    %51 = vector.load %arg9[%c0_38, %c1_39, %c0_40] : memref<10x24x32xbf16, #tpu.memory_space<vmem>>, vector<8x16x32xbf16>
    %52 = vector.shape_cast %51 : vector<8x16x32xbf16> to vector<128x32xbf16>
    %c32 = arith.constant 32 : index
    %c0_41 = arith.constant 0 : index
    %53 = vector.load %arg5[%c32, %c0_41] : memref<288x32xbf16, #tpu.memory_space<vmem>>, vector<32x32xbf16>
    %cst_42 = arith.constant dense<0.000000e+00> : vector<128x32xf32>
    %54 = tpu.matmul %52, %53, %cst_42 {dimension_numbers = #tpu.dot_dimension_numbers<[1], [0], [0], [1], [0, 0, 1, 1], [], []>} : vector<128x32xbf16>, vector<32x32xbf16>, vector<128x32xf32> -> vector<128x32xf32>
    %55 = arith.addf %50, %54 : vector<128x32xf32>
    %c0_43 = arith.constant 0 : index
    %c2 = arith.constant 2 : index
    %c0_44 = arith.constant 0 : index
    %56 = vector.load %arg9[%c0_43, %c2, %c0_44] : memref<10x24x32xbf16, #tpu.memory_space<vmem>>, vector<8x16x32xbf16>
    %57 = vector.shape_cast %56 : vector<8x16x32xbf16> to vector<128x32xbf16>
    %c64 = arith.constant 64 : index
    %c0_45 = arith.constant 0 : index
    %58 = vector.load %arg5[%c64, %c0_45] : memref<288x32xbf16, #tpu.memory_space<vmem>>, vector<32x32xbf16>
    %cst_46 = arith.constant dense<0.000000e+00> : vector<128x32xf32>
    %59 = tpu.matmul %57, %58, %cst_46 {dimension_numbers = #tpu.dot_dimension_numbers<[1], [0], [0], [1], [0, 0, 1, 1], [], []>} : vector<128x32xbf16>, vector<32x32xbf16>, vector<128x32xf32> -> vector<128x32xf32>
    %60 = arith.addf %55, %59 : vector<128x32xf32>
    %c1_47 = arith.constant 1 : index
    %c0_48 = arith.constant 0 : index
    %c0_49 = arith.constant 0 : index
    %61 = vector.load %arg9[%c1_47, %c0_48, %c0_49] : memref<10x24x32xbf16, #tpu.memory_space<vmem>>, vector<8x16x32xbf16>
    %62 = vector.shape_cast %61 : vector<8x16x32xbf16> to vector<128x32xbf16>
    %c96 = arith.constant 96 : index
    %c0_50 = arith.constant 0 : index
    %63 = vector.load %arg5[%c96, %c0_50] : memref<288x32xbf16, #tpu.memory_space<vmem>>, vector<32x32xbf16>
    %cst_51 = arith.constant dense<0.000000e+00> : vector<128x32xf32>
    %64 = tpu.matmul %62, %63, %cst_51 {dimension_numbers = #tpu.dot_dimension_numbers<[1], [0], [0], [1], [0, 0, 1, 1], [], []>} : vector<128x32xbf16>, vector<32x32xbf16>, vector<128x32xf32> -> vector<128x32xf32>
    %65 = arith.addf %60, %64 : vector<128x32xf32>
    %c1_52 = arith.constant 1 : index
    %c1_53 = arith.constant 1 : index
    %c0_54 = arith.constant 0 : index
    %66 = vector.load %arg9[%c1_52, %c1_53, %c0_54] : memref<10x24x32xbf16, #tpu.memory_space<vmem>>, vector<8x16x32xbf16>
    %67 = vector.shape_cast %66 : vector<8x16x32xbf16> to vector<128x32xbf16>
    %c128 = arith.constant 128 : index
    %c0_55 = arith.constant 0 : index
    %68 = vector.load %arg5[%c128, %c0_55] : memref<288x32xbf16, #tpu.memory_space<vmem>>, vector<32x32xbf16>
    %cst_56 = arith.constant dense<0.000000e+00> : vector<128x32xf32>
    %69 = tpu.matmul %67, %68, %cst_56 {dimension_numbers = #tpu.dot_dimension_numbers<[1], [0], [0], [1], [0, 0, 1, 1], [], []>} : vector<128x32xbf16>, vector<32x32xbf16>, vector<128x32xf32> -> vector<128x32xf32>
    %70 = arith.addf %65, %69 : vector<128x32xf32>
    %c1_57 = arith.constant 1 : index
    %c2_58 = arith.constant 2 : index
    %c0_59 = arith.constant 0 : index
    %71 = vector.load %arg9[%c1_57, %c2_58, %c0_59] : memref<10x24x32xbf16, #tpu.memory_space<vmem>>, vector<8x16x32xbf16>
    %72 = vector.shape_cast %71 : vector<8x16x32xbf16> to vector<128x32xbf16>
    %c160 = arith.constant 160 : index
    %c0_60 = arith.constant 0 : index
    %73 = vector.load %arg5[%c160, %c0_60] : memref<288x32xbf16, #tpu.memory_space<vmem>>, vector<32x32xbf16>
    %cst_61 = arith.constant dense<0.000000e+00> : vector<128x32xf32>
    %74 = tpu.matmul %72, %73, %cst_61 {dimension_numbers = #tpu.dot_dimension_numbers<[1], [0], [0], [1], [0, 0, 1, 1], [], []>} : vector<128x32xbf16>, vector<32x32xbf16>, vector<128x32xf32> -> vector<128x32xf32>
    %75 = arith.addf %70, %74 : vector<128x32xf32>
    %c2_62 = arith.constant 2 : index
    %c0_63 = arith.constant 0 : index
    %c0_64 = arith.constant 0 : index
    %76 = vector.load %arg9[%c2_62, %c0_63, %c0_64] : memref<10x24x32xbf16, #tpu.memory_space<vmem>>, vector<8x16x32xbf16>
    %77 = vector.shape_cast %76 : vector<8x16x32xbf16> to vector<128x32xbf16>
    %c192 = arith.constant 192 : index
    %c0_65 = arith.constant 0 : index
    %78 = vector.load %arg5[%c192, %c0_65] : memref<288x32xbf16, #tpu.memory_space<vmem>>, vector<32x32xbf16>
    %cst_66 = arith.constant dense<0.000000e+00> : vector<128x32xf32>
    %79 = tpu.matmul %77, %78, %cst_66 {dimension_numbers = #tpu.dot_dimension_numbers<[1], [0], [0], [1], [0, 0, 1, 1], [], []>} : vector<128x32xbf16>, vector<32x32xbf16>, vector<128x32xf32> -> vector<128x32xf32>
    %80 = arith.addf %75, %79 : vector<128x32xf32>
    %c2_67 = arith.constant 2 : index
    %c1_68 = arith.constant 1 : index
    %c0_69 = arith.constant 0 : index
    %81 = vector.load %arg9[%c2_67, %c1_68, %c0_69] : memref<10x24x32xbf16, #tpu.memory_space<vmem>>, vector<8x16x32xbf16>
    %82 = vector.shape_cast %81 : vector<8x16x32xbf16> to vector<128x32xbf16>
    %c224 = arith.constant 224 : index
    %c0_70 = arith.constant 0 : index
    %83 = vector.load %arg5[%c224, %c0_70] : memref<288x32xbf16, #tpu.memory_space<vmem>>, vector<32x32xbf16>
    %cst_71 = arith.constant dense<0.000000e+00> : vector<128x32xf32>
    %84 = tpu.matmul %82, %83, %cst_71 {dimension_numbers = #tpu.dot_dimension_numbers<[1], [0], [0], [1], [0, 0, 1, 1], [], []>} : vector<128x32xbf16>, vector<32x32xbf16>, vector<128x32xf32> -> vector<128x32xf32>
    %85 = arith.addf %80, %84 : vector<128x32xf32>
    %c2_72 = arith.constant 2 : index
    %c2_73 = arith.constant 2 : index
    %c0_74 = arith.constant 0 : index
    %86 = vector.load %arg9[%c2_72, %c2_73, %c0_74] : memref<10x24x32xbf16, #tpu.memory_space<vmem>>, vector<8x16x32xbf16>
    %87 = vector.shape_cast %86 : vector<8x16x32xbf16> to vector<128x32xbf16>
    %c256 = arith.constant 256 : index
    %c0_75 = arith.constant 0 : index
    %88 = vector.load %arg5[%c256, %c0_75] : memref<288x32xbf16, #tpu.memory_space<vmem>>, vector<32x32xbf16>
    %cst_76 = arith.constant dense<0.000000e+00> : vector<128x32xf32>
    %89 = tpu.matmul %87, %88, %cst_76 {dimension_numbers = #tpu.dot_dimension_numbers<[1], [0], [0], [1], [0, 0, 1, 1], [], []>} : vector<128x32xbf16>, vector<32x32xbf16>, vector<128x32xf32> -> vector<128x32xf32>
    %90 = arith.addf %85, %89 : vector<128x32xf32>
    %c0_77 = arith.constant 0 : index
    %c0_78 = arith.constant 0 : index
    %91 = vector.load %arg7[%c0_77, %c0_78] : memref<1x32xf32, #tpu.memory_space<vmem>>, vector<1x32xf32>
    %92 = vector.broadcast %91 : vector<1x32xf32> to vector<128x32xf32>
    %93 = arith.addf %90, %92 : vector<128x32xf32>
    %94 = arith.addf %93, %4 : vector<128x32xf32>
    %cst_79 = arith.constant 0.000000e+00 : f32
    %95 = vector.broadcast %cst_79 : f32 to vector<128x32xf32>
    %96 = arith.maximumf %94, %95 : vector<128x32xf32>
    %97 = vector.shape_cast %96 : vector<128x32xf32> to vector<8x16x32xf32>
    %c0_80 = arith.constant 0 : index
    %c0_81 = arith.constant 0 : index
    %c0_82 = arith.constant 0 : index
    %c0_83 = arith.constant 0 : index
    %98 = vector.load %arg8[%c0_80, %c0_81, %c0_82, %c0_83] : memref<1x8x16x32xf32, #tpu.memory_space<vmem>>, vector<1x8x16x32xf32>
    %99 = vector.shape_cast %98 : vector<1x8x16x32xf32> to vector<8x16x32xf32>
    %100 = vector.shape_cast %97 : vector<8x16x32xf32> to vector<1x8x16x32xf32>
    tpu.vector_store %arg8[%c0_80, %c0_81, %c0_82, %c0_83], %100 {strides = array<i32>} : memref<1x8x16x32xf32, #tpu.memory_space<vmem>>, vector<1x8x16x32xf32>,
    return
  }
  func.func @transform_0(%arg0: i32, %arg1: i32) -> (i32, i32, i32, i32) {
    %c0_i32 = arith.constant 0 : i32
    %c0_i32_0 = arith.constant 0 : i32
    %c0_i32_1 = arith.constant 0 : i32
    return %arg0, %arg1, %c0_i32, %c0_i32_0 : i32, i32, i32, i32
  }
  func.func @transform_1(%arg0: i32, %arg1: i32) -> (i32, i32, i32, i32) {
    %c0_i32 = arith.constant 0 : i32
    %c0_i32_0 = arith.constant 0 : i32
    %c0_i32_1 = arith.constant 0 : i32
    return %arg0, %arg1, %c0_i32, %c0_i32_0 : i32, i32, i32, i32
  }
  func.func @transform_2(%arg0: i32, %arg1: i32) -> (i32, i32) {
    %c0_i32 = arith.constant 0 : i32
    %c0_i32_0 = arith.constant 0 : i32
    %c0_i32_1 = arith.constant 0 : i32
    return %c0_i32, %c0_i32_0 : i32, i32
  }
  func.func @transform_3(%arg0: i32, %arg1: i32) -> (i32, i32) {
    %c0_i32 = arith.constant 0 : i32
    %c0_i32_0 = arith.constant 0 : i32
    %c0_i32_1 = arith.constant 0 : i32
    return %c0_i32, %c0_i32_0 : i32, i32
  }
  func.func @transform_4(%arg0: i32, %arg1: i32) -> (i32, i32) {
    %c0_i32 = arith.constant 0 : i32
    %c0_i32_0 = arith.constant 0 : i32
    %c0_i32_1 = arith.constant 0 : i32
    return %c0_i32, %c0_i32_0 : i32, i32
  }
  func.func @transform_5(%arg0: i32, %arg1: i32) -> (i32, i32) {
    %c0_i32 = arith.constant 0 : i32
    %c0_i32_0 = arith.constant 0 : i32
    %c0_i32_1 = arith.constant 0 : i32
    return %c0_i32, %c0_i32_0 : i32, i32
  }
  func.func @transform_6(%arg0: i32, %arg1: i32) -> (i32, i32, i32, i32) {
    %c0_i32 = arith.constant 0 : i32
    %c0_i32_0 = arith.constant 0 : i32
    %c0_i32_1 = arith.constant 0 : i32
    return %arg0, %arg1, %c0_i32, %c0_i32_0 : i32, i32, i32, i32
  }
}

</mosaic_0001>

<llo_original>
// kernel: up_basic_block_nhwc.1
$region0: #{up_basic_block_nhwc.1}
  #allocation0 [shape = 'u32[]', space=smem, size = 0x4, offset = 0x4, fixed_abs, tag = 'smem constant byte address 0x4 - core index']
  #allocation1 [shape = 'u32[144,128]{1,0:T(1,128)}', space=vmem, size = 0x12000, scoped, tag = 'internal scratch']
  #allocation2 [shape = 'bf16[10,24,32]{2,1,0:T(8,128)(2,1)}', space=vmem, size = 0xf000, scoped, tag = 'scratch operand']
  %s0 = inlined_call_operand.vmem [shape: f32[2,16,16,32], index: 0, kind: input, shape index: {}]
  %s1 = inlined_call_operand.vmem [shape: f32[2,4,16,32], index: 1, kind: input, shape index: {}]
  %s2 = inlined_call_operand.vmem [shape: bf16[32,32], index: 2, kind: input, shape index: {}]
  %s3 = inlined_call_operand.vmem [shape: bf16[288,32], index: 3, kind: input, shape index: {}]
  %s4 = inlined_call_operand.vmem [shape: f32[1,32], index: 4, kind: input, shape index: {}]
  %s5 = inlined_call_operand.vmem [shape: f32[1,32], index: 5, kind: input, shape index: {}]
  %s6 = inlined_call_operand.hbm [shape: f32[2,16,16,32], index: 6, kind: output, shape index: {}]
  %s7 = sld [smem:[#allocation0]]
  $region57: #{up_basic_block_nhwc.1} parent=0
    _
  %s9 = ssub.s32 1, %s7
  %s10 = scalar_select 0, %s9, %s7
  $region1: #{up_basic_block_nhwc.1} parent=0
    #allocation3 [shape = 'u8[131072]{0}', space=vmem, size = 0x20000, scoped, tag = 'output window, operand 0']
    #allocation4 [shape = 's32[2]{0}', space=sflag, size = 0x8, scoped, tag = 'scoped memory for up_basic_block_nhwc.1']
    %11 = vsyncpa [#allocation4], 0
    %s12 = scalar_lea.sflag [#allocation4], 1
    %13 = vsyncpa %s12, 0
    loop: start=0, step=1, limit=6
    $region2: #{up_basic_block_nhwc.1} parent=1 // loop_pre_header
      _
    $region3: #{up_basic_block_nhwc.1} parent=1 // loop_header
      %s15 = sphi 0, %s19
      %p16 = scmp.ge.s32.totalorder %s15, 6
      %s22 = sphi 0, %s34
      %s23 = sphi 0, %s30
      %s24 = sphi 0, %s22
      %s25 = sphi 0, %s23
      %s26 = sphi 0, %s24
      %s27 = sphi 0, %s25
      %s39 = sphi 0, %s41
      %s42 = sphi 0, %s39
      %s43 = sphi 0, %s42
      %s59 = sphi 0, %s43
      %s67 = sphi 0, %s69
      %s70 = sphi 0, %s67
      %s71 = sphi 0, %s70
      %s87 = sphi 0, %s71
      %s91 = sphi 0, %s91
      %s93 = sphi 0, %s91
      %s94 = sphi 0, %s93
      %s108 = sphi 0, %s94
      %s112 = sphi 0, %s112
      %s114 = sphi 0, %s112
      %s115 = sphi 0, %s114
      %s129 = sphi 0, %s115
      %s133 = sphi 0, %s133
      %s135 = sphi 0, %s133
      %s136 = sphi 0, %s135
      %s150 = sphi 0, %s136
      %s154 = sphi 0, %s154
      %s156 = sphi 0, %s154
      %s157 = sphi 0, %s156
      %s171 = sphi 0, %s157
      %s179 = sphi 0, %s181
      %s182 = sphi 0, %s179
      %s183 = sphi 0, %s182
      %s199 = sphi 0, %s183
    $region4: #{up_basic_block_nhwc.1} parent=1 // loop_header_branch
      %18 = sbr.rel (%p16) target = $region8
    $region5: #{up_basic_block_nhwc.1} parent=1 // loop_body
      %s20 = ssub.s32 %s15, 1
      %s21 = ssub.s32 %s15, 2
      %s28 = sadd.s32 1, %s23
      %p29 = scmp.ge.s32.totalorder %s28, 2
      %s30 = scalar_select %p29, 0, %s28
      %s31 = sadd.s32 1, %s22
      %s32 = scalar_select %p29, %s31, %s22
      %p33 = scmp.ge.s32.totalorder %s32, 2
      %s34 = scalar_select %p33, 0, %s32
      %s35 = ssub.s32 %s22, %s34
      %s36 = ssub.s32 %s23, %s30
      %s37 = sor.u32 %s35, %s36
      %p38 = scmp.eq.s32.totalorder %s37, 0
      %s40 = sadd.s32 %s39, 1
      %s41 = scalar_select %p38, %s39, %s40
      %p44 = pneg %p38
      %p45 = scmp.eq.s32.totalorder %s15, 3
      %p46 = por %p44, %p45
      %p47 = scmp.ne.s32.totalorder %s39, %s42
      %p48 = scmp.eq.s32.totalorder %s15, 0
      %p49 = por %p47, %p48
      %p50 = scmp.ne.s32.totalorder %s39, %s42
      %p51 = scmp.eq.s32.totalorder %s20, 3
      %p52 = por %p50, %p51
      %p53 = scmp.ne.s32.totalorder %s42, %s43
      %p54 = scmp.eq.s32.totalorder %s20, 0
      %p55 = por %p53, %p54
      %p56 = scmp.ne.s32.totalorder %s42, %s43
      %p57 = scmp.eq.s32.totalorder %s21, 3
      %p58 = por %p56, %p57
      %p60 = scmp.ne.s32.totalorder %s43, %s59
      %p61 = scmp.eq.s32.totalorder %s21, 0
      %p62 = por %p60, %p61
      %s63 = ssub.s32 %s22, %s34
      %s64 = ssub.s32 %s23, %s30
      %s65 = sor.u32 %s63, %s64
      %p66 = scmp.eq.s32.totalorder %s65, 0
      %s68 = sadd.s32 %s67, 1
      %s69 = scalar_select %p66, %s67, %s68
      %p72 = pneg %p66
      %p73 = scmp.eq.s32.totalorder %s15, 3
      %p74 = por %p72, %p73
      %p75 = scmp.ne.s32.totalorder %s67, %s70
      %p76 = scmp.eq.s32.totalorder %s15, 0
      %p77 = por %p75, %p76
      %p78 = scmp.ne.s32.totalorder %s67, %s70
      %p79 = scmp.eq.s32.totalorder %s20, 3
      %p80 = por %p78, %p79
      %p81 = scmp.ne.s32.totalorder %s70, %s71
      %p82 = scmp.eq.s32.totalorder %s20, 0
      %p83 = por %p81, %p82
      %p84 = scmp.ne.s32.totalorder %s70, %s71
      %p85 = scmp.eq.s32.totalorder %s21, 3
      %p86 = por %p84, %p85
      %p88 = scmp.ne.s32.totalorder %s71, %s87
      %p89 = scmp.eq.s32.totalorder %s21, 0
      %p90 = por %p88, %p89
      %s92 = sadd.s32 %s91, 1
      %p95 = scmp.eq.s32.totalorder %s15, 3
      %p96 = scmp.ne.s32.totalorder %s91, %s93
      %p97 = scmp.eq.s32.totalorder %s15, 0
      %p98 = por %p96, %p97
      %p99 = scmp.ne.s32.totalorder %s91, %s93
      %p100 = scmp.eq.s32.totalorder %s20, 3
      %p101 = por %p99, %p100
      %p102 = scmp.ne.s32.totalorder %s93, %s94
      %p103 = scmp.eq.s32.totalorder %s20, 0
      %p104 = por %p102, %p103
      %p105 = scmp.ne.s32.totalorder %s93, %s94
      %p106 = scmp.eq.s32.totalorder %s21, 3
      %p107 = por %p105, %p106
      %p109 = scmp.ne.s32.totalorder %s94, %s108
      %p110 = scmp.eq.s32.totalorder %s21, 0
      %p111 = por %p109, %p110
      %s113 = sadd.s32 %s112, 1
      %p116 = scmp.eq.s32.totalorder %s15, 3
      %p117 = scmp.ne.s32.totalorder %s112, %s114
      %p118 = scmp.eq.s32.totalorder %s15, 0
      %p119 = por %p117, %p118
      %p120 = scmp.ne.s32.totalorder %s112, %s114
      %p121 = scmp.eq.s32.totalorder %s20, 3
      %p122 = por %p120, %p121
      %p123 = scmp.ne.s32.totalorder %s114, %s115
      %p124 = scmp.eq.s32.totalorder %s20, 0
      %p125 = por %p123, %p124
      %p126 = scmp.ne.s32.totalorder %s114, %s115
      %p127 = scmp.eq.s32.totalorder %s21, 3
      %p128 = por %p126, %p127
      %p130 = scmp.ne.s32.totalorder %s115, %s129
      %p131 = scmp.eq.s32.totalorder %s21, 0
      %p132 = por %p130, %p131
      %s134 = sadd.s32 %s133, 1
      %p137 = scmp.eq.s32.totalorder %s15, 3
      %p138 = scmp.ne.s32.totalorder %s133, %s135
      %p139 = scmp.eq.s32.totalorder %s15, 0
      %p140 = por %p138, %p139
      %p141 = scmp.ne.s32.totalorder %s133, %s135
      %p142 = scmp.eq.s32.totalorder %s20, 3
      %p143 = por %p141, %p142
      %p144 = scmp.ne.s32.totalorder %s135, %s136
      %p145 = scmp.eq.s32.totalorder %s20, 0
      %p146 = por %p144, %p145
      %p147 = scmp.ne.s32.totalorder %s135, %s136
      %p148 = scmp.eq.s32.totalorder %s21, 3
      %p149 = por %p147, %p148
      %p151 = scmp.ne.s32.totalorder %s136, %s150
      %p152 = scmp.eq.s32.totalorder %s21, 0
      %p153 = por %p151, %p152
      %s155 = sadd.s32 %s154, 1
      %p158 = scmp.eq.s32.totalorder %s15, 3
      %p159 = scmp.ne.s32.totalorder %s154, %s156
      %p160 = scmp.eq.s32.totalorder %s15, 0
      %p161 = por %p159, %p160
      %p162 = scmp.ne.s32.totalorder %s154, %s156
      %p163 = scmp.eq.s32.totalorder %s20, 3
      %p164 = por %p162, %p163
      %p165 = scmp.ne.s32.totalorder %s156, %s157
      %p166 = scmp.eq.s32.totalorder %s20, 0
      %p167 = por %p165, %p166
      %p168 = scmp.ne.s32.totalorder %s156, %s157
      %p169 = scmp.eq.s32.totalorder %s21, 3
      %p170 = por %p168, %p169
      %p172 = scmp.ne.s32.totalorder %s157, %s171
      %p173 = scmp.eq.s32.totalorder %s21, 0
      %p174 = por %p172, %p173
      %s175 = ssub.s32 %s22, %s34
      %s176 = ssub.s32 %s23, %s30
      %s177 = sor.u32 %s175, %s176
      %p178 = scmp.eq.s32.totalorder %s177, 0
      %s180 = sadd.s32 %s179, 1
      %s181 = scalar_select %p178, %s179, %s180
      %p184 = pneg %p178
      %p185 = scmp.eq.s32.totalorder %s15, 3
      %p186 = por %p184, %p185
      %p187 = scmp.ne.s32.totalorder %s179, %s182
      %p188 = scmp.eq.s32.totalorder %s15, 0
      %p189 = por %p187, %p188
      %p190 = scmp.ne.s32.totalorder %s179, %s182
      %p191 = scmp.eq.s32.totalorder %s20, 3
      %p192 = por %p190, %p191
      %p193 = scmp.ne.s32.totalorder %s182, %s183
      %p194 = scmp.eq.s32.totalorder %s20, 0
      %p195 = por %p193, %p194
      %p196 = scmp.ne.s32.totalorder %s182, %s183
      %p197 = scmp.eq.s32.totalorder %s21, 3
      %p198 = por %p196, %p197
      %p200 = scmp.ne.s32.totalorder %s183, %s199
      %p201 = scmp.eq.s32.totalorder %s21, 0
      %p202 = por %p200, %p201
      %p203 = scmp.le.s32.totalorder 1, %s15
      %p204 = scmp.lt.s32.totalorder %s15, 5
      %p205 = pnand %p203, %p204
      %p206 = pneg %p205
      // Predicated region
      $region9: #{up_basic_block_nhwc.1} parent=5 // pred_check
        _
      $region10: #{up_basic_block_nhwc.1} parent=5 // pred_check_branch
        %208 = sbr.rel (%p205) target = $region12
      $region11: #{up_basic_block_nhwc.1} parent=5 // pred_region
        %s209 = ssub.s32 %s15, 1
        // Predicated region
        $region13: #{up_basic_block_nhwc.1} parent=11 // pred_check
          %p210 = pneg %p104
        $region14: #{up_basic_block_nhwc.1} parent=11 // pred_check_branch
          %212 = sbr.rel (%p210) target = $region16
        $region15: #{up_basic_block_nhwc.1} parent=11 // pred_region
          _
        $region16: #{up_basic_block_nhwc.1} parent=11 // pred_fallthru
          _
        // Predicated region
        $region17: #{up_basic_block_nhwc.1} parent=11 // pred_check
          %p213 = pneg %p125
        $region18: #{up_basic_block_nhwc.1} parent=11 // pred_check_branch
          %215 = sbr.rel (%p213) target = $region20
        $region19: #{up_basic_block_nhwc.1} parent=11 // pred_region
          _
        $region20: #{up_basic_block_nhwc.1} parent=11 // pred_fallthru
          _
        // Predicated region
        $region21: #{up_basic_block_nhwc.1} parent=11 // pred_check
          %p216 = pneg %p146
        $region22: #{up_basic_block_nhwc.1} parent=11 // pred_check_branch
          %218 = sbr.rel (%p216) target = $region24
        $region23: #{up_basic_block_nhwc.1} parent=11 // pred_region
          _
        $region24: #{up_basic_block_nhwc.1} parent=11 // pred_fallthru
          _
        // Predicated region
        $region25: #{up_basic_block_nhwc.1} parent=11 // pred_check
          %p219 = pneg %p167
        $region26: #{up_basic_block_nhwc.1} parent=11 // pred_check_branch
          %221 = sbr.rel (%p219) target = $region28
        $region27: #{up_basic_block_nhwc.1} parent=11 // pred_region
          _
        $region28: #{up_basic_block_nhwc.1} parent=11 // pred_fallthru
          _
      $region12: #{up_basic_block_nhwc.1} parent=5 // pred_fallthru
        _
      %p222 = scmp.lt.s32.totalorder %s15, 4
      // Predicated region
      $region29: #{up_basic_block_nhwc.1} parent=5 // pred_check
        %p223 = pneg %p222
      $region30: #{up_basic_block_nhwc.1} parent=5 // pred_check_branch
        %225 = sbr.rel (%p223) target = $region32
      $region31: #{up_basic_block_nhwc.1} parent=5 // pred_region
        // Predicated region
        $region33: #{up_basic_block_nhwc.1} parent=31 // pred_check
          %p226 = pneg %p49
        $region34: #{up_basic_block_nhwc.1} parent=31 // pred_check_branch
          %228 = sbr.rel (%p226) target = $region36
        $region35: #{up_basic_block_nhwc.1} parent=31 // pred_region
          %s229 = smul.u32 8, %s23
          %p230 = scmp.lt.s32.totalorder %s22, 1
          %s231 = scalar_select %p230, %s22, 1
          %p232 = scmp.lt.s32.totalorder %s229, 15
          %s233 = scalar_select %p232, %s229, 15
          %s234 = smul.addr %s233, 2
          %s235 = smul.addr %s231, 32
          %s236 = sadd.s32 %s234, %s235
          %s237 = smul.addr %s236, 8
          %s238 = scalar_lea.vmem %s0, %s237
          %s239 = smul.u32 8, %s23
        $region36: #{up_basic_block_nhwc.1} parent=31 // pred_fallthru
          _
        // Predicated region
        $region37: #{up_basic_block_nhwc.1} parent=31 // pred_check
          %p240 = pneg %p77
        $region38: #{up_basic_block_nhwc.1} parent=31 // pred_check_branch
          %242 = sbr.rel (%p240) target = $region40
        $region39: #{up_basic_block_nhwc.1} parent=31 // pred_region
          %s243 = smul.u32 2, %s23
          %p244 = scmp.lt.s32.totalorder %s22, 1
          %s245 = scalar_select %p244, %s22, 1
          %p246 = scmp.lt.s32.totalorder %s243, 3
          %s247 = scalar_select %p246, %s243, 3
          %s248 = smul.addr %s247, 2
          %s249 = smul.addr %s245, 8
          %s250 = sadd.s32 %s248, %s249
          %s251 = smul.addr %s250, 8
          %s252 = scalar_lea.vmem %s1, %s251
          %s253 = smul.u32 2, %s23
        $region40: #{up_basic_block_nhwc.1} parent=31 // pred_fallthru
          _
      $region32: #{up_basic_block_nhwc.1} parent=5 // pred_fallthru
        _
      %p254 = scmp.le.s32.totalorder 1, %s15
      %p255 = scmp.lt.s32.totalorder %s15, 5
      %p256 = pnand %p254, %p255
      %p257 = pneg %p256
      // Predicated region
      $region41: #{up_basic_block_nhwc.1} parent=5 // pred_check
        _
      $region42: #{up_basic_block_nhwc.1} parent=5 // pred_check_branch
        %259 = sbr.rel (%p256) target = $region44
      $region43: #{up_basic_block_nhwc.1} parent=5 // pred_region
        %s260 = ssub.s32 %s15, 1
        %s261 = smul.u32 8, %s25
        %p262 = scmp.lt.s32.totalorder %s24, 1
        %s263 = scalar_select %p262, %s24, 1
        %p264 = scmp.lt.s32.totalorder %s261, 15
        %s265 = scalar_select %p264, %s261, 15
        %s266 = smul.addr %s265, 2
        %s267 = smul.addr %s263, 32
        %s268 = sadd.s32 %s266, %s267
        %s269 = smul.addr %s268, 8
        %s270 = scalar_lea.vmem %s0, %s269
        %p271 = pneg %p55
        %p272 = pneg %p52
        %s273 = smul.u32 2, %s25
        %p274 = scmp.lt.s32.totalorder %s24, 1
        %s275 = scalar_select %p274, %s24, 1
        %p276 = scmp.lt.s32.totalorder %s273, 3
        %s277 = scalar_select %p276, %s273, 3
        %s278 = smul.addr %s277, 2
        %s279 = smul.addr %s275, 8
        %s280 = sadd.s32 %s278, %s279
        %s281 = smul.addr %s280, 8
        %s282 = scalar_lea.vmem %s1, %s281
        %p283 = pneg %p83
        %p284 = pneg %p80
        %p285 = pneg %p104
        %p286 = pneg %p101
        %p287 = pneg %p125
        %p288 = pneg %p122
        %p289 = pneg %p146
        %p290 = pneg %p143
        %p291 = pneg %p167
        %p292 = pneg %p164
        %p293 = pneg %p195
        %p294 = pneg %p192
        %s295 = sand.u32 %s182, 1
        %s296 = scalar_lea.sflag [#allocation4], %s295
        %s297 = sand.u32 %s182, 1
        %s298 = smul.addr %s297, 128
        %s299 = scalar_lea.vmem [#allocation3], %s298
        %s300 = smul.u32 8, %s25
        %p301 = scmp.lt.s32.totalorder %s24, 1
        %s302 = scalar_select %p301, %s24, 1
        %p303 = scmp.lt.s32.totalorder %s300, 15
        %s304 = scalar_select %p303, %s300, 15
        %s305 = smul.addr %s304, 2
        %s306 = smul.addr %s302, 32
        %s307 = sadd.s32 %s305, %s306
        %s308 = smul.addr %s307, 8
        %s309 = scalar_lea.vmem %s0, %s308
        %s310 = smul.u32 8, %s25
        %s311 = smul.u32 2, %s25
        %p312 = scmp.lt.s32.totalorder %s24, 1
        %s313 = scalar_select %p312, %s24, 1
        %p314 = scmp.lt.s32.totalorder %s311, 3
        %s315 = scalar_select %p314, %s311, 3
        %s316 = smul.addr %s315, 2
        %s317 = smul.addr %s313, 8
        %s318 = sadd.s32 %s316, %s317
        %s319 = smul.addr %s318, 8
        %s320 = scalar_lea.vmem %s1, %s319
        %s321 = smul.u32 2, %s25
        %s322 = smul.u32 8, %s25
        %p324 = scmp.eq.s32.totalorder %s25, 0
        %p325 = scmp.eq.s32.totalorder %s25, 1
        %v326 = vld [vmem:[%s309] sm:$0xff]
        %v327 = vld [vmem:[%s309 + $0x8] sm:$0xff]
        %v328 = vld [vmem:[%s309 + $0x10] sm:$0xff]
        %v329 = vld [vmem:[%s309 + $0x18] sm:$0xff]
        %v330 = vld [vmem:[%s309 + $0x20] sm:$0xff]
        %v331 = vld [vmem:[%s309 + $0x28] sm:$0xff]
        %v332 = vld [vmem:[%s309 + $0x30] sm:$0xff]
        %v333 = vld [vmem:[%s309 + $0x38] sm:$0xff]
        %v334 = vld [vmem:[%s309 + $0x40] sm:$0xff]
        %v335 = vld [vmem:[%s309 + $0x48] sm:$0xff]
        %v336 = vld [vmem:[%s309 + $0x50] sm:$0xff]
        %v337 = vld [vmem:[%s309 + $0x58] sm:$0xff]
        %v338 = vld [vmem:[%s309 + $0x60] sm:$0xff]
        %v339 = vld [vmem:[%s309 + $0x68] sm:$0xff]
        %v340 = vld [vmem:[%s309 + $0x70] sm:$0xff]
        %v341 = vld [vmem:[%s309 + $0x78] sm:$0xff]
        %v342 = vld [vmem:[%s320] sm:$0xff]
        %v343 = vld [vmem:[%s320 + $0x8] sm:$0xff]
        %v344 = vld [vmem:[%s320 + $0x10] sm:$0xff]
        %v345 = vld [vmem:[%s320 + $0x18] sm:$0xff]
        %v346 = vld [vmem:[%s2] sm:$0xf]
        %v347 = vld [vmem:[%s2 + $0x4] sm:$0xf]
        %v348 = vld [vmem:[%s2 + $0x8] sm:$0xf]
        %v349 = vld [vmem:[%s2 + $0xc] sm:$0xf]
        %v350 = vld [vmem:[%s4] sm:$0x1]
        %v351 = vpack.c.bf16 %v327, %v326
        %v352 = vpack.c.bf16 %v329, %v328
        %v353 = vpack.c.bf16 %v331, %v330
        %v354 = vpack.c.bf16 %v333, %v332
        %v355 = vpack.c.bf16 %v335, %v334
        %v356 = vpack.c.bf16 %v337, %v336
        %v357 = vpack.c.bf16 %v339, %v338
        %v358 = vpack.c.bf16 %v341, %v340
        %v360 = vlaneseq
        %v361 = vshrl.u32 %v360, 7
        %v362 = vsub.s32 0, %v361
        %v363 = vrot.slane %v350, %v362
        %v369 = vunpack.c.l.b16 %v346
        %v370 = vunpack.c.l.b16 %v347
        %v371 = vunpack.c.l.b16 %v348
        %v372 = vunpack.c.l.b16 %v349
        %v373 = vpack.c.b16 %v370, %v369
        %v374 = vpack.c.b16 %v372, %v371
        %vm377 = vcmask 261120
        %v379 = vsel %vm377, %v351, 0
        %v382 = vsel %vm377, %v352, 0
        %v385 = vsel %vm377, %v353, 0
        %v388 = vsel %vm377, %v354, 0
        %v391 = vsel %vm377, %v355, 0
        %v394 = vsel %vm377, %v356, 0
        %v397 = vsel %vm377, %v357, 0
        %v400 = vsel %vm377, %v358, 0
        %402 = vmatprep.subr.bf16.mxu0 0
        %403 = vmatpush1.bf16.msra.mxu0 %v373
        %404 = vmatprep.subr.bf16.mxu0 0
        %405 = vmatpush1.bf16.msra.mxu0 %v374
        %406 = vmatprep.subr.bf16.mxu0 0
        %407 = vmatpush1.bf16.msra.mxu0 0
        %408 = vmatprep.subr.bf16.mxu0 0
        %409 = vmatpush1.bf16.msra.mxu0 0
        %410 = vmatprep.subr.bf16.mxu0 0
        %411 = vmatpush1.bf16.msra.mxu0 0
        %412 = vmatprep.subr.bf16.mxu0 0
        %413 = vmatpush1.bf16.msra.mxu0 0
        %414 = vmatprep.subr.bf16.mxu0 0
        %415 = vmatpush1.bf16.msra.mxu0 0
        %416 = vmatprep.subr.bf16.mxu0 0
        %417 = vmatpush1.bf16.msra.mxu0 0
        %418 = vmatprep.subr.bf16.mxu0 0
        %419 = vmatpush1.bf16.msra.mxu0 0
        %420 = vmatprep.subr.bf16.mxu0 0
        %421 = vmatpush1.bf16.msra.mxu0 0
        %422 = vmatprep.subr.bf16.mxu0 0
        %423 = vmatpush1.bf16.msra.mxu0 0
        %424 = vmatprep.subr.bf16.mxu0 0
        %425 = vmatpush1.bf16.msra.mxu0 0
        %426 = vmatprep.subr.bf16.mxu0 0
        %427 = vmatpush1.bf16.msra.mxu0 0
        %428 = vmatprep.subr.bf16.mxu0 0
        %429 = vmatpush1.bf16.msra.mxu0 0
        %430 = vmatprep.subr.bf16.mxu0 0
        %431 = vmatpush1.bf16.msra.mxu0 0
        %432 = vmatprep.subr.bf16.mxu0 0
        %433 = vmatpush1.bf16.msra.mxu0 0
        %434 = vmatprep.mubr.bf16.mxu0 0
        %435 = vmatmul.mubr.bf16.gmra.mrb[0].mxu0 %v379
        %v436 = vpop.f32.mrb[0].mxu0
        %v437 = vadd.f32 %v363, %v436
        %v438 = vpop.f32.mrb[0].mxu0
        %v439 = vpop.f32.mrb[0].mxu0
        %v440 = vadd.f32 %v363, %v439
        %v441 = vpop.f32.mrb[0].mxu0
        %442 = vmatprep.mubr.bf16.mxu0 0
        %443 = vmatmul.mubr.bf16.gmra.mrb[0].mxu0 %v382
        %v444 = vpop.f32.mrb[0].mxu0
        %v445 = vadd.f32 %v363, %v444
        %v446 = vpop.f32.mrb[0].mxu0
        %v447 = vpop.f32.mrb[0].mxu0
        %v448 = vadd.f32 %v363, %v447
        %v449 = vpop.f32.mrb[0].mxu0
        %450 = vmatprep.mubr.bf16.mxu0 0
        %451 = vmatmul.mubr.bf16.gmra.mrb[0].mxu0 %v385
        %v452 = vpop.f32.mrb[0].mxu0
        %v453 = vadd.f32 %v363, %v452
        %v454 = vpop.f32.mrb[0].mxu0
        %v455 = vpop.f32.mrb[0].mxu0
        %v456 = vadd.f32 %v363, %v455
        %v457 = vpop.f32.mrb[0].mxu0
        %458 = vmatprep.mubr.bf16.mxu0 0
        %459 = vmatmul.mubr.bf16.gmra.mrb[0].mxu0 %v388
        %v460 = vpop.f32.mrb[0].mxu0
        %v461 = vadd.f32 %v363, %v460
        %v462 = vpop.f32.mrb[0].mxu0
        %v463 = vpop.f32.mrb[0].mxu0
        %v464 = vadd.f32 %v363, %v463
        %v465 = vpop.f32.mrb[0].mxu0
        %466 = vmatprep.mubr.bf16.mxu0 0
        %467 = vmatmul.mubr.bf16.gmra.mrb[0].mxu0 %v391
        %v468 = vpop.f32.mrb[0].mxu0
        %v469 = vadd.f32 %v363, %v468
        %v470 = vpop.f32.mrb[0].mxu0
        %v471 = vpop.f32.mrb[0].mxu0
        %v472 = vadd.f32 %v363, %v471
        %v473 = vpop.f32.mrb[0].mxu0
        %474 = vmatprep.mubr.bf16.mxu0 0
        %475 = vmatmul.mubr.bf16.gmra.mrb[0].mxu0 %v394
        %v476 = vpop.f32.mrb[0].mxu0
        %v477 = vadd.f32 %v363, %v476
        %v478 = vpop.f32.mrb[0].mxu0
        %v479 = vpop.f32.mrb[0].mxu0
        %v480 = vadd.f32 %v363, %v479
        %v481 = vpop.f32.mrb[0].mxu0
        %482 = vmatprep.mubr.bf16.mxu0 0
        %483 = vmatmul.mubr.bf16.gmra.mrb[0].mxu0 %v397
        %v484 = vpop.f32.mrb[0].mxu0
        %v485 = vadd.f32 %v363, %v484
        %v486 = vpop.f32.mrb[0].mxu0
        %v487 = vpop.f32.mrb[0].mxu0
        %v488 = vadd.f32 %v363, %v487
        %v489 = vpop.f32.mrb[0].mxu0
        %490 = vmatprep.mubr.bf16.mxu0 0
        %491 = vmatmul.mubr.bf16.gmra.mrb[0].mxu0 %v400
        %v492 = vpop.f32.mrb[0].mxu0
        %v493 = vadd.f32 %v363, %v492
        %v494 = vpop.f32.mrb[0].mxu0
        %v495 = vpop.f32.mrb[0].mxu0
        %v496 = vadd.f32 %v363, %v495
        %v497 = vpop.f32.mrb[0].mxu0
        %498 = vdwg.mxu0
        %v499 = vmax.f32 %v437, 0.0
        %v500 = vmax.f32 %v440, 0.0
        %v501 = vmax.f32 %v445, 0.0
        %v502 = vmax.f32 %v448, 0.0
        %v503 = vmax.f32 %v453, 0.0
        %v504 = vmax.f32 %v456, 0.0
        %v505 = vmax.f32 %v461, 0.0
        %v506 = vmax.f32 %v464, 0.0
        %v507 = vmax.f32 %v469, 0.0
        %v508 = vmax.f32 %v472, 0.0
        %v509 = vmax.f32 %v477, 0.0
        %v510 = vmax.f32 %v480, 0.0
        %v511 = vmax.f32 %v485, 0.0
        %v512 = vmax.f32 %v488, 0.0
        %v513 = vmax.f32 %v493, 0.0
        %v514 = vmax.f32 %v496, 0.0
        %v515 = vpack.c.bf16 %v500, %v499
        %v516 = vpack.c.bf16 %v502, %v501
        %v517 = vpack.c.bf16 %v504, %v503
        %v518 = vpack.c.bf16 %v506, %v505
        %v519 = vpack.c.bf16 %v508, %v507
        %v520 = vpack.c.bf16 %v510, %v509
        %v521 = vpack.c.bf16 %v512, %v511
        %v522 = vpack.c.bf16 %v514, %v513
        %v523 = vpack.c.bf16 %v343, %v342
        %v524 = vpack.c.bf16 %v345, %v344
        %v526 = vsel %vm377, %v523, 0
        %v529 = vsel %vm377, %v524, 0
        %531 = vmatprep.subr.bf16.mxu0 0
        %532 = vmatpush1.bf16.msra.mxu0 %v373
        %533 = vmatprep.subr.bf16.mxu0 0
        %534 = vmatpush1.bf16.msra.mxu0 %v374
        %535 = vmatprep.subr.bf16.mxu0 0
        %536 = vmatpush1.bf16.msra.mxu0 0
        %537 = vmatprep.subr.bf16.mxu0 0
        %538 = vmatpush1.bf16.msra.mxu0 0
        %539 = vmatprep.subr.bf16.mxu0 0
        %540 = vmatpush1.bf16.msra.mxu0 0
        %541 = vmatprep.subr.bf16.mxu0 0
        %542 = vmatpush1.bf16.msra.mxu0 0
        %543 = vmatprep.subr.bf16.mxu0 0
        %544 = vmatpush1.bf16.msra.mxu0 0
        %545 = vmatprep.subr.bf16.mxu0 0
        %546 = vmatpush1.bf16.msra.mxu0 0
        %547 = vmatprep.subr.bf16.mxu0 0
        %548 = vmatpush1.bf16.msra.mxu0 0
        %549 = vmatprep.subr.bf16.mxu0 0
        %550 = vmatpush1.bf16.msra.mxu0 0
        %551 = vmatprep.subr.bf16.mxu0 0
        %552 = vmatpush1.bf16.msra.mxu0 0
        %553 = vmatprep.subr.bf16.mxu0 0
        %554 = vmatpush1.bf16.msra.mxu0 0
        %555 = vmatprep.subr.bf16.mxu0 0
        %556 = vmatpush1.bf16.msra.mxu0 0
        %557 = vmatprep.subr.bf16.mxu0 0
        %558 = vmatpush1.bf16.msra.mxu0 0
        %559 = vmatprep.subr.bf16.mxu0 0
        %560 = vmatpush1.bf16.msra.mxu0 0
        %561 = vmatprep.subr.bf16.mxu0 0
        %562 = vmatpush1.bf16.msra.mxu0 0
        %563 = vmatprep.mubr.bf16.mxu0 0
        %564 = vmatmul.mubr.bf16.gmra.mrb[0].mxu0 %v526
        %v565 = vpop.f32.mrb[0].mxu0
        %v566 = vadd.f32 %v363, %v565
        %v567 = vpop.f32.mrb[0].mxu0
        %v568 = vpop.f32.mrb[0].mxu0
        %v569 = vadd.f32 %v363, %v568
        %v570 = vpop.f32.mrb[0].mxu0
        %571 = vmatprep.mubr.bf16.mxu0 0
        %572 = vmatmul.mubr.bf16.gmra.mrb[0].mxu0 %v529
        %v573 = vpop.f32.mrb[0].mxu0
        %v574 = vadd.f32 %v363, %v573
        %v575 = vpop.f32.mrb[0].mxu0
        %v576 = vpop.f32.mrb[0].mxu0
        %v577 = vadd.f32 %v363, %v576
        %v578 = vpop.f32.mrb[0].mxu0
        %579 = vdwg.mxu0
        %v580 = vmax.f32 %v566, 0.0
        %v581 = vmax.f32 %v569, 0.0
        %v582 = vmax.f32 %v574, 0.0
        %v583 = vmax.f32 %v577, 0.0
        %s584 = scalar_select %p324, 0.0, 1.0
        %s585 = scalar_select %p325, 0.0, 1.0
        %v586 = vstv %s584
        %v587 = vmul.f32 %v580, %v586
        %v588 = vmul.f32 %v581, %v586
        %v589 = vpack.c.bf16 %v588, %v587
        %v590 = vstv %s585
        %v591 = vmul.f32 %v582, %v590
        %v592 = vmul.f32 %v583, %v590
        %v593 = vpack.c.bf16 %v592, %v591
        %vm594 = vcmask 253952
        %vm595 = vsmask.f32 256
        %vm596 = vmand %vm594, %vm595
        %v597 = vld [vmem:[#allocation2] sm:$0x1]
        %v598 = vsel %vm596, 0, %v597
        %599 = vst [vmem:[#allocation2] sm:$0x1] %v598
        %v600 = vld [vmem:[#allocation2 + $0xc] sm:$0x1]
        %v601 = vsel %vm596, 0, %v600
        %602 = vst [vmem:[#allocation2 + $0xc] sm:$0x1] %v601
        %v603 = vld [vmem:[#allocation2 + $0x18] sm:$0x1]
        %v604 = vsel %vm596, 0, %v603
        %605 = vst [vmem:[#allocation2 + $0x18] sm:$0x1] %v604
        %v606 = vld [vmem:[#allocation2 + $0x24] sm:$0x1]
        %v607 = vsel %vm596, 0, %v606
        %608 = vst [vmem:[#allocation2 + $0x24] sm:$0x1] %v607
        %v609 = vld [vmem:[#allocation2 + $0x30] sm:$0x1]
        %v610 = vsel %vm596, 0, %v609
        %611 = vst [vmem:[#allocation2 + $0x30] sm:$0x1] %v610
        %v612 = vld [vmem:[#allocation2 + $0x3c] sm:$0x1]
        %v613 = vsel %vm596, 0, %v612
        %614 = vst [vmem:[#allocation2 + $0x3c] sm:$0x1] %v613
        %v615 = vld [vmem:[#allocation2 + $0x48] sm:$0x1]
        %v616 = vsel %vm596, 0, %v615
        %617 = vst [vmem:[#allocation2 + $0x48] sm:$0x1] %v616
        %v618 = vld [vmem:[#allocation2 + $0x54] sm:$0x1]
        %v619 = vsel %vm596, 0, %v618
        %620 = vst [vmem:[#allocation2 + $0x54] sm:$0x1] %v619
        %v621 = vld [vmem:[#allocation2 + $0x60] sm:$0x1]
        %v622 = vsel %vm596, 0, %v621
        %623 = vst [vmem:[#allocation2 + $0x60] sm:$0x1] %v622
        %v624 = vld [vmem:[#allocation2 + $0x6c] sm:$0x1]
        %v625 = vsel %vm596, 0, %v624
        %626 = vst [vmem:[#allocation2 + $0x6c] sm:$0x1] %v625
        %vm627 = vsmask.f32 7938
        %vm628 = vmand %vm594, %vm627
        %v629 = vld [vmem:[#allocation2 + $0x8] sm:$0x1]
        %v630 = vsel %vm628, 0, %v629
        %631 = vst [vmem:[#allocation2 + $0x8] sm:$0x1] %v630
        %v632 = vld [vmem:[#allocation2 + $0x14] sm:$0x1]
        %v633 = vsel %vm628, 0, %v632
        %634 = vst [vmem:[#allocation2 + $0x14] sm:$0x1] %v633
        %v635 = vld [vmem:[#allocation2 + $0x20] sm:$0x1]
        %v636 = vsel %vm628, 0, %v635
        %637 = vst [vmem:[#allocation2 + $0x20] sm:$0x1] %v636
        %v638 = vld [vmem:[#allocation2 + $0x2c] sm:$0x1]
        %v639 = vsel %vm628, 0, %v638
        %640 = vst [vmem:[#allocation2 + $0x2c] sm:$0x1] %v639
        %v641 = vld [vmem:[#allocation2 + $0x38] sm:$0x1]
        %v642 = vsel %vm628, 0, %v641
        %643 = vst [vmem:[#allocation2 + $0x38] sm:$0x1] %v642
        %v644 = vld [vmem:[#allocation2 + $0x44] sm:$0x1]
        %v645 = vsel %vm628, 0, %v644
        %646 = vst [vmem:[#allocation2 + $0x44] sm:$0x1] %v645
        %v647 = vld [vmem:[#allocation2 + $0x50] sm:$0x1]
        %v648 = vsel %vm628, 0, %v647
        %649 = vst [vmem:[#allocation2 + $0x50] sm:$0x1] %v648
        %v650 = vld [vmem:[#allocation2 + $0x5c] sm:$0x1]
        %v651 = vsel %vm628, 0, %v650
        %652 = vst [vmem:[#allocation2 + $0x5c] sm:$0x1] %v651
        %v653 = vld [vmem:[#allocation2 + $0x68] sm:$0x1]
        %v654 = vsel %vm628, 0, %v653
        %655 = vst [vmem:[#allocation2 + $0x68] sm:$0x1] %v654
        %v656 = vld [vmem:[#allocation2 + $0x74] sm:$0x1]
        %v657 = vsel %vm628, 0, %v656
        %658 = vst [vmem:[#allocation2 + $0x74] sm:$0x1] %v657
        %v660 = vunpack.c.l.b16 %v589
        %v661 = vunpack.c.h.b16 %v589
        %v662 = vpack.c.b16 %v660, %v660
        %v663 = vpack.c.b16 %v661, %v661
        %vm664 = vsmask.f32 4368
        %vm665 = vmor %vm595, %vm664
        %v667 = vshrl.u32 %v662, 16
        %v669 = vrot.slane %v667, 7
        %v670 = vshll.u32 %v662, 16
        %v672 = vor.u32 %v669, %v670
        %v673 = vrot.slane %v669, 4
        %v675 = vshrl.u32 %v663, 16
        %v677 = vrot.slane %v675, 7
        %v678 = vshll.u32 %v663, 16
        %v680 = vor.u32 %v677, %v678
        %v681 = vsel %vm665, %v673, %v680
        %v682 = vrot.slane %v677, 4
        %vm686 = vcmask 257024
        %vm687 = vmand %vm686, %vm627
        %v688 = vld [vmem:[#allocation2] sm:$0xf]
        %v689 = vsel %vm687, %v672, %v688
        %690 = vst [vmem:[#allocation2] sm:$0xf] %v689
        %vm691 = vcmask 257024
        %692 = vst.msk [vmem:[#allocation2 + $0x4] sm:$0xf] %vm691, %v681
        %v693 = vld [vmem:[#allocation2 + $0x8] sm:$0x1]
        %v694 = vsel %vm596, %v682, %v693
        %695 = vst [vmem:[#allocation2 + $0x8] sm:$0x1] %v694
        %v697 = vunpack.c.l.b16 %v593
        %v698 = vunpack.c.h.b16 %v593
        %v699 = vpack.c.b16 %v697, %v697
        %v700 = vpack.c.b16 %v698, %v698
        %v702 = vshrl.u32 %v699, 16
        %v704 = vrot.slane %v702, 7
        %v705 = vshll.u32 %v699, 16
        %v707 = vor.u32 %v704, %v705
        %v708 = vrot.slane %v704, 4
        %v710 = vshrl.u32 %v700, 16
        %v712 = vrot.slane %v710, 7
        %v713 = vshll.u32 %v700, 16
        %v715 = vor.u32 %v712, %v713
        %v716 = vsel %vm665, %v708, %v715
        %v717 = vrot.slane %v712, 4
        %s721 = scalar_lea.vmem [#allocation2], 108
        %v722 = vld [vmem:[%s721] sm:$0xf]
        %v723 = vsel %vm687, %v707, %v722
        %724 = vst [vmem:[%s721] sm:$0xf] %v723
        %725 = vst.msk [vmem:[%s721 + $0x4] sm:$0xf] %vm691, %v716
        %v726 = vld [vmem:[%s721 + $0x8] sm:$0x1]
        %v727 = vsel %vm596, %v717, %v726
        %728 = vst [vmem:[%s721 + $0x8] sm:$0x1] %v727
        %v737 = vunpack.c.l.b16 %v515
        %v738 = vunpack.c.h.b16 %v515
        %v739 = vunpack.c.l.b16 %v516
        %v740 = vunpack.c.h.b16 %v516
        %v741 = vunpack.c.l.b16 %v517
        %v742 = vunpack.c.h.b16 %v517
        %v743 = vunpack.c.l.b16 %v518
        %v744 = vunpack.c.h.b16 %v518
        %v745 = vunpack.c.l.b16 %v519
        %v746 = vunpack.c.h.b16 %v519
        %v747 = vunpack.c.l.b16 %v520
        %v748 = vunpack.c.h.b16 %v520
        %v749 = vunpack.c.l.b16 %v521
        %v750 = vunpack.c.h.b16 %v521
        %v751 = vunpack.c.l.b16 %v522
        %v752 = vunpack.c.h.b16 %v522
        %v753 = vpack.c.b16 %v737, %v737
        %v754 = vpack.c.b16 %v738, %v738
        %v755 = vpack.c.b16 %v739, %v739
        %v756 = vpack.c.b16 %v740, %v740
        %v757 = vpack.c.b16 %v741, %v741
        %v758 = vpack.c.b16 %v742, %v742
        %v759 = vpack.c.b16 %v743, %v743
        %v760 = vpack.c.b16 %v744, %v744
        %v761 = vpack.c.b16 %v745, %v745
        %v762 = vpack.c.b16 %v746, %v746
        %v763 = vpack.c.b16 %v747, %v747
        %v764 = vpack.c.b16 %v748, %v748
        %v765 = vpack.c.b16 %v749, %v749
        %v766 = vpack.c.b16 %v750, %v750
        %v767 = vpack.c.b16 %v751, %v751
        %v768 = vpack.c.b16 %v752, %v752
        %v770 = vshrl.u32 %v753, 16
        %v772 = vrot.slane %v770, 7
        %v773 = vshll.u32 %v753, 16
        %v775 = vor.u32 %v772, %v773
        %v776 = vrot.slane %v772, 4
        %v778 = vshrl.u32 %v754, 16
        %v780 = vrot.slane %v778, 7
        %v781 = vshll.u32 %v754, 16
        %v783 = vor.u32 %v780, %v781
        %v784 = vsel %vm665, %v776, %v783
        %v785 = vrot.slane %v780, 4
        %v787 = vshrl.u32 %v755, 16
        %v789 = vrot.slane %v787, 7
        %v790 = vshll.u32 %v755, 16
        %v792 = vor.u32 %v789, %v790
        %v793 = vrot.slane %v789, 4
        %v795 = vshrl.u32 %v756, 16
        %v797 = vrot.slane %v795, 7
        %v798 = vshll.u32 %v756, 16
        %v800 = vor.u32 %v797, %v798
        %v801 = vsel %vm665, %v793, %v800
        %v802 = vrot.slane %v797, 4
        %v804 = vshrl.u32 %v757, 16
        %v806 = vrot.slane %v804, 7
        %v807 = vshll.u32 %v757, 16
        %v809 = vor.u32 %v806, %v807
        %v810 = vrot.slane %v806, 4
        %v812 = vshrl.u32 %v758, 16
        %v814 = vrot.slane %v812, 7
        %v815 = vshll.u32 %v758, 16
        %v817 = vor.u32 %v814, %v815
        %v818 = vsel %vm665, %v810, %v817
        %v819 = vrot.slane %v814, 4
        %v821 = vshrl.u32 %v759, 16
        %v823 = vrot.slane %v821, 7
        %v824 = vshll.u32 %v759, 16
        %v826 = vor.u32 %v823, %v824
        %v827 = vrot.slane %v823, 4
        %v829 = vshrl.u32 %v760, 16
        %v831 = vrot.slane %v829, 7
        %v832 = vshll.u32 %v760, 16
        %v834 = vor.u32 %v831, %v832
        %v835 = vsel %vm665, %v827, %v834
        %v836 = vrot.slane %v831, 4
        %v838 = vshrl.u32 %v761, 16
        %v840 = vrot.slane %v838, 7
        %v841 = vshll.u32 %v761, 16
        %v843 = vor.u32 %v840, %v841
        %v844 = vrot.slane %v840, 4
        %v846 = vshrl.u32 %v762, 16
        %v848 = vrot.slane %v846, 7
        %v849 = vshll.u32 %v762, 16
        %v851 = vor.u32 %v848, %v849
        %v852 = vsel %vm665, %v844, %v851
        %v853 = vrot.slane %v848, 4
        %v855 = vshrl.u32 %v763, 16
        %v857 = vrot.slane %v855, 7
        %v858 = vshll.u32 %v763, 16
        %v860 = vor.u32 %v857, %v858
        %v861 = vrot.slane %v857, 4
        %v863 = vshrl.u32 %v764, 16
        %v865 = vrot.slane %v863, 7
        %v866 = vshll.u32 %v764, 16
        %v868 = vor.u32 %v865, %v866
        %v869 = vsel %vm665, %v861, %v868
        %v870 = vrot.slane %v865, 4
        %v872 = vshrl.u32 %v765, 16
        %v874 = vrot.slane %v872, 7
        %v875 = vshll.u32 %v765, 16
        %v877 = vor.u32 %v874, %v875
        %v878 = vrot.slane %v874, 4
        %v880 = vshrl.u32 %v766, 16
        %v882 = vrot.slane %v880, 7
        %v883 = vshll.u32 %v766, 16
        %v885 = vor.u32 %v882, %v883
        %v886 = vsel %vm665, %v878, %v885
        %v887 = vrot.slane %v882, 4
        %v889 = vshrl.u32 %v767, 16
        %v891 = vrot.slane %v889, 7
        %v892 = vshll.u32 %v767, 16
        %v894 = vor.u32 %v891, %v892
        %v895 = vrot.slane %v891, 4
        %v897 = vshrl.u32 %v768, 16
        %v899 = vrot.slane %v897, 7
        %v900 = vshll.u32 %v768, 16
        %v902 = vor.u32 %v899, %v900
        %v903 = vsel %vm665, %v895, %v902
        %v904 = vrot.slane %v899, 4
        %s929 = scalar_lea.vmem [#allocation2], 12
        %v930 = vld [vmem:[%s929] sm:$0xf]
        %v931 = vsel %vm687, %v775, %v930
        %932 = vst [vmem:[%s929] sm:$0xf] %v931
        %933 = vst.msk [vmem:[%s929 + $0x4] sm:$0xf] %vm691, %v784
        %v934 = vld [vmem:[%s929 + $0x8] sm:$0x1]
        %v935 = vsel %vm596, %v785, %v934
        %936 = vst [vmem:[%s929 + $0x8] sm:$0x1] %v935
        %v937 = vld [vmem:[%s929 + $0xc] sm:$0xf]
        %v938 = vsel %vm687, %v792, %v937
        %939 = vst [vmem:[%s929 + $0xc] sm:$0xf] %v938
        %940 = vst.msk [vmem:[%s929 + $0x10] sm:$0xf] %vm691, %v801
        %v941 = vld [vmem:[%s929 + $0x14] sm:$0x1]
        %v942 = vsel %vm596, %v802, %v941
        %943 = vst [vmem:[%s929 + $0x14] sm:$0x1] %v942
        %v944 = vld [vmem:[%s929 + $0x18] sm:$0xf]
        %v945 = vsel %vm687, %v809, %v944
        %946 = vst [vmem:[%s929 + $0x18] sm:$0xf] %v945
        %947 = vst.msk [vmem:[%s929 + $0x1c] sm:$0xf] %vm691, %v818
        %v948 = vld [vmem:[%s929 + $0x20] sm:$0x1]
        %v949 = vsel %vm596, %v819, %v948
        %950 = vst [vmem:[%s929 + $0x20] sm:$0x1] %v949
        %v951 = vld [vmem:[%s929 + $0x24] sm:$0xf]
        %v952 = vsel %vm687, %v826, %v951
        %953 = vst [vmem:[%s929 + $0x24] sm:$0xf] %v952
        %954 = vst.msk [vmem:[%s929 + $0x28] sm:$0xf] %vm691, %v835
        %v955 = vld [vmem:[%s929 + $0x2c] sm:$0x1]
        %v956 = vsel %vm596, %v836, %v955
        %957 = vst [vmem:[%s929 + $0x2c] sm:$0x1] %v956
        %v958 = vld [vmem:[%s929 + $0x30] sm:$0xf]
        %v959 = vsel %vm687, %v843, %v958
        %960 = vst [vmem:[%s929 + $0x30] sm:$0xf] %v959
        %961 = vst.msk [vmem:[%s929 + $0x34] sm:$0xf] %vm691, %v852
        %v962 = vld [vmem:[%s929 + $0x38] sm:$0x1]
        %v963 = vsel %vm596, %v853, %v962
        %964 = vst [vmem:[%s929 + $0x38] sm:$0x1] %v963
        %v965 = vld [vmem:[%s929 + $0x3c] sm:$0xf]
        %v966 = vsel %vm687, %v860, %v965
        %967 = vst [vmem:[%s929 + $0x3c] sm:$0xf] %v966
        %968 = vst.msk [vmem:[%s929 + $0x40] sm:$0xf] %vm691, %v869
        %v969 = vld [vmem:[%s929 + $0x44] sm:$0x1]
        %v970 = vsel %vm596, %v870, %v969
        %971 = vst [vmem:[%s929 + $0x44] sm:$0x1] %v970
        %v972 = vld [vmem:[%s929 + $0x48] sm:$0xf]
        %v973 = vsel %vm687, %v877, %v972
        %974 = vst [vmem:[%s929 + $0x48] sm:$0xf] %v973
        %975 = vst.msk [vmem:[%s929 + $0x4c] sm:$0xf] %vm691, %v886
        %v976 = vld [vmem:[%s929 + $0x50] sm:$0x1]
        %v977 = vsel %vm596, %v887, %v976
        %978 = vst [vmem:[%s929 + $0x50] sm:$0x1] %v977
        %v979 = vld [vmem:[%s929 + $0x54] sm:$0xf]
        %v980 = vsel %vm687, %v894, %v979
        %981 = vst [vmem:[%s929 + $0x54] sm:$0xf] %v980
        %982 = vst.msk [vmem:[%s929 + $0x58] sm:$0xf] %vm691, %v903
        %v983 = vld [vmem:[%s929 + $0x5c] sm:$0x1]
        %v984 = vsel %vm596, %v904, %v983
        %985 = vst [vmem:[%s929 + $0x5c] sm:$0x1] %v984
        %v986 = vld [vmem:[#allocation2] sm:$0xf]
        %v987 = vld [vmem:[#allocation2 + $0x4] sm:$0xf]
        %v988 = vld [vmem:[#allocation2 + $0xc] sm:$0xf]
        %v989 = vld [vmem:[#allocation2 + $0x10] sm:$0xf]
        %v990 = vld [vmem:[#allocation2 + $0x18] sm:$0xf]
        %v991 = vld [vmem:[#allocation2 + $0x1c] sm:$0xf]
        %v992 = vld [vmem:[#allocation2 + $0x24] sm:$0xf]
        %v993 = vld [vmem:[#allocation2 + $0x28] sm:$0xf]
        %v994 = vld [vmem:[#allocation2 + $0x30] sm:$0xf]
        %v995 = vld [vmem:[#allocation2 + $0x34] sm:$0xf]
        %v996 = vld [vmem:[#allocation2 + $0x3c] sm:$0xf]
        %v997 = vld [vmem:[#allocation2 + $0x40] sm:$0xf]
        %v998 = vld [vmem:[#allocation2 + $0x48] sm:$0xf]
        %v999 = vld [vmem:[#allocation2 + $0x4c] sm:$0xf]
        %v1000 = vld [vmem:[#allocation2 + $0x54] sm:$0xf]
        %v1001 = vld [vmem:[#allocation2 + $0x58] sm:$0xf]
        %v1002 = vld [vmem:[%s3] sm:$0xf]
        %v1003 = vld [vmem:[%s3 + $0x4] sm:$0xf]
        %v1004 = vld [vmem:[%s3 + $0x8] sm:$0xf]
        %v1005 = vld [vmem:[%s3 + $0xc] sm:$0xf]
        %v1006 = vld [vmem:[#allocation2 + $0x8] sm:$0x1]
        %v1007 = vld [vmem:[#allocation2 + $0x14] sm:$0x1]
        %v1008 = vld [vmem:[#allocation2 + $0x20] sm:$0x1]
        %v1009 = vld [vmem:[#allocation2 + $0x2c] sm:$0x1]
        %v1010 = vld [vmem:[#allocation2 + $0x38] sm:$0x1]
        %v1011 = vld [vmem:[#allocation2 + $0x44] sm:$0x1]
        %v1012 = vld [vmem:[#allocation2 + $0x50] sm:$0x1]
        %v1013 = vld [vmem:[#allocation2 + $0x5c] sm:$0x1]
        %vm1014 = vsmask.f32 3328
        %vm1015 = vsmask.f32 7440
        %vm1016 = vmor %vm1014, %vm1015
        %v1018 = vshrl.u32 %v986, 16
        %v1020 = vrot.slane %v1018, 4
        %v1021 = vshll.u32 %v986, 16
        %v1023 = vrot.slane %v1021, 5
        %v1024 = vor.u32 %v1020, %v1023
        %v1025 = vrot.slane %v1024, 4
        %v1027 = vshll.u32 %v987, 16
        %v1029 = vrot.slane %v1027, 5
        %v1030 = vsel %vm1016, %v1025, %v1029
        %v1031 = vshrl.u32 %v987, 16
        %v1033 = vrot.slane %v1031, 4
        %v1034 = vor.u32 %v1033, %v1029
        %v1035 = vrot.slane %v1034, 4
        %v1037 = vshll.u32 %v1006, 16
        %v1039 = vrot.slane %v1037, 5
        %v1040 = vsel %vm1016, %v1035, %v1039
        %v1042 = vshrl.u32 %v988, 16
        %v1044 = vrot.slane %v1042, 4
        %v1045 = vshll.u32 %v988, 16
        %v1047 = vrot.slane %v1045, 5
        %v1048 = vor.u32 %v1044, %v1047
        %v1049 = vrot.slane %v1048, 4
        %v1051 = vshll.u32 %v989, 16
        %v1053 = vrot.slane %v1051, 5
        %v1054 = vsel %vm1016, %v1049, %v1053
        %v1055 = vshrl.u32 %v989, 16
        %v1057 = vrot.slane %v1055, 4
        %v1058 = vor.u32 %v1057, %v1053
        %v1059 = vrot.slane %v1058, 4
        %v1061 = vshll.u32 %v1007, 16
        %v1063 = vrot.slane %v1061, 5
        %v1064 = vsel %vm1016, %v1059, %v1063
        %v1066 = vshrl.u32 %v990, 16
        %v1068 = vrot.slane %v1066, 4
        %v1069 = vshll.u32 %v990, 16
        %v1071 = vrot.slane %v1069, 5
        %v1072 = vor.u32 %v1068, %v1071
        %v1073 = vrot.slane %v1072, 4
        %v1075 = vshll.u32 %v991, 16
        %v1077 = vrot.slane %v1075, 5
        %v1078 = vsel %vm1016, %v1073, %v1077
        %v1079 = vshrl.u32 %v991, 16
        %v1081 = vrot.slane %v1079, 4
        %v1082 = vor.u32 %v1081, %v1077
        %v1083 = vrot.slane %v1082, 4
        %v1085 = vshll.u32 %v1008, 16
        %v1087 = vrot.slane %v1085, 5
        %v1088 = vsel %vm1016, %v1083, %v1087
        %v1090 = vshrl.u32 %v992, 16
        %v1092 = vrot.slane %v1090, 4
        %v1093 = vshll.u32 %v992, 16
        %v1095 = vrot.slane %v1093, 5
        %v1096 = vor.u32 %v1092, %v1095
        %v1097 = vrot.slane %v1096, 4
        %v1099 = vshll.u32 %v993, 16
        %v1101 = vrot.slane %v1099, 5
        %v1102 = vsel %vm1016, %v1097, %v1101
        %v1103 = vshrl.u32 %v993, 16
        %v1105 = vrot.slane %v1103, 4
        %v1106 = vor.u32 %v1105, %v1101
        %v1107 = vrot.slane %v1106, 4
        %v1109 = vshll.u32 %v1009, 16
        %v1111 = vrot.slane %v1109, 5
        %v1112 = vsel %vm1016, %v1107, %v1111
        %v1114 = vshrl.u32 %v994, 16
        %v1116 = vrot.slane %v1114, 4
        %v1117 = vshll.u32 %v994, 16
        %v1119 = vrot.slane %v1117, 5
        %v1120 = vor.u32 %v1116, %v1119
        %v1121 = vrot.slane %v1120, 4
        %v1123 = vshll.u32 %v995, 16
        %v1125 = vrot.slane %v1123, 5
        %v1126 = vsel %vm1016, %v1121, %v1125
        %v1127 = vshrl.u32 %v995, 16
        %v1129 = vrot.slane %v1127, 4
        %v1130 = vor.u32 %v1129, %v1125
        %v1131 = vrot.slane %v1130, 4
        %v1133 = vshll.u32 %v1010, 16
        %v1135 = vrot.slane %v1133, 5
        %v1136 = vsel %vm1016, %v1131, %v1135
        %v1138 = vshrl.u32 %v996, 16
        %v1140 = vrot.slane %v1138, 4
        %v1141 = vshll.u32 %v996, 16
        %v1143 = vrot.slane %v1141, 5
        %v1144 = vor.u32 %v1140, %v1143
        %v1145 = vrot.slane %v1144, 4
        %v1147 = vshll.u32 %v997, 16
        %v1149 = vrot.slane %v1147, 5
        %v1150 = vsel %vm1016, %v1145, %v1149
        %v1151 = vshrl.u32 %v997, 16
        %v1153 = vrot.slane %v1151, 4
        %v1154 = vor.u32 %v1153, %v1149
        %v1155 = vrot.slane %v1154, 4
        %v1157 = vshll.u32 %v1011, 16
        %v1159 = vrot.slane %v1157, 5
        %v1160 = vsel %vm1016, %v1155, %v1159
        %v1162 = vshrl.u32 %v998, 16
        %v1164 = vrot.slane %v1162, 4
        %v1165 = vshll.u32 %v998, 16
        %v1167 = vrot.slane %v1165, 5
        %v1168 = vor.u32 %v1164, %v1167
        %v1169 = vrot.slane %v1168, 4
        %v1171 = vshll.u32 %v999, 16
        %v1173 = vrot.slane %v1171, 5
        %v1174 = vsel %vm1016, %v1169, %v1173
        %v1175 = vshrl.u32 %v999, 16
        %v1177 = vrot.slane %v1175, 4
        %v1178 = vor.u32 %v1177, %v1173
        %v1179 = vrot.slane %v1178, 4
        %v1181 = vshll.u32 %v1012, 16
        %v1183 = vrot.slane %v1181, 5
        %v1184 = vsel %vm1016, %v1179, %v1183
        %v1186 = vshrl.u32 %v1000, 16
        %v1188 = vrot.slane %v1186, 4
        %v1189 = vshll.u32 %v1000, 16
        %v1191 = vrot.slane %v1189, 5
        %v1192 = vor.u32 %v1188, %v1191
        %v1193 = vrot.slane %v1192, 4
        %v1195 = vshll.u32 %v1001, 16
        %v1197 = vrot.slane %v1195, 5
        %v1198 = vsel %vm1016, %v1193, %v1197
        %v1199 = vshrl.u32 %v1001, 16
        %v1201 = vrot.slane %v1199, 4
        %v1202 = vor.u32 %v1201, %v1197
        %v1203 = vrot.slane %v1202, 4
        %v1205 = vshll.u32 %v1013, 16
        %v1207 = vrot.slane %v1205, 5
        %v1208 = vsel %vm1016, %v1203, %v1207
        %v1209 = vld [vmem:[%s3 + $0x10] sm:$0xf]
        %v1210 = vld [vmem:[%s3 + $0x14] sm:$0xf]
        %v1211 = vld [vmem:[%s3 + $0x18] sm:$0xf]
        %v1212 = vld [vmem:[%s3 + $0x1c] sm:$0xf]
        %v1213 = vunpack.c.l.b16 %v1030
        %v1214 = vunpack.c.l.b16 %v1040
        %v1215 = vunpack.c.l.b16 %v1054
        %v1216 = vunpack.c.l.b16 %v1064
        %v1217 = vunpack.c.l.b16 %v1078
        %v1218 = vunpack.c.l.b16 %v1088
        %v1219 = vunpack.c.l.b16 %v1102
        %v1220 = vunpack.c.l.b16 %v1112
        %v1221 = vunpack.c.l.b16 %v1126
        %v1222 = vunpack.c.l.b16 %v1136
        %v1223 = vunpack.c.l.b16 %v1150
        %v1224 = vunpack.c.l.b16 %v1160
        %v1225 = vunpack.c.l.b16 %v1174
        %v1226 = vunpack.c.l.b16 %v1184
        %v1227 = vunpack.c.l.b16 %v1198
        %v1228 = vunpack.c.l.b16 %v1208
        %v1229 = vpack.c.b16 %v1214, %v1213
        %v1230 = vpack.c.b16 %v1216, %v1215
        %v1231 = vpack.c.b16 %v1218, %v1217
        %v1232 = vpack.c.b16 %v1220, %v1219
        %v1233 = vpack.c.b16 %v1222, %v1221
        %v1234 = vpack.c.b16 %v1224, %v1223
        %v1235 = vpack.c.b16 %v1226, %v1225
        %v1236 = vpack.c.b16 %v1228, %v1227
        %v1241 = vunpack.c.l.b16 %v1209
        %v1242 = vunpack.c.l.b16 %v1210
        %v1243 = vunpack.c.l.b16 %v1211
        %v1244 = vunpack.c.l.b16 %v1212
        %v1245 = vpack.c.b16 %v1242, %v1241
        %v1246 = vpack.c.b16 %v1244, %v1243
        %v1250 = vsel %vm377, %v1229, 0
        %v1253 = vsel %vm377, %v1230, 0
        %v1256 = vsel %vm377, %v1231, 0
        %v1259 = vsel %vm377, %v1232, 0
        %v1262 = vsel %vm377, %v1233, 0
        %v1265 = vsel %vm377, %v1234, 0
        %v1268 = vsel %vm377, %v1235, 0
        %v1271 = vsel %vm377, %v1236, 0
        %1273 = vmatprep.subr.bf16.mxu0 0
        %1274 = vmatpush1.bf16.msra.mxu0 %v1245
        %1275 = vmatprep.subr.bf16.mxu0 0
        %1276 = vmatpush1.bf16.msra.mxu0 %v1246
        %1277 = vmatprep.subr.bf16.mxu0 0
        %1278 = vmatpush1.bf16.msra.mxu0 0
        %1279 = vmatprep.subr.bf16.mxu0 0
        %1280 = vmatpush1.bf16.msra.mxu0 0
        %1281 = vmatprep.subr.bf16.mxu0 0
        %1282 = vmatpush1.bf16.msra.mxu0 0
        %1283 = vmatprep.subr.bf16.mxu0 0
        %1284 = vmatpush1.bf16.msra.mxu0 0
        %1285 = vmatprep.subr.bf16.mxu0 0
        %1286 = vmatpush1.bf16.msra.mxu0 0
        %1287 = vmatprep.subr.bf16.mxu0 0
        %1288 = vmatpush1.bf16.msra.mxu0 0
        %1289 = vmatprep.subr.bf16.mxu0 0
        %1290 = vmatpush1.bf16.msra.mxu0 0
        %1291 = vmatprep.subr.bf16.mxu0 0
        %1292 = vmatpush1.bf16.msra.mxu0 0
        %1293 = vmatprep.subr.bf16.mxu0 0
        %1294 = vmatpush1.bf16.msra.mxu0 0
        %1295 = vmatprep.subr.bf16.mxu0 0
        %1296 = vmatpush1.bf16.msra.mxu0 0
        %1297 = vmatprep.subr.bf16.mxu0 0
        %1298 = vmatpush1.bf16.msra.mxu0 0
        %1299 = vmatprep.subr.bf16.mxu0 0
        %1300 = vmatpush1.bf16.msra.mxu0 0
        %1301 = vmatprep.subr.bf16.mxu0 0
        %1302 = vmatpush1.bf16.msra.mxu0 0
        %1303 = vmatprep.subr.bf16.mxu0 0
        %1304 = vmatpush1.bf16.msra.mxu0 0
        %1305 = vmatprep.mubr.bf16.mxu0 0
        %1306 = vmatmul.mubr.bf16.gmra.mrb[0].mxu0 %v1250
        %v1307 = vpop.f32.mrb[0].mxu0
        %v1308 = vadd.f32 0.0, %v1307
        %v1309 = vpop.f32.mrb[0].mxu0
        %v1310 = vpop.f32.mrb[0].mxu0
        %v1311 = vadd.f32 0.0, %v1310
        %v1312 = vpop.f32.mrb[0].mxu0
        %1313 = vmatprep.mubr.bf16.mxu0 0
        %1314 = vmatmul.mubr.bf16.gmra.mrb[0].mxu0 %v1253
        %v1315 = vpop.f32.mrb[0].mxu0
        %v1316 = vadd.f32 0.0, %v1315
        %v1317 = vpop.f32.mrb[0].mxu0
        %v1318 = vpop.f32.mrb[0].mxu0
        %v1319 = vadd.f32 0.0, %v1318
        %v1320 = vpop.f32.mrb[0].mxu0
        %1321 = vmatprep.mubr.bf16.mxu0 0
        %1322 = vmatmul.mubr.bf16.gmra.mrb[0].mxu0 %v1256
        %v1323 = vpop.f32.mrb[0].mxu0
        %v1324 = vadd.f32 0.0, %v1323
        %v1325 = vpop.f32.mrb[0].mxu0
        %v1326 = vpop.f32.mrb[0].mxu0
        %v1327 = vadd.f32 0.0, %v1326
        %v1328 = vpop.f32.mrb[0].mxu0
        %1329 = vmatprep.mubr.bf16.mxu0 0
        %1330 = vmatmul.mubr.bf16.gmra.mrb[0].mxu0 %v1259
        %v1331 = vpop.f32.mrb[0].mxu0
        %v1332 = vadd.f32 0.0, %v1331
        %v1333 = vpop.f32.mrb[0].mxu0
        %v1334 = vpop.f32.mrb[0].mxu0
        %v1335 = vadd.f32 0.0, %v1334
        %v1336 = vpop.f32.mrb[0].mxu0
        %1337 = vmatprep.mubr.bf16.mxu0 0
        %1338 = vmatmul.mubr.bf16.gmra.mrb[0].mxu0 %v1262
        %v1339 = vpop.f32.mrb[0].mxu0
        %v1340 = vadd.f32 0.0, %v1339
        %v1341 = vpop.f32.mrb[0].mxu0
        %v1342 = vpop.f32.mrb[0].mxu0
        %v1343 = vadd.f32 0.0, %v1342
        %v1344 = vpop.f32.mrb[0].mxu0
        %1345 = vmatprep.mubr.bf16.mxu0 0
        %1346 = vmatmul.mubr.bf16.gmra.mrb[0].mxu0 %v1265
        %v1347 = vpop.f32.mrb[0].mxu0
        %v1348 = vadd.f32 0.0, %v1347
        %v1349 = vpop.f32.mrb[0].mxu0
        %v1350 = vpop.f32.mrb[0].mxu0
        %v1351 = vadd.f32 0.0, %v1350
        %v1352 = vpop.f32.mrb[0].mxu0
        %1353 = vmatprep.mubr.bf16.mxu0 0
        %1354 = vmatmul.mubr.bf16.gmra.mrb[0].mxu0 %v1268
        %v1355 = vpop.f32.mrb[0].mxu0
        %v1356 = vadd.f32 0.0, %v1355
        %v1357 = vpop.f32.mrb[0].mxu0
        %v1358 = vpop.f32.mrb[0].mxu0
        %v1359 = vadd.f32 0.0, %v1358
        %v1360 = vpop.f32.mrb[0].mxu0
        %1361 = vmatprep.mubr.bf16.mxu0 0
        %1362 = vmatmul.mubr.bf16.gmra.mrb[0].mxu0 %v1271
        %v1363 = vpop.f32.mrb[0].mxu0
        %v1364 = vadd.f32 0.0, %v1363
        %v1365 = vpop.f32.mrb[0].mxu0
        %v1366 = vpop.f32.mrb[0].mxu0
        %v1367 = vadd.f32 0.0, %v1366
        %v1368 = vpop.f32.mrb[0].mxu0
        %1369 = vdwg.mxu0
        %v1386 = vunpack.c.l.b16 %v986
        %v1387 = vunpack.c.l.b16 %v987
        %v1388 = vunpack.c.l.b16 %v988
        %v1389 = vunpack.c.l.b16 %v989
        %v1390 = vunpack.c.l.b16 %v990
        %v1391 = vunpack.c.l.b16 %v991
        %v1392 = vunpack.c.l.b16 %v992
        %v1393 = vunpack.c.l.b16 %v993
        %v1394 = vunpack.c.l.b16 %v994
        %v1395 = vunpack.c.l.b16 %v995
        %v1396 = vunpack.c.l.b16 %v996
        %v1397 = vunpack.c.l.b16 %v997
        %v1398 = vunpack.c.l.b16 %v998
        %v1399 = vunpack.c.l.b16 %v999
        %v1400 = vunpack.c.l.b16 %v1000
        %v1401 = vunpack.c.l.b16 %v1001
        %v1402 = vpack.c.b16 %v1387, %v1386
        %v1403 = vpack.c.b16 %v1389, %v1388
        %v1404 = vpack.c.b16 %v1391, %v1390
        %v1405 = vpack.c.b16 %v1393, %v1392
        %v1406 = vpack.c.b16 %v1395, %v1394
        %v1407 = vpack.c.b16 %v1397, %v1396
        %v1408 = vpack.c.b16 %v1399, %v1398
        %v1409 = vpack.c.b16 %v1401, %v1400
        %v1414 = vunpack.c.l.b16 %v1002
        %v1415 = vunpack.c.l.b16 %v1003
        %v1416 = vunpack.c.l.b16 %v1004
        %v1417 = vunpack.c.l.b16 %v1005
        %v1418 = vpack.c.b16 %v1415, %v1414
        %v1419 = vpack.c.b16 %v1417, %v1416
        %v1423 = vsel %vm377, %v1402, 0
        %v1426 = vsel %vm377, %v1403, 0
        %v1429 = vsel %vm377, %v1404, 0
        %v1432 = vsel %vm377, %v1405, 0
        %v1435 = vsel %vm377, %v1406, 0
        %v1438 = vsel %vm377, %v1407, 0
        %v1441 = vsel %vm377, %v1408, 0
        %v1444 = vsel %vm377, %v1409, 0
        %1446 = vmatprep.subr.bf16.mxu0 0
        %1447 = vmatpush1.bf16.msra.mxu0 %v1418
        %1448 = vmatprep.subr.bf16.mxu0 0
        %1449 = vmatpush1.bf16.msra.mxu0 %v1419
        %1450 = vmatprep.subr.bf16.mxu0 0
        %1451 = vmatpush1.bf16.msra.mxu0 0
        %1452 = vmatprep.subr.bf16.mxu0 0
        %1453 = vmatpush1.bf16.msra.mxu0 0
        %1454 = vmatprep.subr.bf16.mxu0 0
        %1455 = vmatpush1.bf16.msra.mxu0 0
        %1456 = vmatprep.subr.bf16.mxu0 0
        %1457 = vmatpush1.bf16.msra.mxu0 0
        %1458 = vmatprep.subr.bf16.mxu0 0
        %1459 = vmatpush1.bf16.msra.mxu0 0
        %1460 = vmatprep.subr.bf16.mxu0 0
        %1461 = vmatpush1.bf16.msra.mxu0 0
        %1462 = vmatprep.subr.bf16.mxu0 0
        %1463 = vmatpush1.bf16.msra.mxu0 0
        %1464 = vmatprep.subr.bf16.mxu0 0
        %1465 = vmatpush1.bf16.msra.mxu0 0
        %1466 = vmatprep.subr.bf16.mxu0 0
        %1467 = vmatpush1.bf16.msra.mxu0 0
        %1468 = vmatprep.subr.bf16.mxu0 0
        %1469 = vmatpush1.bf16.msra.mxu0 0
        %1470 = vmatprep.subr.bf16.mxu0 0
        %1471 = vmatpush1.bf16.msra.mxu0 0
        %1472 = vmatprep.subr.bf16.mxu0 0
        %1473 = vmatpush1.bf16.msra.mxu0 0
        %1474 = vmatprep.subr.bf16.mxu0 0
        %1475 = vmatpush1.bf16.msra.mxu0 0
        %1476 = vmatprep.subr.bf16.mxu0 0
        %1477 = vmatpush1.bf16.msra.mxu0 0
        %1478 = vmatprep.mubr.bf16.mxu0 0
        %1479 = vmatmul.mubr.bf16.gmra.mrb[0].mxu0 %v1423
        %v1480 = vpop.f32.mrb[0].mxu0
        %v1481 = vadd.f32 %v1308, %v1480
        %v1482 = vpop.f32.mrb[0].mxu0
        %v1483 = vpop.f32.mrb[0].mxu0
        %v1484 = vadd.f32 %v1311, %v1483
        %v1485 = vpop.f32.mrb[0].mxu0
        %1486 = vmatprep.mubr.bf16.mxu0 0
        %1487 = vmatmul.mubr.bf16.gmra.mrb[0].mxu0 %v1426
        %v1488 = vpop.f32.mrb[0].mxu0
        %v1489 = vadd.f32 %v1316, %v1488
        %v1490 = vpop.f32.mrb[0].mxu0
        %v1491 = vpop.f32.mrb[0].mxu0
        %v1492 = vadd.f32 %v1319, %v1491
        %v1493 = vpop.f32.mrb[0].mxu0
        %1494 = vmatprep.mubr.bf16.mxu0 0
        %1495 = vmatmul.mubr.bf16.gmra.mrb[0].mxu0 %v1429
        %v1496 = vpop.f32.mrb[0].mxu0
        %v1497 = vadd.f32 %v1324, %v1496
        %v1498 = vpop.f32.mrb[0].mxu0
        %v1499 = vpop.f32.mrb[0].mxu0
        %v1500 = vadd.f32 %v1327, %v1499
        %v1501 = vpop.f32.mrb[0].mxu0
        %1502 = vmatprep.mubr.bf16.mxu0 0
        %1503 = vmatmul.mubr.bf16.gmra.mrb[0].mxu0 %v1432
        %v1504 = vpop.f32.mrb[0].mxu0
        %v1505 = vadd.f32 %v1332, %v1504
        %v1506 = vpop.f32.mrb[0].mxu0
        %v1507 = vpop.f32.mrb[0].mxu0
        %v1508 = vadd.f32 %v1335, %v1507
        %v1509 = vpop.f32.mrb[0].mxu0
        %1510 = vmatprep.mubr.bf16.mxu0 0
        %1511 = vmatmul.mubr.bf16.gmra.mrb[0].mxu0 %v1435
        %v1512 = vpop.f32.mrb[0].mxu0
        %v1513 = vadd.f32 %v1340, %v1512
        %v1514 = vpop.f32.mrb[0].mxu0
        %v1515 = vpop.f32.mrb[0].mxu0
        %v1516 = vadd.f32 %v1343, %v1515
        %v1517 = vpop.f32.mrb[0].mxu0
        %1518 = vmatprep.mubr.bf16.mxu0 0
        %1519 = vmatmul.mubr.bf16.gmra.mrb[0].mxu0 %v1438
        %v1520 = vpop.f32.mrb[0].mxu0
        %v1521 = vadd.f32 %v1348, %v1520
        %v1522 = vpop.f32.mrb[0].mxu0
        %v1523 = vpop.f32.mrb[0].mxu0
        %v1524 = vadd.f32 %v1351, %v1523
        %v1525 = vpop.f32.mrb[0].mxu0
        %1526 = vmatprep.mubr.bf16.mxu0 0
        %1527 = vmatmul.mubr.bf16.gmra.mrb[0].mxu0 %v1441
        %v1528 = vpop.f32.mrb[0].mxu0
        %v1529 = vadd.f32 %v1356, %v1528
        %v1530 = vpop.f32.mrb[0].mxu0
        %v1531 = vpop.f32.mrb[0].mxu0
        %v1532 = vadd.f32 %v1359, %v1531
        %v1533 = vpop.f32.mrb[0].mxu0
        %1534 = vmatprep.mubr.bf16.mxu0 0
        %1535 = vmatmul.mubr.bf16.gmra.mrb[0].mxu0 %v1444
        %v1536 = vpop.f32.mrb[0].mxu0
        %v1537 = vadd.f32 %v1364, %v1536
        %v1538 = vpop.f32.mrb[0].mxu0
        %v1539 = vpop.f32.mrb[0].mxu0
        %v1540 = vadd.f32 %v1367, %v1539
        %v1541 = vpop.f32.mrb[0].mxu0
        %1542 = vdwg.mxu0
        %v1543 = vld [vmem:[#allocation2] sm:$0xe]
        %v1544 = vld [vmem:[#allocation2 + $0xc] sm:$0xe]
        %v1545 = vld [vmem:[#allocation2 + $0x18] sm:$0xe]
        %v1546 = vld [vmem:[#allocation2 + $0x24] sm:$0xe]
        %v1547 = vld [vmem:[#allocation2 + $0x30] sm:$0xe]
        %v1548 = vld [vmem:[#allocation2 + $0x3c] sm:$0xe]
        %v1549 = vld [vmem:[#allocation2 + $0x48] sm:$0xe]
        %v1550 = vld [vmem:[#allocation2 + $0x54] sm:$0xe]
        %vm1567 = vcmask 1042432
        %vm1568 = vcmask 1046532
        %vm1569 = vmor %vm1567, %vm1568
        %v1570 = vrot.slane %v1543, 5
        %v1571 = vrot.slane %v1570, 4
        %v1572 = vrot.slane %v987, 5
        %v1573 = vsel %vm1569, %v1571, %v1572
        %v1574 = vrot.slane %v1572, 4
        %v1575 = vrot.slane %v1006, 5
        %v1576 = vsel %vm1569, %v1574, %v1575
        %v1577 = vrot.slane %v1544, 5
        %v1578 = vrot.slane %v1577, 4
        %v1579 = vrot.slane %v989, 5
        %v1580 = vsel %vm1569, %v1578, %v1579
        %v1581 = vrot.slane %v1579, 4
        %v1582 = vrot.slane %v1007, 5
        %v1583 = vsel %vm1569, %v1581, %v1582
        %v1584 = vrot.slane %v1545, 5
        %v1585 = vrot.slane %v1584, 4
        %v1586 = vrot.slane %v991, 5
        %v1587 = vsel %vm1569, %v1585, %v1586
        %v1588 = vrot.slane %v1586, 4
        %v1589 = vrot.slane %v1008, 5
        %v1590 = vsel %vm1569, %v1588, %v1589
        %v1591 = vrot.slane %v1546, 5
        %v1592 = vrot.slane %v1591, 4
        %v1593 = vrot.slane %v993, 5
        %v1594 = vsel %vm1569, %v1592, %v1593
        %v1595 = vrot.slane %v1593, 4
        %v1596 = vrot.slane %v1009, 5
        %v1597 = vsel %vm1569, %v1595, %v1596
        %v1598 = vrot.slane %v1547, 5
        %v1599 = vrot.slane %v1598, 4
        %v1600 = vrot.slane %v995, 5
        %v1601 = vsel %vm1569, %v1599, %v1600
        %v1602 = vrot.slane %v1600, 4
        %v1603 = vrot.slane %v1010, 5
        %v1604 = vsel %vm1569, %v1602, %v1603
        %v1605 = vrot.slane %v1548, 5
        %v1606 = vrot.slane %v1605, 4
        %v1607 = vrot.slane %v997, 5
        %v1608 = vsel %vm1569, %v1606, %v1607
        %v1609 = vrot.slane %v1607, 4
        %v1610 = vrot.slane %v1011, 5
        %v1611 = vsel %vm1569, %v1609, %v1610
        %v1612 = vrot.slane %v1549, 5
        %v1613 = vrot.slane %v1612, 4
        %v1614 = vrot.slane %v999, 5
        %v1615 = vsel %vm1569, %v1613, %v1614
        %v1616 = vrot.slane %v1614, 4
        %v1617 = vrot.slane %v1012, 5
        %v1618 = vsel %vm1569, %v1616, %v1617
        %v1619 = vrot.slane %v1550, 5
        %v1620 = vrot.slane %v1619, 4
        %v1621 = vrot.slane %v1001, 5
        %v1622 = vsel %vm1569, %v1620, %v1621
        %v1623 = vrot.slane %v1621, 4
        %v1624 = vrot.slane %v1013, 5
        %v1625 = vsel %vm1569, %v1623, %v1624
        %v1626 = vld [vmem:[%s3 + $0x20] sm:$0xf]
        %v1627 = vld [vmem:[%s3 + $0x24] sm:$0xf]
        %v1628 = vld [vmem:[%s3 + $0x28] sm:$0xf]
        %v1629 = vld [vmem:[%s3 + $0x2c] sm:$0xf]
        %v1630 = vunpack.c.l.b16 %v1573
        %v1631 = vunpack.c.l.b16 %v1576
        %v1632 = vunpack.c.l.b16 %v1580
        %v1633 = vunpack.c.l.b16 %v1583
        %v1634 = vunpack.c.l.b16 %v1587
        %v1635 = vunpack.c.l.b16 %v1590
        %v1636 = vunpack.c.l.b16 %v1594
        %v1637 = vunpack.c.l.b16 %v1597
        %v1638 = vunpack.c.l.b16 %v1601
        %v1639 = vunpack.c.l.b16 %v1604
        %v1640 = vunpack.c.l.b16 %v1608
        %v1641 = vunpack.c.l.b16 %v1611
        %v1642 = vunpack.c.l.b16 %v1615
        %v1643 = vunpack.c.l.b16 %v1618
        %v1644 = vunpack.c.l.b16 %v1622
        %v1645 = vunpack.c.l.b16 %v1625
        %v1646 = vpack.c.b16 %v1631, %v1630
        %v1647 = vpack.c.b16 %v1633, %v1632
        %v1648 = vpack.c.b16 %v1635, %v1634
        %v1649 = vpack.c.b16 %v1637, %v1636
        %v1650 = vpack.c.b16 %v1639, %v1638
        %v1651 = vpack.c.b16 %v1641, %v1640
        %v1652 = vpack.c.b16 %v1643, %v1642
        %v1653 = vpack.c.b16 %v1645, %v1644
        %v1658 = vunpack.c.l.b16 %v1626
        %v1659 = vunpack.c.l.b16 %v1627
        %v1660 = vunpack.c.l.b16 %v1628
        %v1661 = vunpack.c.l.b16 %v1629
        %v1662 = vpack.c.b16 %v1659, %v1658
        %v1663 = vpack.c.b16 %v1661, %v1660
        %v1667 = vsel %vm377, %v1646, 0
        %v1670 = vsel %vm377, %v1647, 0
        %v1673 = vsel %vm377, %v1648, 0
        %v1676 = vsel %vm377, %v1649, 0
        %v1679 = vsel %vm377, %v1650, 0
        %v1682 = vsel %vm377, %v1651, 0
        %v1685 = vsel %vm377, %v1652, 0
        %v1688 = vsel %vm377, %v1653, 0
        %1690 = vmatprep.subr.bf16.mxu0 0
        %1691 = vmatpush1.bf16.msra.mxu0 %v1662
        %1692 = vmatprep.subr.bf16.mxu0 0
        %1693 = vmatpush1.bf16.msra.mxu0 %v1663
        %1694 = vmatprep.subr.bf16.mxu0 0
        %1695 = vmatpush1.bf16.msra.mxu0 0
        %1696 = vmatprep.subr.bf16.mxu0 0
        %1697 = vmatpush1.bf16.msra.mxu0 0
        %1698 = vmatprep.subr.bf16.mxu0 0
        %1699 = vmatpush1.bf16.msra.mxu0 0
        %1700 = vmatprep.subr.bf16.mxu0 0
        %1701 = vmatpush1.bf16.msra.mxu0 0
        %1702 = vmatprep.subr.bf16.mxu0 0
        %1703 = vmatpush1.bf16.msra.mxu0 0
        %1704 = vmatprep.subr.bf16.mxu0 0
        %1705 = vmatpush1.bf16.msra.mxu0 0
        %1706 = vmatprep.subr.bf16.mxu0 0
        %1707 = vmatpush1.bf16.msra.mxu0 0
        %1708 = vmatprep.subr.bf16.mxu0 0
        %1709 = vmatpush1.bf16.msra.mxu0 0
        %1710 = vmatprep.subr.bf16.mxu0 0
        %1711 = vmatpush1.bf16.msra.mxu0 0
        %1712 = vmatprep.subr.bf16.mxu0 0
        %1713 = vmatpush1.bf16.msra.mxu0 0
        %1714 = vmatprep.subr.bf16.mxu0 0
        %1715 = vmatpush1.bf16.msra.mxu0 0
        %1716 = vmatprep.subr.bf16.mxu0 0
        %1717 = vmatpush1.bf16.msra.mxu0 0
        %1718 = vmatprep.subr.bf16.mxu0 0
        %1719 = vmatpush1.bf16.msra.mxu0 0
        %1720 = vmatprep.subr.bf16.mxu0 0
        %1721 = vmatpush1.bf16.msra.mxu0 0
        %1722 = vmatprep.mubr.bf16.mxu0 0
        %1723 = vmatmul.mubr.bf16.gmra.mrb[0].mxu0 %v1667
        %v1724 = vpop.f32.mrb[0].mxu0
        %v1725 = vadd.f32 0.0, %v1724
        %v1726 = vpop.f32.mrb[0].mxu0
        %v1727 = vpop.f32.mrb[0].mxu0
        %v1728 = vadd.f32 0.0, %v1727
        %v1729 = vpop.f32.mrb[0].mxu0
        %1730 = vmatprep.mubr.bf16.mxu0 0
        %1731 = vmatmul.mubr.bf16.gmra.mrb[0].mxu0 %v1670
        %v1732 = vpop.f32.mrb[0].mxu0
        %v1733 = vadd.f32 0.0, %v1732
        %v1734 = vpop.f32.mrb[0].mxu0
        %v1735 = vpop.f32.mrb[0].mxu0
        %v1736 = vadd.f32 0.0, %v1735
        %v1737 = vpop.f32.mrb[0].mxu0
        %1738 = vmatprep.mubr.bf16.mxu0 0
        %1739 = vmatmul.mubr.bf16.gmra.mrb[0].mxu0 %v1673
        %v1740 = vpop.f32.mrb[0].mxu0
        %v1741 = vadd.f32 0.0, %v1740
        %v1742 = vpop.f32.mrb[0].mxu0
        %v1743 = vpop.f32.mrb[0].mxu0
        %v1744 = vadd.f32 0.0, %v1743
        %v1745 = vpop.f32.mrb[0].mxu0
        %1746 = vmatprep.mubr.bf16.mxu0 0
        %1747 = vmatmul.mubr.bf16.gmra.mrb[0].mxu0 %v1676
        %v1748 = vpop.f32.mrb[0].mxu0
        %v1749 = vadd.f32 0.0, %v1748
        %v1750 = vpop.f32.mrb[0].mxu0
        %v1751 = vpop.f32.mrb[0].mxu0
        %v1752 = vadd.f32 0.0, %v1751
        %v1753 = vpop.f32.mrb[0].mxu0
        %1754 = vmatprep.mubr.bf16.mxu0 0
        %1755 = vmatmul.mubr.bf16.gmra.mrb[0].mxu0 %v1679
        %v1756 = vpop.f32.mrb[0].mxu0
        %v1757 = vadd.f32 0.0, %v1756
        %v1758 = vpop.f32.mrb[0].mxu0
        %v1759 = vpop.f32.mrb[0].mxu0
        %v1760 = vadd.f32 0.0, %v1759
        %v1761 = vpop.f32.mrb[0].mxu0
        %1762 = vmatprep.mubr.bf16.mxu0 0
        %1763 = vmatmul.mubr.bf16.gmra.mrb[0].mxu0 %v1682
        %v1764 = vpop.f32.mrb[0].mxu0
        %v1765 = vadd.f32 0.0, %v1764
        %v1766 = vpop.f32.mrb[0].mxu0
        %v1767 = vpop.f32.mrb[0].mxu0
        %v1768 = vadd.f32 0.0, %v1767
        %v1769 = vpop.f32.mrb[0].mxu0
        %1770 = vmatprep.mubr.bf16.mxu0 0
        %1771 = vmatmul.mubr.bf16.gmra.mrb[0].mxu0 %v1685
        %v1772 = vpop.f32.mrb[0].mxu0
        %v1773 = vadd.f32 0.0, %v1772
        %v1774 = vpop.f32.mrb[0].mxu0
        %v1775 = vpop.f32.mrb[0].mxu0
        %v1776 = vadd.f32 0.0, %v1775
        %v1777 = vpop.f32.mrb[0].mxu0
        %1778 = vmatprep.mubr.bf16.mxu0 0
        %1779 = vmatmul.mubr.bf16.gmra.mrb[0].mxu0 %v1688
        %v1780 = vpop.f32.mrb[0].mxu0
        %v1781 = vadd.f32 0.0, %v1780
        %v1782 = vpop.f32.mrb[0].mxu0
        %v1783 = vpop.f32.mrb[0].mxu0
        %v1784 = vadd.f32 0.0, %v1783
        %v1785 = vpop.f32.mrb[0].mxu0
        %1786 = vdwg.mxu0
        %v1787 = vadd.f32 %v1481, %v1725
        %v1788 = vadd.f32 %v1484, %v1728
        %v1789 = vadd.f32 %v1489, %v1733
        %v1790 = vadd.f32 %v1492, %v1736
        %v1791 = vadd.f32 %v1497, %v1741
        %v1792 = vadd.f32 %v1500, %v1744
        %v1793 = vadd.f32 %v1505, %v1749
        %v1794 = vadd.f32 %v1508, %v1752
        %v1795 = vadd.f32 %v1513, %v1757
        %v1796 = vadd.f32 %v1516, %v1760
        %v1797 = vadd.f32 %v1521, %v1765
        %v1798 = vadd.f32 %v1524, %v1768
        %v1799 = vadd.f32 %v1529, %v1773
        %v1800 = vadd.f32 %v1532, %v1776
        %v1801 = vadd.f32 %v1537, %v1781
        %v1802 = vadd.f32 %v1540, %v1784
        %v1803 = vld [vmem:[%s929] sm:$0xf]
        %v1804 = vld [vmem:[%s929 + $0x4] sm:$0xf]
        %v1805 = vld [vmem:[%s929 + $0xc] sm:$0xf]
        %v1806 = vld [vmem:[%s929 + $0x10] sm:$0xf]
        %v1807 = vld [vmem:[%s929 + $0x18] sm:$0xf]
        %v1808 = vld [vmem:[%s929 + $0x1c] sm:$0xf]
        %v1809 = vld [vmem:[%s929 + $0x24] sm:$0xf]
        %v1810 = vld [vmem:[%s929 + $0x28] sm:$0xf]
        %v1811 = vld [vmem:[%s929 + $0x30] sm:$0xf]
        %v1812 = vld [vmem:[%s929 + $0x34] sm:$0xf]
        %v1813 = vld [vmem:[%s929 + $0x3c] sm:$0xf]
        %v1814 = vld [vmem:[%s929 + $0x40] sm:$0xf]
        %v1815 = vld [vmem:[%s929 + $0x48] sm:$0xf]
        %v1816 = vld [vmem:[%s929 + $0x4c] sm:$0xf]
        %v1817 = vld [vmem:[%s929 + $0x54] sm:$0xf]
        %v1818 = vld [vmem:[%s929 + $0x58] sm:$0xf]
        %v1819 = vld [vmem:[%s3 + $0x30] sm:$0xf]
        %v1820 = vld [vmem:[%s3 + $0x34] sm:$0xf]
        %v1821 = vld [vmem:[%s3 + $0x38] sm:$0xf]
        %v1822 = vld [vmem:[%s3 + $0x3c] sm:$0xf]
        %v1839 = vunpack.c.l.b16 %v1803
        %v1840 = vunpack.c.l.b16 %v1804
        %v1841 = vunpack.c.l.b16 %v1805
        %v1842 = vunpack.c.l.b16 %v1806
        %v1843 = vunpack.c.l.b16 %v1807
        %v1844 = vunpack.c.l.b16 %v1808
        %v1845 = vunpack.c.l.b16 %v1809
        %v1846 = vunpack.c.l.b16 %v1810
        %v1847 = vunpack.c.l.b16 %v1811
        %v1848 = vunpack.c.l.b16 %v1812
        %v1849 = vunpack.c.l.b16 %v1813
        %v1850 = vunpack.c.l.b16 %v1814
        %v1851 = vunpack.c.l.b16 %v1815
        %v1852 = vunpack.c.l.b16 %v1816
        %v1853 = vunpack.c.l.b16 %v1817
        %v1854 = vunpack.c.l.b16 %v1818
        %v1855 = vpack.c.b16 %v1840, %v1839
        %v1856 = vpack.c.b16 %v1842, %v1841
        %v1857 = vpack.c.b16 %v1844, %v1843
        %v1858 = vpack.c.b16 %v1846, %v1845
        %v1859 = vpack.c.b16 %v1848, %v1847
        %v1860 = vpack.c.b16 %v1850, %v1849
        %v1861 = vpack.c.b16 %v1852, %v1851
        %v1862 = vpack.c.b16 %v1854, %v1853
        %v1867 = vunpack.c.l.b16 %v1819
        %v1868 = vunpack.c.l.b16 %v1820
        %v1869 = vunpack.c.l.b16 %v1821
        %v1870 = vunpack.c.l.b16 %v1822
        %v1871 = vpack.c.b16 %v1868, %v1867
        %v1872 = vpack.c.b16 %v1870, %v1869
        %v1876 = vsel %vm377, %v1855, 0
        %v1879 = vsel %vm377, %v1856, 0
        %v1882 = vsel %vm377, %v1857, 0
        %v1885 = vsel %vm377, %v1858, 0
        %v1888 = vsel %vm377, %v1859, 0
        %v1891 = vsel %vm377, %v1860, 0
        %v1894 = vsel %vm377, %v1861, 0
        %v1897 = vsel %vm377, %v1862, 0
        %1899 = vmatprep.subr.bf16.mxu0 0
        %1900 = vmatpush1.bf16.msra.mxu0 %v1871
        %1901 = vmatprep.subr.bf16.mxu0 0
        %1902 = vmatpush1.bf16.msra.mxu0 %v1872
        %1903 = vmatprep.subr.bf16.mxu0 0
        %1904 = vmatpush1.bf16.msra.mxu0 0
        %1905 = vmatprep.subr.bf16.mxu0 0
        %1906 = vmatpush1.bf16.msra.mxu0 0
        %1907 = vmatprep.subr.bf16.mxu0 0
        %1908 = vmatpush1.bf16.msra.mxu0 0
        %1909 = vmatprep.subr.bf16.mxu0 0
        %1910 = vmatpush1.bf16.msra.mxu0 0
        %1911 = vmatprep.subr.bf16.mxu0 0
        %1912 = vmatpush1.bf16.msra.mxu0 0
        %1913 = vmatprep.subr.bf16.mxu0 0
        %1914 = vmatpush1.bf16.msra.mxu0 0
        %1915 = vmatprep.subr.bf16.mxu0 0
        %1916 = vmatpush1.bf16.msra.mxu0 0
        %1917 = vmatprep.subr.bf16.mxu0 0
        %1918 = vmatpush1.bf16.msra.mxu0 0
        %1919 = vmatprep.subr.bf16.mxu0 0
        %1920 = vmatpush1.bf16.msra.mxu0 0
        %1921 = vmatprep.subr.bf16.mxu0 0
        %1922 = vmatpush1.bf16.msra.mxu0 0
        %1923 = vmatprep.subr.bf16.mxu0 0
        %1924 = vmatpush1.bf16.msra.mxu0 0
        %1925 = vmatprep.subr.bf16.mxu0 0
        %1926 = vmatpush1.bf16.msra.mxu0 0
        %1927 = vmatprep.subr.bf16.mxu0 0
        %1928 = vmatpush1.bf16.msra.mxu0 0
        %1929 = vmatprep.subr.bf16.mxu0 0
        %1930 = vmatpush1.bf16.msra.mxu0 0
        %1931 = vmatprep.mubr.bf16.mxu0 0
        %1932 = vmatmul.mubr.bf16.gmra.mrb[0].mxu0 %v1876
        %v1933 = vpop.f32.mrb[0].mxu0
        %v1934 = vadd.f32 0.0, %v1933
        %v1935 = vpop.f32.mrb[0].mxu0
        %v1936 = vpop.f32.mrb[0].mxu0
        %v1937 = vadd.f32 0.0, %v1936
        %v1938 = vpop.f32.mrb[0].mxu0
        %1939 = vmatprep.mubr.bf16.mxu0 0
        %1940 = vmatmul.mubr.bf16.gmra.mrb[0].mxu0 %v1879
        %v1941 = vpop.f32.mrb[0].mxu0
        %v1942 = vadd.f32 0.0, %v1941
        %v1943 = vpop.f32.mrb[0].mxu0
        %v1944 = vpop.f32.mrb[0].mxu0
        %v1945 = vadd.f32 0.0, %v1944
        %v1946 = vpop.f32.mrb[0].mxu0
        %1947 = vmatprep.mubr.bf16.mxu0 0
        %1948 = vmatmul.mubr.bf16.gmra.mrb[0].mxu0 %v1882
        %v1949 = vpop.f32.mrb[0].mxu0
        %v1950 = vadd.f32 0.0, %v1949
        %v1951 = vpop.f32.mrb[0].mxu0
        %v1952 = vpop.f32.mrb[0].mxu0
        %v1953 = vadd.f32 0.0, %v1952
        %v1954 = vpop.f32.mrb[0].mxu0
        %1955 = vmatprep.mubr.bf16.mxu0 0
        %1956 = vmatmul.mubr.bf16.gmra.mrb[0].mxu0 %v1885
        %v1957 = vpop.f32.mrb[0].mxu0
        %v1958 = vadd.f32 0.0, %v1957
        %v1959 = vpop.f32.mrb[0].mxu0
        %v1960 = vpop.f32.mrb[0].mxu0
        %v1961 = vadd.f32 0.0, %v1960
        %v1962 = vpop.f32.mrb[0].mxu0
        %1963 = vmatprep.mubr.bf16.mxu0 0
        %1964 = vmatmul.mubr.bf16.gmra.mrb[0].mxu0 %v1888
        %v1965 = vpop.f32.mrb[0].mxu0
        %v1966 = vadd.f32 0.0, %v1965
        %v1967 = vpop.f32.mrb[0].mxu0
        %v1968 = vpop.f32.mrb[0].mxu0
        %v1969 = vadd.f32 0.0, %v1968
        %v1970 = vpop.f32.mrb[0].mxu0
        %1971 = vmatprep.mubr.bf16.mxu0 0
        %1972 = vmatmul.mubr.bf16.gmra.mrb[0].mxu0 %v1891
        %v1973 = vpop.f32.mrb[0].mxu0
        %v1974 = vadd.f32 0.0, %v1973
        %v1975 = vpop.f32.mrb[0].mxu0
        %v1976 = vpop.f32.mrb[0].mxu0
        %v1977 = vadd.f32 0.0, %v1976
        %v1978 = vpop.f32.mrb[0].mxu0
        %1979 = vmatprep.mubr.bf16.mxu0 0
        %1980 = vmatmul.mubr.bf16.gmra.mrb[0].mxu0 %v1894
        %v1981 = vpop.f32.mrb[0].mxu0
        %v1982 = vadd.f32 0.0, %v1981
        %v1983 = vpop.f32.mrb[0].mxu0
        %v1984 = vpop.f32.mrb[0].mxu0
        %v1985 = vadd.f32 0.0, %v1984
        %v1986 = vpop.f32.mrb[0].mxu0
        %1987 = vmatprep.mubr.bf16.mxu0 0
        %1988 = vmatmul.mubr.bf16.gmra.mrb[0].mxu0 %v1897
        %v1989 = vpop.f32.mrb[0].mxu0
        %v1990 = vadd.f32 0.0, %v1989
        %v1991 = vpop.f32.mrb[0].mxu0
        %v1992 = vpop.f32.mrb[0].mxu0
        %v1993 = vadd.f32 0.0, %v1992
        %v1994 = vpop.f32.mrb[0].mxu0
        %1995 = vdwg.mxu0
        %v1996 = vadd.f32 %v1787, %v1934
        %v1997 = vadd.f32 %v1788, %v1937
        %v1998 = vadd.f32 %v1789, %v1942
        %v1999 = vadd.f32 %v1790, %v1945
        %v2000 = vadd.f32 %v1791, %v1950
        %v2001 = vadd.f32 %v1792, %v1953
        %v2002 = vadd.f32 %v1793, %v1958
        %v2003 = vadd.f32 %v1794, %v1961
        %v2004 = vadd.f32 %v1795, %v1966
        %v2005 = vadd.f32 %v1796, %v1969
        %v2006 = vadd.f32 %v1797, %v1974
        %v2007 = vadd.f32 %v1798, %v1977
        %v2008 = vadd.f32 %v1799, %v1982
        %v2009 = vadd.f32 %v1800, %v1985
        %v2010 = vadd.f32 %v1801, %v1990
        %v2011 = vadd.f32 %v1802, %v1993
        %v2012 = vld [vmem:[%s929] sm:$0xf]
        %v2013 = vld [vmem:[%s929 + $0x4] sm:$0xf]
        %v2014 = vld [vmem:[%s929 + $0x8] sm:$0x1]
        %v2015 = vld [vmem:[%s929 + $0xc] sm:$0xf]
        %v2016 = vld [vmem:[%s929 + $0x10] sm:$0xf]
        %v2017 = vld [vmem:[%s929 + $0x14] sm:$0x1]
        %v2018 = vld [vmem:[%s929 + $0x18] sm:$0xf]
        %v2019 = vld [vmem:[%s929 + $0x1c] sm:$0xf]
        %v2020 = vld [vmem:[%s929 + $0x20] sm:$0x1]
        %v2021 = vld [vmem:[%s929 + $0x24] sm:$0xf]
        %v2022 = vld [vmem:[%s929 + $0x28] sm:$0xf]
        %v2023 = vld [vmem:[%s929 + $0x2c] sm:$0x1]
        %v2024 = vld [vmem:[%s929 + $0x30] sm:$0xf]
        %v2025 = vld [vmem:[%s929 + $0x34] sm:$0xf]
        %v2026 = vld [vmem:[%s929 + $0x38] sm:$0x1]
        %v2027 = vld [vmem:[%s929 + $0x3c] sm:$0xf]
        %v2028 = vld [vmem:[%s929 + $0x40] sm:$0xf]
        %v2029 = vld [vmem:[%s929 + $0x44] sm:$0x1]
        %v2030 = vld [vmem:[%s929 + $0x48] sm:$0xf]
        %v2031 = vld [vmem:[%s929 + $0x4c] sm:$0xf]
        %v2032 = vld [vmem:[%s929 + $0x50] sm:$0x1]
        %v2033 = vld [vmem:[%s929 + $0x54] sm:$0xf]
        %v2034 = vld [vmem:[%s929 + $0x58] sm:$0xf]
        %v2035 = vld [vmem:[%s929 + $0x5c] sm:$0x1]
        %v2037 = vshrl.u32 %v2012, 16
        %v2039 = vrot.slane %v2037, 4
        %v2040 = vshll.u32 %v2012, 16
        %v2042 = vrot.slane %v2040, 5
        %v2043 = vor.u32 %v2039, %v2042
        %v2044 = vrot.slane %v2043, 4
        %v2046 = vshll.u32 %v2013, 16
        %v2048 = vrot.slane %v2046, 5
        %v2049 = vsel %vm1016, %v2044, %v2048
        %v2050 = vshrl.u32 %v2013, 16
        %v2052 = vrot.slane %v2050, 4
        %v2053 = vor.u32 %v2052, %v2048
        %v2054 = vrot.slane %v2053, 4
        %v2056 = vshll.u32 %v2014, 16
        %v2058 = vrot.slane %v2056, 5
        %v2059 = vsel %vm1016, %v2054, %v2058
        %v2061 = vshrl.u32 %v2015, 16
        %v2063 = vrot.slane %v2061, 4
        %v2064 = vshll.u32 %v2015, 16
        %v2066 = vrot.slane %v2064, 5
        %v2067 = vor.u32 %v2063, %v2066
        %v2068 = vrot.slane %v2067, 4
        %v2070 = vshll.u32 %v2016, 16
        %v2072 = vrot.slane %v2070, 5
        %v2073 = vsel %vm1016, %v2068, %v2072
        %v2074 = vshrl.u32 %v2016, 16
        %v2076 = vrot.slane %v2074, 4
        %v2077 = vor.u32 %v2076, %v2072
        %v2078 = vrot.slane %v2077, 4
        %v2080 = vshll.u32 %v2017, 16
        %v2082 = vrot.slane %v2080, 5
        %v2083 = vsel %vm1016, %v2078, %v2082
        %v2085 = vshrl.u32 %v2018, 16
        %v2087 = vrot.slane %v2085, 4
        %v2088 = vshll.u32 %v2018, 16
        %v2090 = vrot.slane %v2088, 5
        %v2091 = vor.u32 %v2087, %v2090
        %v2092 = vrot.slane %v2091, 4
        %v2094 = vshll.u32 %v2019, 16
        %v2096 = vrot.slane %v2094, 5
        %v2097 = vsel %vm1016, %v2092, %v2096
        %v2098 = vshrl.u32 %v2019, 16
        %v2100 = vrot.slane %v2098, 4
        %v2101 = vor.u32 %v2100, %v2096
        %v2102 = vrot.slane %v2101, 4
        %v2104 = vshll.u32 %v2020, 16
        %v2106 = vrot.slane %v2104, 5
        %v2107 = vsel %vm1016, %v2102, %v2106
        %v2109 = vshrl.u32 %v2021, 16
        %v2111 = vrot.slane %v2109, 4
        %v2112 = vshll.u32 %v2021, 16
        %v2114 = vrot.slane %v2112, 5
        %v2115 = vor.u32 %v2111, %v2114
        %v2116 = vrot.slane %v2115, 4
        %v2118 = vshll.u32 %v2022, 16
        %v2120 = vrot.slane %v2118, 5
        %v2121 = vsel %vm1016, %v2116, %v2120
        %v2122 = vshrl.u32 %v2022, 16
        %v2124 = vrot.slane %v2122, 4
        %v2125 = vor.u32 %v2124, %v2120
        %v2126 = vrot.slane %v2125, 4
        %v2128 = vshll.u32 %v2023, 16
        %v2130 = vrot.slane %v2128, 5
        %v2131 = vsel %vm1016, %v2126, %v2130
        %v2133 = vshrl.u32 %v2024, 16
        %v2135 = vrot.slane %v2133, 4
        %v2136 = vshll.u32 %v2024, 16
        %v2138 = vrot.slane %v2136, 5
        %v2139 = vor.u32 %v2135, %v2138
        %v2140 = vrot.slane %v2139, 4
        %v2142 = vshll.u32 %v2025, 16
        %v2144 = vrot.slane %v2142, 5
        %v2145 = vsel %vm1016, %v2140, %v2144
        %v2146 = vshrl.u32 %v2025, 16
        %v2148 = vrot.slane %v2146, 4
        %v2149 = vor.u32 %v2148, %v2144
        %v2150 = vrot.slane %v2149, 4
        %v2152 = vshll.u32 %v2026, 16
        %v2154 = vrot.slane %v2152, 5
        %v2155 = vsel %vm1016, %v2150, %v2154
        %v2157 = vshrl.u32 %v2027, 16
        %v2159 = vrot.slane %v2157, 4
        %v2160 = vshll.u32 %v2027, 16
        %v2162 = vrot.slane %v2160, 5
        %v2163 = vor.u32 %v2159, %v2162
        %v2164 = vrot.slane %v2163, 4
        %v2166 = vshll.u32 %v2028, 16
        %v2168 = vrot.slane %v2166, 5
        %v2169 = vsel %vm1016, %v2164, %v2168
        %v2170 = vshrl.u32 %v2028, 16
        %v2172 = vrot.slane %v2170, 4
        %v2173 = vor.u32 %v2172, %v2168
        %v2174 = vrot.slane %v2173, 4
        %v2176 = vshll.u32 %v2029, 16
        %v2178 = vrot.slane %v2176, 5
        %v2179 = vsel %vm1016, %v2174, %v2178
        %v2181 = vshrl.u32 %v2030, 16
        %v2183 = vrot.slane %v2181, 4
        %v2184 = vshll.u32 %v2030, 16
        %v2186 = vrot.slane %v2184, 5
        %v2187 = vor.u32 %v2183, %v2186
        %v2188 = vrot.slane %v2187, 4
        %v2190 = vshll.u32 %v2031, 16
        %v2192 = vrot.slane %v2190, 5
        %v2193 = vsel %vm1016, %v2188, %v2192
        %v2194 = vshrl.u32 %v2031, 16
        %v2196 = vrot.slane %v2194, 4
        %v2197 = vor.u32 %v2196, %v2192
        %v2198 = vrot.slane %v2197, 4
        %v2200 = vshll.u32 %v2032, 16
        %v2202 = vrot.slane %v2200, 5
        %v2203 = vsel %vm1016, %v2198, %v2202
        %v2205 = vshrl.u32 %v2033, 16
        %v2207 = vrot.slane %v2205, 4
        %v2208 = vshll.u32 %v2033, 16
        %v2210 = vrot.slane %v2208, 5
        %v2211 = vor.u32 %v2207, %v2210
        %v2212 = vrot.slane %v2211, 4
        %v2214 = vshll.u32 %v2034, 16
        %v2216 = vrot.slane %v2214, 5
        %v2217 = vsel %vm1016, %v2212, %v2216
        %v2218 = vshrl.u32 %v2034, 16
        %v2220 = vrot.slane %v2218, 4
        %v2221 = vor.u32 %v2220, %v2216
        %v2222 = vrot.slane %v2221, 4
        %v2224 = vshll.u32 %v2035, 16
        %v2226 = vrot.slane %v2224, 5
        %v2227 = vsel %vm1016, %v2222, %v2226
        %v2228 = vld [vmem:[%s3 + $0x40] sm:$0xf]
        %v2229 = vld [vmem:[%s3 + $0x44] sm:$0xf]
        %v2230 = vld [vmem:[%s3 + $0x48] sm:$0xf]
        %v2231 = vld [vmem:[%s3 + $0x4c] sm:$0xf]
        %v2232 = vunpack.c.l.b16 %v2049
        %v2233 = vunpack.c.l.b16 %v2059
        %v2234 = vunpack.c.l.b16 %v2073
        %v2235 = vunpack.c.l.b16 %v2083
        %v2236 = vunpack.c.l.b16 %v2097
        %v2237 = vunpack.c.l.b16 %v2107
        %v2238 = vunpack.c.l.b16 %v2121
        %v2239 = vunpack.c.l.b16 %v2131
        %v2240 = vunpack.c.l.b16 %v2145
        %v2241 = vunpack.c.l.b16 %v2155
        %v2242 = vunpack.c.l.b16 %v2169
        %v2243 = vunpack.c.l.b16 %v2179
        %v2244 = vunpack.c.l.b16 %v2193
        %v2245 = vunpack.c.l.b16 %v2203
        %v2246 = vunpack.c.l.b16 %v2217
        %v2247 = vunpack.c.l.b16 %v2227
        %v2248 = vpack.c.b16 %v2233, %v2232
        %v2249 = vpack.c.b16 %v2235, %v2234
        %v2250 = vpack.c.b16 %v2237, %v2236
        %v2251 = vpack.c.b16 %v2239, %v2238
        %v2252 = vpack.c.b16 %v2241, %v2240
        %v2253 = vpack.c.b16 %v2243, %v2242
        %v2254 = vpack.c.b16 %v2245, %v2244
        %v2255 = vpack.c.b16 %v2247, %v2246
        %v2260 = vunpack.c.l.b16 %v2228
        %v2261 = vunpack.c.l.b16 %v2229
        %v2262 = vunpack.c.l.b16 %v2230
        %v2263 = vunpack.c.l.b16 %v2231
        %v2264 = vpack.c.b16 %v2261, %v2260
        %v2265 = vpack.c.b16 %v2263, %v2262
        %v2269 = vsel %vm377, %v2248, 0
        %v2272 = vsel %vm377, %v2249, 0
        %v2275 = vsel %vm377, %v2250, 0
        %v2278 = vsel %vm377, %v2251, 0
        %v2281 = vsel %vm377, %v2252, 0
        %v2284 = vsel %vm377, %v2253, 0
        %v2287 = vsel %vm377, %v2254, 0
        %v2290 = vsel %vm377, %v2255, 0
        %2292 = vmatprep.subr.bf16.mxu0 0
        %2293 = vmatpush1.bf16.msra.mxu0 %v2264
        %2294 = vmatprep.subr.bf16.mxu0 0
        %2295 = vmatpush1.bf16.msra.mxu0 %v2265
        %2296 = vmatprep.subr.bf16.mxu0 0
        %2297 = vmatpush1.bf16.msra.mxu0 0
        %2298 = vmatprep.subr.bf16.mxu0 0
        %2299 = vmatpush1.bf16.msra.mxu0 0
        %2300 = vmatprep.subr.bf16.mxu0 0
        %2301 = vmatpush1.bf16.msra.mxu0 0
        %2302 = vmatprep.subr.bf16.mxu0 0
        %2303 = vmatpush1.bf16.msra.mxu0 0
        %2304 = vmatprep.subr.bf16.mxu0 0
        %2305 = vmatpush1.bf16.msra.mxu0 0
        %2306 = vmatprep.subr.bf16.mxu0 0
        %2307 = vmatpush1.bf16.msra.mxu0 0
        %2308 = vmatprep.subr.bf16.mxu0 0
        %2309 = vmatpush1.bf16.msra.mxu0 0
        %2310 = vmatprep.subr.bf16.mxu0 0
        %2311 = vmatpush1.bf16.msra.mxu0 0
        %2312 = vmatprep.subr.bf16.mxu0 0
        %2313 = vmatpush1.bf16.msra.mxu0 0
        %2314 = vmatprep.subr.bf16.mxu0 0
        %2315 = vmatpush1.bf16.msra.mxu0 0
        %2316 = vmatprep.subr.bf16.mxu0 0
        %2317 = vmatpush1.bf16.msra.mxu0 0
        %2318 = vmatprep.subr.bf16.mxu0 0
        %2319 = vmatpush1.bf16.msra.mxu0 0
        %2320 = vmatprep.subr.bf16.mxu0 0
        %2321 = vmatpush1.bf16.msra.mxu0 0
        %2322 = vmatprep.subr.bf16.mxu0 0
        %2323 = vmatpush1.bf16.msra.mxu0 0
        %2324 = vmatprep.mubr.bf16.mxu0 0
        %2325 = vmatmul.mubr.bf16.gmra.mrb[0].mxu0 %v2269
        %v2326 = vpop.f32.mrb[0].mxu0
        %v2327 = vadd.f32 0.0, %v2326
        %v2328 = vpop.f32.mrb[0].mxu0
        %v2329 = vpop.f32.mrb[0].mxu0
        %v2330 = vadd.f32 0.0, %v2329
        %v2331 = vpop.f32.mrb[0].mxu0
        %2332 = vmatprep.mubr.bf16.mxu0 0
        %2333 = vmatmul.mubr.bf16.gmra.mrb[0].mxu0 %v2272
        %v2334 = vpop.f32.mrb[0].mxu0
        %v2335 = vadd.f32 0.0, %v2334
        %v2336 = vpop.f32.mrb[0].mxu0
        %v2337 = vpop.f32.mrb[0].mxu0
        %v2338 = vadd.f32 0.0, %v2337
        %v2339 = vpop.f32.mrb[0].mxu0
        %2340 = vmatprep.mubr.bf16.mxu0 0
        %2341 = vmatmul.mubr.bf16.gmra.mrb[0].mxu0 %v2275
        %v2342 = vpop.f32.mrb[0].mxu0
        %v2343 = vadd.f32 0.0, %v2342
        %v2344 = vpop.f32.mrb[0].mxu0
        %v2345 = vpop.f32.mrb[0].mxu0
        %v2346 = vadd.f32 0.0, %v2345
        %v2347 = vpop.f32.mrb[0].mxu0
        %2348 = vmatprep.mubr.bf16.mxu0 0
        %2349 = vmatmul.mubr.bf16.gmra.mrb[0].mxu0 %v2278
        %v2350 = vpop.f32.mrb[0].mxu0
        %v2351 = vadd.f32 0.0, %v2350
        %v2352 = vpop.f32.mrb[0].mxu0
        %v2353 = vpop.f32.mrb[0].mxu0
        %v2354 = vadd.f32 0.0, %v2353
        %v2355 = vpop.f32.mrb[0].mxu0
        %2356 = vmatprep.mubr.bf16.mxu0 0
        %2357 = vmatmul.mubr.bf16.gmra.mrb[0].mxu0 %v2281
        %v2358 = vpop.f32.mrb[0].mxu0
        %v2359 = vadd.f32 0.0, %v2358
        %v2360 = vpop.f32.mrb[0].mxu0
        %v2361 = vpop.f32.mrb[0].mxu0
        %v2362 = vadd.f32 0.0, %v2361
        %v2363 = vpop.f32.mrb[0].mxu0
        %2364 = vmatprep.mubr.bf16.mxu0 0
        %2365 = vmatmul.mubr.bf16.gmra.mrb[0].mxu0 %v2284
        %v2366 = vpop.f32.mrb[0].mxu0
        %v2367 = vadd.f32 0.0, %v2366
        %v2368 = vpop.f32.mrb[0].mxu0
        %v2369 = vpop.f32.mrb[0].mxu0
        %v2370 = vadd.f32 0.0, %v2369
        %v2371 = vpop.f32.mrb[0].mxu0
        %2372 = vmatprep.mubr.bf16.mxu0 0
        %2373 = vmatmul.mubr.bf16.gmra.mrb[0].mxu0 %v2287
        %v2374 = vpop.f32.mrb[0].mxu0
        %v2375 = vadd.f32 0.0, %v2374
        %v2376 = vpop.f32.mrb[0].mxu0
        %v2377 = vpop.f32.mrb[0].mxu0
        %v2378 = vadd.f32 0.0, %v2377
        %v2379 = vpop.f32.mrb[0].mxu0
        %2380 = vmatprep.mubr.bf16.mxu0 0
        %2381 = vmatmul.mubr.bf16.gmra.mrb[0].mxu0 %v2290
        %v2382 = vpop.f32.mrb[0].mxu0
        %v2383 = vadd.f32 0.0, %v2382
        %v2384 = vpop.f32.mrb[0].mxu0
        %v2385 = vpop.f32.mrb[0].mxu0
        %v2386 = vadd.f32 0.0, %v2385
        %v2387 = vpop.f32.mrb[0].mxu0
        %2388 = vdwg.mxu0
        %v2389 = vadd.f32 %v1996, %v2327
        %v2390 = vadd.f32 %v1997, %v2330
        %v2391 = vadd.f32 %v1998, %v2335
        %v2392 = vadd.f32 %v1999, %v2338
        %v2393 = vadd.f32 %v2000, %v2343
        %v2394 = vadd.f32 %v2001, %v2346
        %v2395 = vadd.f32 %v2002, %v2351
        %v2396 = vadd.f32 %v2003, %v2354
        %v2397 = vadd.f32 %v2004, %v2359
        %v2398 = vadd.f32 %v2005, %v2362
        %v2399 = vadd.f32 %v2006, %v2367
        %v2400 = vadd.f32 %v2007, %v2370
        %v2401 = vadd.f32 %v2008, %v2375
        %v2402 = vadd.f32 %v2009, %v2378
        %v2403 = vadd.f32 %v2010, %v2383
        %v2404 = vadd.f32 %v2011, %v2386
        %v2405 = vld [vmem:[%s929] sm:$0xe]
        %v2406 = vld [vmem:[%s929 + $0xc] sm:$0xe]
        %v2407 = vld [vmem:[%s929 + $0x18] sm:$0xe]
        %v2408 = vld [vmem:[%s929 + $0x24] sm:$0xe]
        %v2409 = vld [vmem:[%s929 + $0x30] sm:$0xe]
        %v2410 = vld [vmem:[%s929 + $0x3c] sm:$0xe]
        %v2411 = vld [vmem:[%s929 + $0x48] sm:$0xe]
        %v2412 = vld [vmem:[%s929 + $0x54] sm:$0xe]
        %v2437 = vrot.slane %v2405, 5
        %v2438 = vrot.slane %v2437, 4
        %v2439 = vrot.slane %v2013, 5
        %v2440 = vsel %vm1569, %v2438, %v2439
        %v2441 = vrot.slane %v2439, 4
        %v2442 = vrot.slane %v2014, 5
        %v2443 = vsel %vm1569, %v2441, %v2442
        %v2444 = vrot.slane %v2406, 5
        %v2445 = vrot.slane %v2444, 4
        %v2446 = vrot.slane %v2016, 5
        %v2447 = vsel %vm1569, %v2445, %v2446
        %v2448 = vrot.slane %v2446, 4
        %v2449 = vrot.slane %v2017, 5
        %v2450 = vsel %vm1569, %v2448, %v2449
        %v2451 = vrot.slane %v2407, 5
        %v2452 = vrot.slane %v2451, 4
        %v2453 = vrot.slane %v2019, 5
        %v2454 = vsel %vm1569, %v2452, %v2453
        %v2455 = vrot.slane %v2453, 4
        %v2456 = vrot.slane %v2020, 5
        %v2457 = vsel %vm1569, %v2455, %v2456
        %v2458 = vrot.slane %v2408, 5
        %v2459 = vrot.slane %v2458, 4
        %v2460 = vrot.slane %v2022, 5
        %v2461 = vsel %vm1569, %v2459, %v2460
        %v2462 = vrot.slane %v2460, 4
        %v2463 = vrot.slane %v2023, 5
        %v2464 = vsel %vm1569, %v2462, %v2463
        %v2465 = vrot.slane %v2409, 5
        %v2466 = vrot.slane %v2465, 4
        %v2467 = vrot.slane %v2025, 5
        %v2468 = vsel %vm1569, %v2466, %v2467
        %v2469 = vrot.slane %v2467, 4
        %v2470 = vrot.slane %v2026, 5
        %v2471 = vsel %vm1569, %v2469, %v2470
        %v2472 = vrot.slane %v2410, 5
        %v2473 = vrot.slane %v2472, 4
        %v2474 = vrot.slane %v2028, 5
        %v2475 = vsel %vm1569, %v2473, %v2474
        %v2476 = vrot.slane %v2474, 4
        %v2477 = vrot.slane %v2029, 5
        %v2478 = vsel %vm1569, %v2476, %v2477
        %v2479 = vrot.slane %v2411, 5
        %v2480 = vrot.slane %v2479, 4
        %v2481 = vrot.slane %v2031, 5
        %v2482 = vsel %vm1569, %v2480, %v2481
        %v2483 = vrot.slane %v2481, 4
        %v2484 = vrot.slane %v2032, 5
        %v2485 = vsel %vm1569, %v2483, %v2484
        %v2486 = vrot.slane %v2412, 5
        %v2487 = vrot.slane %v2486, 4
        %v2488 = vrot.slane %v2034, 5
        %v2489 = vsel %vm1569, %v2487, %v2488
        %v2490 = vrot.slane %v2488, 4
        %v2491 = vrot.slane %v2035, 5
        %v2492 = vsel %vm1569, %v2490, %v2491
        %v2493 = vld [vmem:[%s3 + $0x50] sm:$0xf]
        %v2494 = vld [vmem:[%s3 + $0x54] sm:$0xf]
        %v2495 = vld [vmem:[%s3 + $0x58] sm:$0xf]
        %v2496 = vld [vmem:[%s3 + $0x5c] sm:$0xf]
        %v2497 = vunpack.c.l.b16 %v2440
        %v2498 = vunpack.c.l.b16 %v2443
        %v2499 = vunpack.c.l.b16 %v2447
        %v2500 = vunpack.c.l.b16 %v2450
        %v2501 = vunpack.c.l.b16 %v2454
        %v2502 = vunpack.c.l.b16 %v2457
        %v2503 = vunpack.c.l.b16 %v2461
        %v2504 = vunpack.c.l.b16 %v2464
        %v2505 = vunpack.c.l.b16 %v2468
        %v2506 = vunpack.c.l.b16 %v2471
        %v2507 = vunpack.c.l.b16 %v2475
        %v2508 = vunpack.c.l.b16 %v2478
        %v2509 = vunpack.c.l.b16 %v2482
        %v2510 = vunpack.c.l.b16 %v2485
        %v2511 = vunpack.c.l.b16 %v2489
        %v2512 = vunpack.c.l.b16 %v2492
        %v2513 = vpack.c.b16 %v2498, %v2497
        %v2514 = vpack.c.b16 %v2500, %v2499
        %v2515 = vpack.c.b16 %v2502, %v2501
        %v2516 = vpack.c.b16 %v2504, %v2503
        %v2517 = vpack.c.b16 %v2506, %v2505
        %v2518 = vpack.c.b16 %v2508, %v2507
        %v2519 = vpack.c.b16 %v2510, %v2509
        %v2520 = vpack.c.b16 %v2512, %v2511
        %v2525 = vunpack.c.l.b16 %v2493
        %v2526 = vunpack.c.l.b16 %v2494
        %v2527 = vunpack.c.l.b16 %v2495
        %v2528 = vunpack.c.l.b16 %v2496
        %v2529 = vpack.c.b16 %v2526, %v2525
        %v2530 = vpack.c.b16 %v2528, %v2527
        %v2534 = vsel %vm377, %v2513, 0
        %v2537 = vsel %vm377, %v2514, 0
        %v2540 = vsel %vm377, %v2515, 0
        %v2543 = vsel %vm377, %v2516, 0
        %v2546 = vsel %vm377, %v2517, 0
        %v2549 = vsel %vm377, %v2518, 0
        %v2552 = vsel %vm377, %v2519, 0
        %v2555 = vsel %vm377, %v2520, 0
        %2557 = vmatprep.subr.bf16.mxu0 0
        %2558 = vmatpush1.bf16.msra.mxu0 %v2529
        %2559 = vmatprep.subr.bf16.mxu0 0
        %2560 = vmatpush1.bf16.msra.mxu0 %v2530
        %2561 = vmatprep.subr.bf16.mxu0 0
        %2562 = vmatpush1.bf16.msra.mxu0 0
        %2563 = vmatprep.subr.bf16.mxu0 0
        %2564 = vmatpush1.bf16.msra.mxu0 0
        %2565 = vmatprep.subr.bf16.mxu0 0
        %2566 = vmatpush1.bf16.msra.mxu0 0
        %2567 = vmatprep.subr.bf16.mxu0 0
        %2568 = vmatpush1.bf16.msra.mxu0 0
        %2569 = vmatprep.subr.bf16.mxu0 0
        %2570 = vmatpush1.bf16.msra.mxu0 0
        %2571 = vmatprep.subr.bf16.mxu0 0
        %2572 = vmatpush1.bf16.msra.mxu0 0
        %2573 = vmatprep.subr.bf16.mxu0 0
        %2574 = vmatpush1.bf16.msra.mxu0 0
        %2575 = vmatprep.subr.bf16.mxu0 0
        %2576 = vmatpush1.bf16.msra.mxu0 0
        %2577 = vmatprep.subr.bf16.mxu0 0
        %2578 = vmatpush1.bf16.msra.mxu0 0
        %2579 = vmatprep.subr.bf16.mxu0 0
        %2580 = vmatpush1.bf16.msra.mxu0 0
        %2581 = vmatprep.subr.bf16.mxu0 0
        %2582 = vmatpush1.bf16.msra.mxu0 0
        %2583 = vmatprep.subr.bf16.mxu0 0
        %2584 = vmatpush1.bf16.msra.mxu0 0
        %2585 = vmatprep.subr.bf16.mxu0 0
        %2586 = vmatpush1.bf16.msra.mxu0 0
        %2587 = vmatprep.subr.bf16.mxu0 0
        %2588 = vmatpush1.bf16.msra.mxu0 0
        %2589 = vmatprep.mubr.bf16.mxu0 0
        %2590 = vmatmul.mubr.bf16.gmra.mrb[0].mxu0 %v2534
        %v2591 = vpop.f32.mrb[0].mxu0
        %v2592 = vadd.f32 0.0, %v2591
        %v2593 = vpop.f32.mrb[0].mxu0
        %v2594 = vpop.f32.mrb[0].mxu0
        %v2595 = vadd.f32 0.0, %v2594
        %v2596 = vpop.f32.mrb[0].mxu0
        %2597 = vmatprep.mubr.bf16.mxu0 0
        %2598 = vmatmul.mubr.bf16.gmra.mrb[0].mxu0 %v2537
        %v2599 = vpop.f32.mrb[0].mxu0
        %v2600 = vadd.f32 0.0, %v2599
        %v2601 = vpop.f32.mrb[0].mxu0
        %v2602 = vpop.f32.mrb[0].mxu0
        %v2603 = vadd.f32 0.0, %v2602
        %v2604 = vpop.f32.mrb[0].mxu0
        %2605 = vmatprep.mubr.bf16.mxu0 0
        %2606 = vmatmul.mubr.bf16.gmra.mrb[0].mxu0 %v2540
        %v2607 = vpop.f32.mrb[0].mxu0
        %v2608 = vadd.f32 0.0, %v2607
        %v2609 = vpop.f32.mrb[0].mxu0
        %v2610 = vpop.f32.mrb[0].mxu0
        %v2611 = vadd.f32 0.0, %v2610
        %v2612 = vpop.f32.mrb[0].mxu0
        %2613 = vmatprep.mubr.bf16.mxu0 0
        %2614 = vmatmul.mubr.bf16.gmra.mrb[0].mxu0 %v2543
        %v2615 = vpop.f32.mrb[0].mxu0
        %v2616 = vadd.f32 0.0, %v2615
        %v2617 = vpop.f32.mrb[0].mxu0
        %v2618 = vpop.f32.mrb[0].mxu0
        %v2619 = vadd.f32 0.0, %v2618
        %v2620 = vpop.f32.mrb[0].mxu0
        %2621 = vmatprep.mubr.bf16.mxu0 0
        %2622 = vmatmul.mubr.bf16.gmra.mrb[0].mxu0 %v2546
        %v2623 = vpop.f32.mrb[0].mxu0
        %v2624 = vadd.f32 0.0, %v2623
        %v2625 = vpop.f32.mrb[0].mxu0
        %v2626 = vpop.f32.mrb[0].mxu0
        %v2627 = vadd.f32 0.0, %v2626
        %v2628 = vpop.f32.mrb[0].mxu0
        %2629 = vmatprep.mubr.bf16.mxu0 0
        %2630 = vmatmul.mubr.bf16.gmra.mrb[0].mxu0 %v2549
        %v2631 = vpop.f32.mrb[0].mxu0
        %v2632 = vadd.f32 0.0, %v2631
        %v2633 = vpop.f32.mrb[0].mxu0
        %v2634 = vpop.f32.mrb[0].mxu0
        %v2635 = vadd.f32 0.0, %v2634
        %v2636 = vpop.f32.mrb[0].mxu0
        %2637 = vmatprep.mubr.bf16.mxu0 0
        %2638 = vmatmul.mubr.bf16.gmra.mrb[0].mxu0 %v2552
        %v2639 = vpop.f32.mrb[0].mxu0
        %v2640 = vadd.f32 0.0, %v2639
        %v2641 = vpop.f32.mrb[0].mxu0
        %v2642 = vpop.f32.mrb[0].mxu0
        %v2643 = vadd.f32 0.0, %v2642
        %v2644 = vpop.f32.mrb[0].mxu0
        %2645 = vmatprep.mubr.bf16.mxu0 0
        %2646 = vmatmul.mubr.bf16.gmra.mrb[0].mxu0 %v2555
        %v2647 = vpop.f32.mrb[0].mxu0
        %v2648 = vadd.f32 0.0, %v2647
        %v2649 = vpop.f32.mrb[0].mxu0
        %v2650 = vpop.f32.mrb[0].mxu0
        %v2651 = vadd.f32 0.0, %v2650
        %v2652 = vpop.f32.mrb[0].mxu0
        %2653 = vdwg.mxu0
        %v2654 = vadd.f32 %v2389, %v2592
        %v2655 = vadd.f32 %v2390, %v2595
        %v2656 = vadd.f32 %v2391, %v2600
        %v2657 = vadd.f32 %v2392, %v2603
        %v2658 = vadd.f32 %v2393, %v2608
        %v2659 = vadd.f32 %v2394, %v2611
        %v2660 = vadd.f32 %v2395, %v2616
        %v2661 = vadd.f32 %v2396, %v2619
        %v2662 = vadd.f32 %v2397, %v2624
        %v2663 = vadd.f32 %v2398, %v2627
        %v2664 = vadd.f32 %v2399, %v2632
        %v2665 = vadd.f32 %v2400, %v2635
        %v2666 = vadd.f32 %v2401, %v2640
        %v2667 = vadd.f32 %v2402, %v2643
        %v2668 = vadd.f32 %v2403, %v2648
        %v2669 = vadd.f32 %v2404, %v2651
        %s2670 = scalar_lea.vmem [#allocation2], 24
        %v2671 = vld [vmem:[%s2670] sm:$0xf]
        %v2672 = vld [vmem:[%s2670 + $0x4] sm:$0xf]
        %v2673 = vld [vmem:[%s2670 + $0xc] sm:$0xf]
        %v2674 = vld [vmem:[%s2670 + $0x10] sm:$0xf]
        %v2675 = vld [vmem:[%s2670 + $0x18] sm:$0xf]
        %v2676 = vld [vmem:[%s2670 + $0x1c] sm:$0xf]
        %v2677 = vld [vmem:[%s2670 + $0x24] sm:$0xf]
        %v2678 = vld [vmem:[%s2670 + $0x28] sm:$0xf]
        %v2679 = vld [vmem:[%s2670 + $0x30] sm:$0xf]
        %v2680 = vld [vmem:[%s2670 + $0x34] sm:$0xf]
        %v2681 = vld [vmem:[%s2670 + $0x3c] sm:$0xf]
        %v2682 = vld [vmem:[%s2670 + $0x40] sm:$0xf]
        %v2683 = vld [vmem:[%s2670 + $0x48] sm:$0xf]
        %v2684 = vld [vmem:[%s2670 + $0x4c] sm:$0xf]
        %v2685 = vld [vmem:[%s2670 + $0x54] sm:$0xf]
        %v2686 = vld [vmem:[%s2670 + $0x58] sm:$0xf]
        %v2687 = vld [vmem:[%s3 + $0x60] sm:$0xf]
        %v2688 = vld [vmem:[%s3 + $0x64] sm:$0xf]
        %v2689 = vld [vmem:[%s3 + $0x68] sm:$0xf]
        %v2690 = vld [vmem:[%s3 + $0x6c] sm:$0xf]
        %v2707 = vunpack.c.l.b16 %v2671
        %v2708 = vunpack.c.l.b16 %v2672
        %v2709 = vunpack.c.l.b16 %v2673
        %v2710 = vunpack.c.l.b16 %v2674
        %v2711 = vunpack.c.l.b16 %v2675
        %v2712 = vunpack.c.l.b16 %v2676
        %v2713 = vunpack.c.l.b16 %v2677
        %v2714 = vunpack.c.l.b16 %v2678
        %v2715 = vunpack.c.l.b16 %v2679
        %v2716 = vunpack.c.l.b16 %v2680
        %v2717 = vunpack.c.l.b16 %v2681
        %v2718 = vunpack.c.l.b16 %v2682
        %v2719 = vunpack.c.l.b16 %v2683
        %v2720 = vunpack.c.l.b16 %v2684
        %v2721 = vunpack.c.l.b16 %v2685
        %v2722 = vunpack.c.l.b16 %v2686
        %v2723 = vpack.c.b16 %v2708, %v2707
        %v2724 = vpack.c.b16 %v2710, %v2709
        %v2725 = vpack.c.b16 %v2712, %v2711
        %v2726 = vpack.c.b16 %v2714, %v2713
        %v2727 = vpack.c.b16 %v2716, %v2715
        %v2728 = vpack.c.b16 %v2718, %v2717
        %v2729 = vpack.c.b16 %v2720, %v2719
        %v2730 = vpack.c.b16 %v2722, %v2721
        %v2735 = vunpack.c.l.b16 %v2687
        %v2736 = vunpack.c.l.b16 %v2688
        %v2737 = vunpack.c.l.b16 %v2689
        %v2738 = vunpack.c.l.b16 %v2690
        %v2739 = vpack.c.b16 %v2736, %v2735
        %v2740 = vpack.c.b16 %v2738, %v2737
        %v2744 = vsel %vm377, %v2723, 0
        %v2747 = vsel %vm377, %v2724, 0
        %v2750 = vsel %vm377, %v2725, 0
        %v2753 = vsel %vm377, %v2726, 0
        %v2756 = vsel %vm377, %v2727, 0
        %v2759 = vsel %vm377, %v2728, 0
        %v2762 = vsel %vm377, %v2729, 0
        %v2765 = vsel %vm377, %v2730, 0
        %2767 = vmatprep.subr.bf16.mxu0 0
        %2768 = vmatpush1.bf16.msra.mxu0 %v2739
        %2769 = vmatprep.subr.bf16.mxu0 0
        %2770 = vmatpush1.bf16.msra.mxu0 %v2740
        %2771 = vmatprep.subr.bf16.mxu0 0
        %2772 = vmatpush1.bf16.msra.mxu0 0
        %2773 = vmatprep.subr.bf16.mxu0 0
        %2774 = vmatpush1.bf16.msra.mxu0 0
        %2775 = vmatprep.subr.bf16.mxu0 0
        %2776 = vmatpush1.bf16.msra.mxu0 0
        %2777 = vmatprep.subr.bf16.mxu0 0
        %2778 = vmatpush1.bf16.msra.mxu0 0
        %2779 = vmatprep.subr.bf16.mxu0 0
        %2780 = vmatpush1.bf16.msra.mxu0 0
        %2781 = vmatprep.subr.bf16.mxu0 0
        %2782 = vmatpush1.bf16.msra.mxu0 0
        %2783 = vmatprep.subr.bf16.mxu0 0
        %2784 = vmatpush1.bf16.msra.mxu0 0
        %2785 = vmatprep.subr.bf16.mxu0 0
        %2786 = vmatpush1.bf16.msra.mxu0 0
        %2787 = vmatprep.subr.bf16.mxu0 0
        %2788 = vmatpush1.bf16.msra.mxu0 0
        %2789 = vmatprep.subr.bf16.mxu0 0
        %2790 = vmatpush1.bf16.msra.mxu0 0
        %2791 = vmatprep.subr.bf16.mxu0 0
        %2792 = vmatpush1.bf16.msra.mxu0 0
        %2793 = vmatprep.subr.bf16.mxu0 0
        %2794 = vmatpush1.bf16.msra.mxu0 0
        %2795 = vmatprep.subr.bf16.mxu0 0
        %2796 = vmatpush1.bf16.msra.mxu0 0
        %2797 = vmatprep.subr.bf16.mxu0 0
        %2798 = vmatpush1.bf16.msra.mxu0 0
        %2799 = vmatprep.mubr.bf16.mxu0 0
        %2800 = vmatmul.mubr.bf16.gmra.mrb[0].mxu0 %v2744
        %v2801 = vpop.f32.mrb[0].mxu0
        %v2802 = vadd.f32 0.0, %v2801
        %v2803 = vpop.f32.mrb[0].mxu0
        %v2804 = vpop.f32.mrb[0].mxu0
        %v2805 = vadd.f32 0.0, %v2804
        %v2806 = vpop.f32.mrb[0].mxu0
        %2807 = vmatprep.mubr.bf16.mxu0 0
        %2808 = vmatmul.mubr.bf16.gmra.mrb[0].mxu0 %v2747
        %v2809 = vpop.f32.mrb[0].mxu0
        %v2810 = vadd.f32 0.0, %v2809
        %v2811 = vpop.f32.mrb[0].mxu0
        %v2812 = vpop.f32.mrb[0].mxu0
        %v2813 = vadd.f32 0.0, %v2812
        %v2814 = vpop.f32.mrb[0].mxu0
        %2815 = vmatprep.mubr.bf16.mxu0 0
        %2816 = vmatmul.mubr.bf16.gmra.mrb[0].mxu0 %v2750
        %v2817 = vpop.f32.mrb[0].mxu0
        %v2818 = vadd.f32 0.0, %v2817
        %v2819 = vpop.f32.mrb[0].mxu0
        %v2820 = vpop.f32.mrb[0].mxu0
        %v2821 = vadd.f32 0.0, %v2820
        %v2822 = vpop.f32.mrb[0].mxu0
        %2823 = vmatprep.mubr.bf16.mxu0 0
        %2824 = vmatmul.mubr.bf16.gmra.mrb[0].mxu0 %v2753
        %v2825 = vpop.f32.mrb[0].mxu0
        %v2826 = vadd.f32 0.0, %v2825
        %v2827 = vpop.f32.mrb[0].mxu0
        %v2828 = vpop.f32.mrb[0].mxu0
        %v2829 = vadd.f32 0.0, %v2828
        %v2830 = vpop.f32.mrb[0].mxu0
        %2831 = vmatprep.mubr.bf16.mxu0 0
        %2832 = vmatmul.mubr.bf16.gmra.mrb[0].mxu0 %v2756
        %v2833 = vpop.f32.mrb[0].mxu0
        %v2834 = vadd.f32 0.0, %v2833
        %v2835 = vpop.f32.mrb[0].mxu0
        %v2836 = vpop.f32.mrb[0].mxu0
        %v2837 = vadd.f32 0.0, %v2836
        %v2838 = vpop.f32.mrb[0].mxu0
        %2839 = vmatprep.mubr.bf16.mxu0 0
        %2840 = vmatmul.mubr.bf16.gmra.mrb[0].mxu0 %v2759
        %v2841 = vpop.f32.mrb[0].mxu0
        %v2842 = vadd.f32 0.0, %v2841
        %v2843 = vpop.f32.mrb[0].mxu0
        %v2844 = vpop.f32.mrb[0].mxu0
        %v2845 = vadd.f32 0.0, %v2844
        %v2846 = vpop.f32.mrb[0].mxu0
        %2847 = vmatprep.mubr.bf16.mxu0 0
        %2848 = vmatmul.mubr.bf16.gmra.mrb[0].mxu0 %v2762
        %v2849 = vpop.f32.mrb[0].mxu0
        %v2850 = vadd.f32 0.0, %v2849
        %v2851 = vpop.f32.mrb[0].mxu0
        %v2852 = vpop.f32.mrb[0].mxu0
        %v2853 = vadd.f32 0.0, %v2852
        %v2854 = vpop.f32.mrb[0].mxu0
        %2855 = vmatprep.mubr.bf16.mxu0 0
        %2856 = vmatmul.mubr.bf16.gmra.mrb[0].mxu0 %v2765
        %v2857 = vpop.f32.mrb[0].mxu0
        %v2858 = vadd.f32 0.0, %v2857
        %v2859 = vpop.f32.mrb[0].mxu0
        %v2860 = vpop.f32.mrb[0].mxu0
        %v2861 = vadd.f32 0.0, %v2860
        %v2862 = vpop.f32.mrb[0].mxu0
        %2863 = vdwg.mxu0
        %v2864 = vadd.f32 %v2654, %v2802
        %v2865 = vadd.f32 %v2655, %v2805
        %v2866 = vadd.f32 %v2656, %v2810
        %v2867 = vadd.f32 %v2657, %v2813
        %v2868 = vadd.f32 %v2658, %v2818
        %v2869 = vadd.f32 %v2659, %v2821
        %v2870 = vadd.f32 %v2660, %v2826
        %v2871 = vadd.f32 %v2661, %v2829
        %v2872 = vadd.f32 %v2662, %v2834
        %v2873 = vadd.f32 %v2663, %v2837
        %v2874 = vadd.f32 %v2664, %v2842
        %v2875 = vadd.f32 %v2665, %v2845
        %v2876 = vadd.f32 %v2666, %v2850
        %v2877 = vadd.f32 %v2667, %v2853
        %v2878 = vadd.f32 %v2668, %v2858
        %v2879 = vadd.f32 %v2669, %v2861
        %v2880 = vld [vmem:[%s2670] sm:$0xf]
        %v2881 = vld [vmem:[%s2670 + $0x4] sm:$0xf]
        %v2882 = vld [vmem:[%s2670 + $0x8] sm:$0x1]
        %v2883 = vld [vmem:[%s2670 + $0xc] sm:$0xf]
        %v2884 = vld [vmem:[%s2670 + $0x10] sm:$0xf]
        %v2885 = vld [vmem:[%s2670 + $0x14] sm:$0x1]
        %v2886 = vld [vmem:[%s2670 + $0x18] sm:$0xf]
        %v2887 = vld [vmem:[%s2670 + $0x1c] sm:$0xf]
        %v2888 = vld [vmem:[%s2670 + $0x20] sm:$0x1]
        %v2889 = vld [vmem:[%s2670 + $0x24] sm:$0xf]
        %v2890 = vld [vmem:[%s2670 + $0x28] sm:$0xf]
        %v2891 = vld [vmem:[%s2670 + $0x2c] sm:$0x1]
        %v2892 = vld [vmem:[%s2670 + $0x30] sm:$0xf]
        %v2893 = vld [vmem:[%s2670 + $0x34] sm:$0xf]
        %v2894 = vld [vmem:[%s2670 + $0x38] sm:$0x1]
        %v2895 = vld [vmem:[%s2670 + $0x3c] sm:$0xf]
        %v2896 = vld [vmem:[%s2670 + $0x40] sm:$0xf]
        %v2897 = vld [vmem:[%s2670 + $0x44] sm:$0x1]
        %v2898 = vld [vmem:[%s2670 + $0x48] sm:$0xf]
        %v2899 = vld [vmem:[%s2670 + $0x4c] sm:$0xf]
        %v2900 = vld [vmem:[%s2670 + $0x50] sm:$0x1]
        %v2901 = vld [vmem:[%s2670 + $0x54] sm:$0xf]
        %v2902 = vld [vmem:[%s2670 + $0x58] sm:$0xf]
        %v2903 = vld [vmem:[%s2670 + $0x5c] sm:$0x1]
        %v2905 = vshrl.u32 %v2880, 16
        %v2907 = vrot.slane %v2905, 4
        %v2908 = vshll.u32 %v2880, 16
        %v2910 = vrot.slane %v2908, 5
        %v2911 = vor.u32 %v2907, %v2910
        %v2912 = vrot.slane %v2911, 4
        %v2914 = vshll.u32 %v2881, 16
        %v2916 = vrot.slane %v2914, 5
        %v2917 = vsel %vm1016, %v2912, %v2916
        %v2918 = vshrl.u32 %v2881, 16
        %v2920 = vrot.slane %v2918, 4
        %v2921 = vor.u32 %v2920, %v2916
        %v2922 = vrot.slane %v2921, 4
        %v2924 = vshll.u32 %v2882, 16
        %v2926 = vrot.slane %v2924, 5
        %v2927 = vsel %vm1016, %v2922, %v2926
        %v2929 = vshrl.u32 %v2883, 16
        %v2931 = vrot.slane %v2929, 4
        %v2932 = vshll.u32 %v2883, 16
        %v2934 = vrot.slane %v2932, 5
        %v2935 = vor.u32 %v2931, %v2934
        %v2936 = vrot.slane %v2935, 4
        %v2938 = vshll.u32 %v2884, 16
        %v2940 = vrot.slane %v2938, 5
        %v2941 = vsel %vm1016, %v2936, %v2940
        %v2942 = vshrl.u32 %v2884, 16
        %v2944 = vrot.slane %v2942, 4
        %v2945 = vor.u32 %v2944, %v2940
        %v2946 = vrot.slane %v2945, 4
        %v2948 = vshll.u32 %v2885, 16
        %v2950 = vrot.slane %v2948, 5
        %v2951 = vsel %vm1016, %v2946, %v2950
        %v2953 = vshrl.u32 %v2886, 16
        %v2955 = vrot.slane %v2953, 4
        %v2956 = vshll.u32 %v2886, 16
        %v2958 = vrot.slane %v2956, 5
        %v2959 = vor.u32 %v2955, %v2958
        %v2960 = vrot.slane %v2959, 4
        %v2962 = vshll.u32 %v2887, 16
        %v2964 = vrot.slane %v2962, 5
        %v2965 = vsel %vm1016, %v2960, %v2964
        %v2966 = vshrl.u32 %v2887, 16
        %v2968 = vrot.slane %v2966, 4
        %v2969 = vor.u32 %v2968, %v2964
        %v2970 = vrot.slane %v2969, 4
        %v2972 = vshll.u32 %v2888, 16
        %v2974 = vrot.slane %v2972, 5
        %v2975 = vsel %vm1016, %v2970, %v2974
        %v2977 = vshrl.u32 %v2889, 16
        %v2979 = vrot.slane %v2977, 4
        %v2980 = vshll.u32 %v2889, 16
        %v2982 = vrot.slane %v2980, 5
        %v2983 = vor.u32 %v2979, %v2982
        %v2984 = vrot.slane %v2983, 4
        %v2986 = vshll.u32 %v2890, 16
        %v2988 = vrot.slane %v2986, 5
        %v2989 = vsel %vm1016, %v2984, %v2988
        %v2990 = vshrl.u32 %v2890, 16
        %v2992 = vrot.slane %v2990, 4
        %v2993 = vor.u32 %v2992, %v2988
        %v2994 = vrot.slane %v2993, 4
        %v2996 = vshll.u32 %v2891, 16
        %v2998 = vrot.slane %v2996, 5
        %v2999 = vsel %vm1016, %v2994, %v2998
        %v3001 = vshrl.u32 %v2892, 16
        %v3003 = vrot.slane %v3001, 4
        %v3004 = vshll.u32 %v2892, 16
        %v3006 = vrot.slane %v3004, 5
        %v3007 = vor.u32 %v3003, %v3006
        %v3008 = vrot.slane %v3007, 4
        %v3010 = vshll.u32 %v2893, 16
        %v3012 = vrot.slane %v3010, 5
        %v3013 = vsel %vm1016, %v3008, %v3012
        %v3014 = vshrl.u32 %v2893, 16
        %v3016 = vrot.slane %v3014, 4
        %v3017 = vor.u32 %v3016, %v3012
        %v3018 = vrot.slane %v3017, 4
        %v3020 = vshll.u32 %v2894, 16
        %v3022 = vrot.slane %v3020, 5
        %v3023 = vsel %vm1016, %v3018, %v3022
        %v3025 = vshrl.u32 %v2895, 16
        %v3027 = vrot.slane %v3025, 4
        %v3028 = vshll.u32 %v2895, 16
        %v3030 = vrot.slane %v3028, 5
        %v3031 = vor.u32 %v3027, %v3030
        %v3032 = vrot.slane %v3031, 4
        %v3034 = vshll.u32 %v2896, 16
        %v3036 = vrot.slane %v3034, 5
        %v3037 = vsel %vm1016, %v3032, %v3036
        %v3038 = vshrl.u32 %v2896, 16
        %v3040 = vrot.slane %v3038, 4
        %v3041 = vor.u32 %v3040, %v3036
        %v3042 = vrot.slane %v3041, 4
        %v3044 = vshll.u32 %v2897, 16
        %v3046 = vrot.slane %v3044, 5
        %v3047 = vsel %vm1016, %v3042, %v3046
        %v3049 = vshrl.u32 %v2898, 16
        %v3051 = vrot.slane %v3049, 4
        %v3052 = vshll.u32 %v2898, 16
        %v3054 = vrot.slane %v3052, 5
        %v3055 = vor.u32 %v3051, %v3054
        %v3056 = vrot.slane %v3055, 4
        %v3058 = vshll.u32 %v2899, 16
        %v3060 = vrot.slane %v3058, 5
        %v3061 = vsel %vm1016, %v3056, %v3060
        %v3062 = vshrl.u32 %v2899, 16
        %v3064 = vrot.slane %v3062, 4
        %v3065 = vor.u32 %v3064, %v3060
        %v3066 = vrot.slane %v3065, 4
        %v3068 = vshll.u32 %v2900, 16
        %v3070 = vrot.slane %v3068, 5
        %v3071 = vsel %vm1016, %v3066, %v3070
        %v3073 = vshrl.u32 %v2901, 16
        %v3075 = vrot.slane %v3073, 4
        %v3076 = vshll.u32 %v2901, 16
        %v3078 = vrot.slane %v3076, 5
        %v3079 = vor.u32 %v3075, %v3078
        %v3080 = vrot.slane %v3079, 4
        %v3082 = vshll.u32 %v2902, 16
        %v3084 = vrot.slane %v3082, 5
        %v3085 = vsel %vm1016, %v3080, %v3084
        %v3086 = vshrl.u32 %v2902, 16
        %v3088 = vrot.slane %v3086, 4
        %v3089 = vor.u32 %v3088, %v3084
        %v3090 = vrot.slane %v3089, 4
        %v3092 = vshll.u32 %v2903, 16
        %v3094 = vrot.slane %v3092, 5
        %v3095 = vsel %vm1016, %v3090, %v3094
        %v3096 = vld [vmem:[%s3 + $0x70] sm:$0xf]
        %v3097 = vld [vmem:[%s3 + $0x74] sm:$0xf]
        %v3098 = vld [vmem:[%s3 + $0x78] sm:$0xf]
        %v3099 = vld [vmem:[%s3 + $0x7c] sm:$0xf]
        %v3100 = vunpack.c.l.b16 %v2917
        %v3101 = vunpack.c.l.b16 %v2927
        %v3102 = vunpack.c.l.b16 %v2941
        %v3103 = vunpack.c.l.b16 %v2951
        %v3104 = vunpack.c.l.b16 %v2965
        %v3105 = vunpack.c.l.b16 %v2975
        %v3106 = vunpack.c.l.b16 %v2989
        %v3107 = vunpack.c.l.b16 %v2999
        %v3108 = vunpack.c.l.b16 %v3013
        %v3109 = vunpack.c.l.b16 %v3023
        %v3110 = vunpack.c.l.b16 %v3037
        %v3111 = vunpack.c.l.b16 %v3047
        %v3112 = vunpack.c.l.b16 %v3061
        %v3113 = vunpack.c.l.b16 %v3071
        %v3114 = vunpack.c.l.b16 %v3085
        %v3115 = vunpack.c.l.b16 %v3095
        %v3116 = vpack.c.b16 %v3101, %v3100
        %v3117 = vpack.c.b16 %v3103, %v3102
        %v3118 = vpack.c.b16 %v3105, %v3104
        %v3119 = vpack.c.b16 %v3107, %v3106
        %v3120 = vpack.c.b16 %v3109, %v3108
        %v3121 = vpack.c.b16 %v3111, %v3110
        %v3122 = vpack.c.b16 %v3113, %v3112
        %v3123 = vpack.c.b16 %v3115, %v3114
        %v3128 = vunpack.c.l.b16 %v3096
        %v3129 = vunpack.c.l.b16 %v3097
        %v3130 = vunpack.c.l.b16 %v3098
        %v3131 = vunpack.c.l.b16 %v3099
        %v3132 = vpack.c.b16 %v3129, %v3128
        %v3133 = vpack.c.b16 %v3131, %v3130
        %v3137 = vsel %vm377, %v3116, 0
        %v3140 = vsel %vm377, %v3117, 0
        %v3143 = vsel %vm377, %v3118, 0
        %v3146 = vsel %vm377, %v3119, 0
        %v3149 = vsel %vm377, %v3120, 0
        %v3152 = vsel %vm377, %v3121, 0
        %v3155 = vsel %vm377, %v3122, 0
        %v3158 = vsel %vm377, %v3123, 0
        %3160 = vmatprep.subr.bf16.mxu0 0
        %3161 = vmatpush1.bf16.msra.mxu0 %v3132
        %3162 = vmatprep.subr.bf16.mxu0 0
        %3163 = vmatpush1.bf16.msra.mxu0 %v3133
        %3164 = vmatprep.subr.bf16.mxu0 0
        %3165 = vmatpush1.bf16.msra.mxu0 0
        %3166 = vmatprep.subr.bf16.mxu0 0
        %3167 = vmatpush1.bf16.msra.mxu0 0
        %3168 = vmatprep.subr.bf16.mxu0 0
        %3169 = vmatpush1.bf16.msra.mxu0 0
        %3170 = vmatprep.subr.bf16.mxu0 0
        %3171 = vmatpush1.bf16.msra.mxu0 0
        %3172 = vmatprep.subr.bf16.mxu0 0
        %3173 = vmatpush1.bf16.msra.mxu0 0
        %3174 = vmatprep.subr.bf16.mxu0 0
        %3175 = vmatpush1.bf16.msra.mxu0 0
        %3176 = vmatprep.subr.bf16.mxu0 0
        %3177 = vmatpush1.bf16.msra.mxu0 0
        %3178 = vmatprep.subr.bf16.mxu0 0
        %3179 = vmatpush1.bf16.msra.mxu0 0
        %3180 = vmatprep.subr.bf16.mxu0 0
        %3181 = vmatpush1.bf16.msra.mxu0 0
        %3182 = vmatprep.subr.bf16.mxu0 0
        %3183 = vmatpush1.bf16.msra.mxu0 0
        %3184 = vmatprep.subr.bf16.mxu0 0
        %3185 = vmatpush1.bf16.msra.mxu0 0
        %3186 = vmatprep.subr.bf16.mxu0 0
        %3187 = vmatpush1.bf16.msra.mxu0 0
        %3188 = vmatprep.subr.bf16.mxu0 0
        %3189 = vmatpush1.bf16.msra.mxu0 0
        %3190 = vmatprep.subr.bf16.mxu0 0
        %3191 = vmatpush1.bf16.msra.mxu0 0
        %3192 = vmatprep.mubr.bf16.mxu0 0
        %3193 = vmatmul.mubr.bf16.gmra.mrb[0].mxu0 %v3137
        %v3194 = vpop.f32.mrb[0].mxu0
        %v3195 = vadd.f32 0.0, %v3194
        %v3196 = vpop.f32.mrb[0].mxu0
        %v3197 = vpop.f32.mrb[0].mxu0
        %v3198 = vadd.f32 0.0, %v3197
        %v3199 = vpop.f32.mrb[0].mxu0
        %3200 = vmatprep.mubr.bf16.mxu0 0
        %3201 = vmatmul.mubr.bf16.gmra.mrb[0].mxu0 %v3140
        %v3202 = vpop.f32.mrb[0].mxu0
        %v3203 = vadd.f32 0.0, %v3202
        %v3204 = vpop.f32.mrb[0].mxu0
        %v3205 = vpop.f32.mrb[0].mxu0
        %v3206 = vadd.f32 0.0, %v3205
        %v3207 = vpop.f32.mrb[0].mxu0
        %3208 = vmatprep.mubr.bf16.mxu0 0
        %3209 = vmatmul.mubr.bf16.gmra.mrb[0].mxu0 %v3143
        %v3210 = vpop.f32.mrb[0].mxu0
        %v3211 = vadd.f32 0.0, %v3210
        %v3212 = vpop.f32.mrb[0].mxu0
        %v3213 = vpop.f32.mrb[0].mxu0
        %v3214 = vadd.f32 0.0, %v3213
        %v3215 = vpop.f32.mrb[0].mxu0
        %3216 = vmatprep.mubr.bf16.mxu0 0
        %3217 = vmatmul.mubr.bf16.gmra.mrb[0].mxu0 %v3146
        %v3218 = vpop.f32.mrb[0].mxu0
        %v3219 = vadd.f32 0.0, %v3218
        %v3220 = vpop.f32.mrb[0].mxu0
        %v3221 = vpop.f32.mrb[0].mxu0
        %v3222 = vadd.f32 0.0, %v3221
        %v3223 = vpop.f32.mrb[0].mxu0
        %3224 = vmatprep.mubr.bf16.mxu0 0
        %3225 = vmatmul.mubr.bf16.gmra.mrb[0].mxu0 %v3149
        %v3226 = vpop.f32.mrb[0].mxu0
        %v3227 = vadd.f32 0.0, %v3226
        %v3228 = vpop.f32.mrb[0].mxu0
        %v3229 = vpop.f32.mrb[0].mxu0
        %v3230 = vadd.f32 0.0, %v3229
        %v3231 = vpop.f32.mrb[0].mxu0
        %3232 = vmatprep.mubr.bf16.mxu0 0
        %3233 = vmatmul.mubr.bf16.gmra.mrb[0].mxu0 %v3152
        %v3234 = vpop.f32.mrb[0].mxu0
        %v3235 = vadd.f32 0.0, %v3234
        %v3236 = vpop.f32.mrb[0].mxu0
        %v3237 = vpop.f32.mrb[0].mxu0
        %v3238 = vadd.f32 0.0, %v3237
        %v3239 = vpop.f32.mrb[0].mxu0
        %3240 = vmatprep.mubr.bf16.mxu0 0
        %3241 = vmatmul.mubr.bf16.gmra.mrb[0].mxu0 %v3155
        %v3242 = vpop.f32.mrb[0].mxu0
        %v3243 = vadd.f32 0.0, %v3242
        %v3244 = vpop.f32.mrb[0].mxu0
        %v3245 = vpop.f32.mrb[0].mxu0
        %v3246 = vadd.f32 0.0, %v3245
        %v3247 = vpop.f32.mrb[0].mxu0
        %3248 = vmatprep.mubr.bf16.mxu0 0
        %3249 = vmatmul.mubr.bf16.gmra.mrb[0].mxu0 %v3158
        %v3250 = vpop.f32.mrb[0].mxu0
        %v3251 = vadd.f32 0.0, %v3250
        %v3252 = vpop.f32.mrb[0].mxu0
        %v3253 = vpop.f32.mrb[0].mxu0
        %v3254 = vadd.f32 0.0, %v3253
        %v3255 = vpop.f32.mrb[0].mxu0
        %3256 = vdwg.mxu0
        %v3257 = vadd.f32 %v2864, %v3195
        %v3258 = vadd.f32 %v2865, %v3198
        %v3259 = vadd.f32 %v2866, %v3203
        %v3260 = vadd.f32 %v2867, %v3206
        %v3261 = vadd.f32 %v2868, %v3211
        %v3262 = vadd.f32 %v2869, %v3214
        %v3263 = vadd.f32 %v2870, %v3219
        %v3264 = vadd.f32 %v2871, %v3222
        %v3265 = vadd.f32 %v2872, %v3227
        %v3266 = vadd.f32 %v2873, %v3230
        %v3267 = vadd.f32 %v2874, %v3235
        %v3268 = vadd.f32 %v2875, %v3238
        %v3269 = vadd.f32 %v2876, %v3243
        %v3270 = vadd.f32 %v2877, %v3246
        %v3271 = vadd.f32 %v2878, %v3251
        %v3272 = vadd.f32 %v2879, %v3254
        %v3273 = vld [vmem:[%s2670] sm:$0xe]
        %v3274 = vld [vmem:[%s2670 + $0xc] sm:$0xe]
        %v3275 = vld [vmem:[%s2670 + $0x18] sm:$0xe]
        %v3276 = vld [vmem:[%s2670 + $0x24] sm:$0xe]
        %v3277 = vld [vmem:[%s2670 + $0x30] sm:$0xe]
        %v3278 = vld [vmem:[%s2670 + $0x3c] sm:$0xe]
        %v3279 = vld [vmem:[%s2670 + $0x48] sm:$0xe]
        %v3280 = vld [vmem:[%s2670 + $0x54] sm:$0xe]
        %v3305 = vrot.slane %v3273, 5
        %v3306 = vrot.slane %v3305, 4
        %v3307 = vrot.slane %v2881, 5
        %v3308 = vsel %vm1569, %v3306, %v3307
        %v3309 = vrot.slane %v3307, 4
        %v3310 = vrot.slane %v2882, 5
        %v3311 = vsel %vm1569, %v3309, %v3310
        %v3312 = vrot.slane %v3274, 5
        %v3313 = vrot.slane %v3312, 4
        %v3314 = vrot.slane %v2884, 5
        %v3315 = vsel %vm1569, %v3313, %v3314
        %v3316 = vrot.slane %v3314, 4
        %v3317 = vrot.slane %v2885, 5
        %v3318 = vsel %vm1569, %v3316, %v3317
        %v3319 = vrot.slane %v3275, 5
        %v3320 = vrot.slane %v3319, 4
        %v3321 = vrot.slane %v2887, 5
        %v3322 = vsel %vm1569, %v3320, %v3321
        %v3323 = vrot.slane %v3321, 4
        %v3324 = vrot.slane %v2888, 5
        %v3325 = vsel %vm1569, %v3323, %v3324
        %v3326 = vrot.slane %v3276, 5
        %v3327 = vrot.slane %v3326, 4
        %v3328 = vrot.slane %v2890, 5
        %v3329 = vsel %vm1569, %v3327, %v3328
        %v3330 = vrot.slane %v3328, 4
        %v3331 = vrot.slane %v2891, 5
        %v3332 = vsel %vm1569, %v3330, %v3331
        %v3333 = vrot.slane %v3277, 5
        %v3334 = vrot.slane %v3333, 4
        %v3335 = vrot.slane %v2893, 5
        %v3336 = vsel %vm1569, %v3334, %v3335
        %v3337 = vrot.slane %v3335, 4
        %v3338 = vrot.slane %v2894, 5
        %v3339 = vsel %vm1569, %v3337, %v3338
        %v3340 = vrot.slane %v3278, 5
        %v3341 = vrot.slane %v3340, 4
        %v3342 = vrot.slane %v2896, 5
        %v3343 = vsel %vm1569, %v3341, %v3342
        %v3344 = vrot.slane %v3342, 4
        %v3345 = vrot.slane %v2897, 5
        %v3346 = vsel %vm1569, %v3344, %v3345
        %v3347 = vrot.slane %v3279, 5
        %v3348 = vrot.slane %v3347, 4
        %v3349 = vrot.slane %v2899, 5
        %v3350 = vsel %vm1569, %v3348, %v3349
        %v3351 = vrot.slane %v3349, 4
        %v3352 = vrot.slane %v2900, 5
        %v3353 = vsel %vm1569, %v3351, %v3352
        %v3354 = vrot.slane %v3280, 5
        %v3355 = vrot.slane %v3354, 4
        %v3356 = vrot.slane %v2902, 5
        %v3357 = vsel %vm1569, %v3355, %v3356
        %v3358 = vrot.slane %v3356, 4
        %v3359 = vrot.slane %v2903, 5
        %v3360 = vsel %vm1569, %v3358, %v3359
        %v3361 = vld [vmem:[%s3 + $0x80] sm:$0xf]
        %v3362 = vld [vmem:[%s3 + $0x84] sm:$0xf]
        %v3363 = vld [vmem:[%s3 + $0x88] sm:$0xf]
        %v3364 = vld [vmem:[%s3 + $0x8c] sm:$0xf]
        %v3365 = vunpack.c.l.b16 %v3308
        %v3366 = vunpack.c.l.b16 %v3311
        %v3367 = vunpack.c.l.b16 %v3315
        %v3368 = vunpack.c.l.b16 %v3318
        %v3369 = vunpack.c.l.b16 %v3322
        %v3370 = vunpack.c.l.b16 %v3325
        %v3371 = vunpack.c.l.b16 %v3329
        %v3372 = vunpack.c.l.b16 %v3332
        %v3373 = vunpack.c.l.b16 %v3336
        %v3374 = vunpack.c.l.b16 %v3339
        %v3375 = vunpack.c.l.b16 %v3343
        %v3376 = vunpack.c.l.b16 %v3346
        %v3377 = vunpack.c.l.b16 %v3350
        %v3378 = vunpack.c.l.b16 %v3353
        %v3379 = vunpack.c.l.b16 %v3357
        %v3380 = vunpack.c.l.b16 %v3360
        %v3381 = vpack.c.b16 %v3366, %v3365
        %v3382 = vpack.c.b16 %v3368, %v3367
        %v3383 = vpack.c.b16 %v3370, %v3369
        %v3384 = vpack.c.b16 %v3372, %v3371
        %v3385 = vpack.c.b16 %v3374, %v3373
        %v3386 = vpack.c.b16 %v3376, %v3375
        %v3387 = vpack.c.b16 %v3378, %v3377
        %v3388 = vpack.c.b16 %v3380, %v3379
        %v3393 = vunpack.c.l.b16 %v3361
        %v3394 = vunpack.c.l.b16 %v3362
        %v3395 = vunpack.c.l.b16 %v3363
        %v3396 = vunpack.c.l.b16 %v3364
        %v3397 = vpack.c.b16 %v3394, %v3393
        %v3398 = vpack.c.b16 %v3396, %v3395
        %v3402 = vsel %vm377, %v3381, 0
        %v3405 = vsel %vm377, %v3382, 0
        %v3408 = vsel %vm377, %v3383, 0
        %v3411 = vsel %vm377, %v3384, 0
        %v3414 = vsel %vm377, %v3385, 0
        %v3417 = vsel %vm377, %v3386, 0
        %v3420 = vsel %vm377, %v3387, 0
        %v3423 = vsel %vm377, %v3388, 0
        %3425 = vmatprep.subr.bf16.mxu0 0
        %3426 = vmatpush1.bf16.msra.mxu0 %v3397
        %3427 = vmatprep.subr.bf16.mxu0 0
        %3428 = vmatpush1.bf16.msra.mxu0 %v3398
        %3429 = vmatprep.subr.bf16.mxu0 0
        %3430 = vmatpush1.bf16.msra.mxu0 0
        %3431 = vmatprep.subr.bf16.mxu0 0
        %3432 = vmatpush1.bf16.msra.mxu0 0
        %3433 = vmatprep.subr.bf16.mxu0 0
        %3434 = vmatpush1.bf16.msra.mxu0 0
        %3435 = vmatprep.subr.bf16.mxu0 0
        %3436 = vmatpush1.bf16.msra.mxu0 0
        %3437 = vmatprep.subr.bf16.mxu0 0
        %3438 = vmatpush1.bf16.msra.mxu0 0
        %3439 = vmatprep.subr.bf16.mxu0 0
        %3440 = vmatpush1.bf16.msra.mxu0 0
        %3441 = vmatprep.subr.bf16.mxu0 0
        %3442 = vmatpush1.bf16.msra.mxu0 0
        %3443 = vmatprep.subr.bf16.mxu0 0
        %3444 = vmatpush1.bf16.msra.mxu0 0
        %3445 = vmatprep.subr.bf16.mxu0 0
        %3446 = vmatpush1.bf16.msra.mxu0 0
        %3447 = vmatprep.subr.bf16.mxu0 0
        %3448 = vmatpush1.bf16.msra.mxu0 0
        %3449 = vmatprep.subr.bf16.mxu0 0
        %3450 = vmatpush1.bf16.msra.mxu0 0
        %3451 = vmatprep.subr.bf16.mxu0 0
        %3452 = vmatpush1.bf16.msra.mxu0 0
        %3453 = vmatprep.subr.bf16.mxu0 0
        %3454 = vmatpush1.bf16.msra.mxu0 0
        %3455 = vmatprep.subr.bf16.mxu0 0
        %3456 = vmatpush1.bf16.msra.mxu0 0
        %3457 = vmatprep.mubr.bf16.mxu0 0
        %3458 = vmatmul.mubr.bf16.gmra.mrb[0].mxu0 %v3402
        %v3459 = vpop.f32.mrb[0].mxu0
        %v3460 = vadd.f32 0.0, %v3459
        %v3461 = vpop.f32.mrb[0].mxu0
        %v3462 = vpop.f32.mrb[0].mxu0
        %v3463 = vadd.f32 0.0, %v3462
        %v3464 = vpop.f32.mrb[0].mxu0
        %3465 = vmatprep.mubr.bf16.mxu0 0
        %3466 = vmatmul.mubr.bf16.gmra.mrb[0].mxu0 %v3405
        %v3467 = vpop.f32.mrb[0].mxu0
        %v3468 = vadd.f32 0.0, %v3467
        %v3469 = vpop.f32.mrb[0].mxu0
        %v3470 = vpop.f32.mrb[0].mxu0
        %v3471 = vadd.f32 0.0, %v3470
        %v3472 = vpop.f32.mrb[0].mxu0
        %3473 = vmatprep.mubr.bf16.mxu0 0
        %3474 = vmatmul.mubr.bf16.gmra.mrb[0].mxu0 %v3408
        %v3475 = vpop.f32.mrb[0].mxu0
        %v3476 = vadd.f32 0.0, %v3475
        %v3477 = vpop.f32.mrb[0].mxu0
        %v3478 = vpop.f32.mrb[0].mxu0
        %v3479 = vadd.f32 0.0, %v3478
        %v3480 = vpop.f32.mrb[0].mxu0
        %3481 = vmatprep.mubr.bf16.mxu0 0
        %3482 = vmatmul.mubr.bf16.gmra.mrb[0].mxu0 %v3411
        %v3483 = vpop.f32.mrb[0].mxu0
        %v3484 = vadd.f32 0.0, %v3483
        %v3485 = vpop.f32.mrb[0].mxu0
        %v3486 = vpop.f32.mrb[0].mxu0
        %v3487 = vadd.f32 0.0, %v3486
        %v3488 = vpop.f32.mrb[0].mxu0
        %3489 = vmatprep.mubr.bf16.mxu0 0
        %3490 = vmatmul.mubr.bf16.gmra.mrb[0].mxu0 %v3414
        %v3491 = vpop.f32.mrb[0].mxu0
        %v3492 = vadd.f32 0.0, %v3491
        %v3493 = vpop.f32.mrb[0].mxu0
        %v3494 = vpop.f32.mrb[0].mxu0
        %v3495 = vadd.f32 0.0, %v3494
        %v3496 = vpop.f32.mrb[0].mxu0
        %3497 = vmatprep.mubr.bf16.mxu0 0
        %3498 = vmatmul.mubr.bf16.gmra.mrb[0].mxu0 %v3417
        %v3499 = vpop.f32.mrb[0].mxu0
        %v3500 = vadd.f32 0.0, %v3499
        %v3501 = vpop.f32.mrb[0].mxu0
        %v3502 = vpop.f32.mrb[0].mxu0
        %v3503 = vadd.f32 0.0, %v3502
        %v3504 = vpop.f32.mrb[0].mxu0
        %3505 = vmatprep.mubr.bf16.mxu0 0
        %3506 = vmatmul.mubr.bf16.gmra.mrb[0].mxu0 %v3420
        %v3507 = vpop.f32.mrb[0].mxu0
        %v3508 = vadd.f32 0.0, %v3507
        %v3509 = vpop.f32.mrb[0].mxu0
        %v3510 = vpop.f32.mrb[0].mxu0
        %v3511 = vadd.f32 0.0, %v3510
        %v3512 = vpop.f32.mrb[0].mxu0
        %3513 = vmatprep.mubr.bf16.mxu0 0
        %3514 = vmatmul.mubr.bf16.gmra.mrb[0].mxu0 %v3423
        %v3515 = vpop.f32.mrb[0].mxu0
        %v3516 = vadd.f32 0.0, %v3515
        %v3517 = vpop.f32.mrb[0].mxu0
        %v3518 = vpop.f32.mrb[0].mxu0
        %v3519 = vadd.f32 0.0, %v3518
        %v3520 = vpop.f32.mrb[0].mxu0
        %3521 = vdwg.mxu0
        %v3522 = vadd.f32 %v3257, %v3460
        %v3523 = vadd.f32 %v3258, %v3463
        %v3524 = vadd.f32 %v3259, %v3468
        %v3525 = vadd.f32 %v3260, %v3471
        %v3526 = vadd.f32 %v3261, %v3476
        %v3527 = vadd.f32 %v3262, %v3479
        %v3528 = vadd.f32 %v3263, %v3484
        %v3529 = vadd.f32 %v3264, %v3487
        %v3530 = vadd.f32 %v3265, %v3492
        %v3531 = vadd.f32 %v3266, %v3495
        %v3532 = vadd.f32 %v3267, %v3500
        %v3533 = vadd.f32 %v3268, %v3503
        %v3534 = vadd.f32 %v3269, %v3508
        %v3535 = vadd.f32 %v3270, %v3511
        %v3536 = vadd.f32 %v3271, %v3516
        %v3537 = vadd.f32 %v3272, %v3519
        %v3538 = vld [vmem:[%s5] sm:$0x1]
        %v3540 = vlaneseq
        %v3541 = vshrl.u32 %v3540, 7
        %v3542 = vsub.s32 0, %v3541
        %v3543 = vrot.slane %v3538, %v3542
        %v3545 = vadd.f32 %v3522, %v3543
        %v3546 = vadd.f32 %v3523, %v3543
        %v3547 = vadd.f32 %v3524, %v3543
        %v3548 = vadd.f32 %v3525, %v3543
        %v3549 = vadd.f32 %v3526, %v3543
        %v3550 = vadd.f32 %v3527, %v3543
        %v3551 = vadd.f32 %v3528, %v3543
        %v3552 = vadd.f32 %v3529, %v3543
        %v3553 = vadd.f32 %v3530, %v3543
        %v3554 = vadd.f32 %v3531, %v3543
        %v3555 = vadd.f32 %v3532, %v3543
        %v3556 = vadd.f32 %v3533, %v3543
        %v3557 = vadd.f32 %v3534, %v3543
        %v3558 = vadd.f32 %v3535, %v3543
        %v3559 = vadd.f32 %v3536, %v3543
        %v3560 = vadd.f32 %v3537, %v3543
        %v3561 = vadd.f32 %v3545, %v326
        %v3562 = vadd.f32 %v3546, %v327
        %v3563 = vadd.f32 %v3547, %v328
        %v3564 = vadd.f32 %v3548, %v329
        %v3565 = vadd.f32 %v3549, %v330
        %v3566 = vadd.f32 %v3550, %v331
        %v3567 = vadd.f32 %v3551, %v332
        %v3568 = vadd.f32 %v3552, %v333
        %v3569 = vadd.f32 %v3553, %v334
        %v3570 = vadd.f32 %v3554, %v335
        %v3571 = vadd.f32 %v3555, %v336
        %v3572 = vadd.f32 %v3556, %v337
        %v3573 = vadd.f32 %v3557, %v338
        %v3574 = vadd.f32 %v3558, %v339
        %v3575 = vadd.f32 %v3559, %v340
        %v3576 = vadd.f32 %v3560, %v341
        %v3577 = vmax.f32 %v3561, 0.0
        %v3578 = vmax.f32 %v3562, 0.0
        %v3579 = vmax.f32 %v3563, 0.0
        %v3580 = vmax.f32 %v3564, 0.0
        %v3581 = vmax.f32 %v3565, 0.0
        %v3582 = vmax.f32 %v3566, 0.0
        %v3583 = vmax.f32 %v3567, 0.0
        %v3584 = vmax.f32 %v3568, 0.0
        %v3585 = vmax.f32 %v3569, 0.0
        %v3586 = vmax.f32 %v3570, 0.0
        %v3587 = vmax.f32 %v3571, 0.0
        %v3588 = vmax.f32 %v3572, 0.0
        %v3589 = vmax.f32 %v3573, 0.0
        %v3590 = vmax.f32 %v3574, 0.0
        %v3591 = vmax.f32 %v3575, 0.0
        %v3592 = vmax.f32 %v3576, 0.0
        %3593 = vst.msk [vmem:[%s299] sm:$0xff] %vm377, %v3577
        %3594 = vst.msk [vmem:[%s299 + $0x8] sm:$0xff] %vm377, %v3578
        %3595 = vst.msk [vmem:[%s299 + $0x10] sm:$0xff] %vm377, %v3579
        %3596 = vst.msk [vmem:[%s299 + $0x18] sm:$0xff] %vm377, %v3580
        %3597 = vst.msk [vmem:[%s299 + $0x20] sm:$0xff] %vm377, %v3581
        %3598 = vst.msk [vmem:[%s299 + $0x28] sm:$0xff] %vm377, %v3582
        %3599 = vst.msk [vmem:[%s299 + $0x30] sm:$0xff] %vm377, %v3583
        %3600 = vst.msk [vmem:[%s299 + $0x38] sm:$0xff] %vm377, %v3584
        %3601 = vst.msk [vmem:[%s299 + $0x40] sm:$0xff] %vm377, %v3585
        %3602 = vst.msk [vmem:[%s299 + $0x48] sm:$0xff] %vm377, %v3586
        %3603 = vst.msk [vmem:[%s299 + $0x50] sm:$0xff] %vm377, %v3587
        %3604 = vst.msk [vmem:[%s299 + $0x58] sm:$0xff] %vm377, %v3588
        %3605 = vst.msk [vmem:[%s299 + $0x60] sm:$0xff] %vm377, %v3589
        %3606 = vst.msk [vmem:[%s299 + $0x68] sm:$0xff] %vm377, %v3590
        %3607 = vst.msk [vmem:[%s299 + $0x70] sm:$0xff] %vm377, %v3591
        %3608 = vst.msk [vmem:[%s299 + $0x78] sm:$0xff] %vm377, %v3592
        %s3609 = sand.u32 %s182, 1
        %s3610 = scalar_lea.sflag [#allocation4], %s3609
        %s3611 = sand.u32 %s182, 1
        %s3612 = smul.addr %s3611, 128
        %s3613 = scalar_lea.vmem [#allocation3], %s3612
        // Predicated region
        $region45: #{up_basic_block_nhwc.1} parent=43 // pred_check
          %p3614 = pneg %p192
        $region46: #{up_basic_block_nhwc.1} parent=43 // pred_check_branch
          %3616 = sbr.rel (%p3614) target = $region48
        $region47: #{up_basic_block_nhwc.1} parent=43 // pred_region
          %s3617 = smul.u32 8, %s25
          %s3619 = ssub.s32 2048, 2048
          %3620 = vsyncadd %s3610, %s3619
          %s3621 = smul.addr %s3617, 2
          %s3622 = smul.addr %s24, 32
          %s3623 = sadd.s32 %s3621, %s3622
          %s3624 = smul.addr %s3623, 128
          %s3625 = scalar_lea.hbm %s6, %s3624
          %s3626 = sshll.u32 %s3613, 4
          %s3627 = int_to_ptr.vmem [resolvable:$true] %s3626
          %3632 = dma.vmem_to_hbm [thread:$0]  %s3627, 2048, %s3625, %s3610, 128, 128, 8
        $region48: #{up_basic_block_nhwc.1} parent=43 // pred_fallthru
          _
      $region44: #{up_basic_block_nhwc.1} parent=5 // pred_fallthru
        _
      %p3633 = scmp.le.s32.totalorder 2, %s15
      // Predicated region
      $region49: #{up_basic_block_nhwc.1} parent=5 // pred_check
        %p3634 = pneg %p3633
      $region50: #{up_basic_block_nhwc.1} parent=5 // pred_check_branch
        %3636 = sbr.rel (%p3634) target = $region52
      $region51: #{up_basic_block_nhwc.1} parent=5 // pred_region
        %s3637 = ssub.s32 %s15, 2
        // Predicated region
        $region53: #{up_basic_block_nhwc.1} parent=51 // pred_check
          %p3638 = pneg %p198
        $region54: #{up_basic_block_nhwc.1} parent=51 // pred_check_branch
          %3640 = sbr.rel (%p3638) target = $region56
        $region55: #{up_basic_block_nhwc.1} parent=51 // pred_region
          %s3641 = sand.u32 %s183, 1
          %s3642 = scalar_lea.sflag [#allocation4], %s3641
          %s3643 = sand.u32 %s183, 1
          %s3644 = smul.addr %s3643, 128
          %s3645 = scalar_lea.vmem [#allocation3], %s3644
          %3646 = dma.done %s3642, 2048
        $region56: #{up_basic_block_nhwc.1} parent=51 // pred_fallthru
          _
      $region52: #{up_basic_block_nhwc.1} parent=5 // pred_fallthru
        _
    $region6: #{up_basic_block_nhwc.1} parent=1 // loop_footer
      %s19 = sadd.s32 1, %s15
    $region7: #{up_basic_block_nhwc.1} parent=1 // loop_footer_branch
      %14 = sbr.rel target = $region3
    $region8: #{up_basic_block_nhwc.1} parent=1 // loop_exit
      _
    %3647 = vsyncpa [#allocation4], 1
    %s3648 = scalar_lea.sflag [#allocation4], 1
    %3649 = vsyncpa %s3648, 1

</llo_original>
